<compile_context>
chip_gen: v5e
topology: v5e:2x2
jax: 0.10.0
libtpu: 0.0.40
codegen_flags: <defaults>
</compile_context>

<pallas_src>
import functools

import jax
import jax.numpy as jnp
import numpy as np
from jax.experimental import pallas as pl
from jax.experimental.pallas import tpu as pltpu


def _round_up(x, m):
    return ((x + m - 1) // m) * m


# ----------------------------------------------------------------------------
# Pallas kernel: one lane-dense GEMM per (phase, M-tile):
#   out_tile = relu( patches_tile @ W_phase + bias )
# ----------------------------------------------------------------------------
def _deconv_gemm_kernel(p_ref, w_ref, b_ref, o_ref, *, apply_relu):
    acc = jnp.dot(p_ref[0], w_ref[0], preferred_element_type=jnp.float32)
    acc = acc + b_ref[...]
    if apply_relu:
        acc = jnp.maximum(acc, 0.0)
    o_ref[0] = acc.astype(o_ref.dtype)


def _deconv_gemm(patches, w_bd, bias_g, apply_relu, tm, out_dtype):
    """patches: [P, GM, CK] bf16, w_bd: [P, CK, CO] bf16, bias_g: [1, CO] f32
    -> [P, GM, CO] out_dtype.  GM % tm == 0; every block's last dim covers the
    full array extent (lane-dense, no masked stores)."""
    P, GM, CK = patches.shape
    CO = w_bd.shape[-1]
    return pl.pallas_call(
        functools.partial(_deconv_gemm_kernel, apply_relu=apply_relu),
        out_shape=jax.ShapeDtypeStruct((P, GM, CO), out_dtype),
        grid_spec=pltpu.PrefetchScalarGridSpec(
            num_scalar_prefetch=0,
            grid=(P, GM // tm),
            in_specs=[
                pl.BlockSpec((1, tm, CK), lambda ph, i: (ph, i, 0)),
                pl.BlockSpec((1, CK, CO), lambda ph, i: (ph, 0, 0)),
                pl.BlockSpec((1, CO), lambda ph, i: (0, 0)),
            ],
            out_specs=pl.BlockSpec((1, tm, CO), lambda ph, i: (ph, i, 0)),
        ),
        compiler_params=pltpu.CompilerParams(
            dimension_semantics=("parallel", "parallel")),
    )(patches, w_bd, bias_g)


def _pick_tile_m(GM, CK, CO, out_itemsize, vmem_budget=24 << 20, gran=16):
    """Largest M-tile (multiple of `gran`, <= 512) whose double-buffered
    working set fits the VMEM budget."""
    tm = min(512, _round_up(max(GM, 1), gran))
    while tm > gran:
        per_step = (2 * (tm * CK * 2 + tm * CO * out_itemsize)   # patch + out (dbl-buf)
                    + 2 * (CK * CO * 2 + CO * 4))                # weight + bias
        if per_step <= vmem_budget:
            break
        tm -= gran
    return max(gran, tm)


# ----------------------------------------------------------------------------
# ConvTranspose3d via stride-phase decomposition + folded-tap Pallas GEMM.
# x_nl: [N, D, H, W, Cin] channels-last; w: [Cin, Cout, kD, kH, kW] (PyTorch).
# Returns [N, Do, Ho, Wo, Cout] in `out_dtype`.
# ----------------------------------------------------------------------------
def conv_transpose3d_phase(x_nl, w, b, stride, dilation, padding, output_padding,
                           apply_relu=False, compute_dtype=jnp.bfloat16,
                           out_dtype=jnp.float32):
    N, D, H, W, Cin = x_nl.shape
    _, Cout, kD, kH, kW = w.shape
    s, dil, p, op = stride, dilation, padding, output_padding
    dims_in = (D, H, W)
    ks = (kD, kH, kW)

    dims_out = tuple((i - 1) * s - 2 * p + dil * (k - 1) + op + 1
                     for i, k in zip(dims_in, ks))
    Q = tuple(-(-do // s) for do in dims_out)     # per-phase output extent

    # Per-dimension, per-phase tap sets.  For output o = q*s + r the transposed
    # conv reads x[q + t] * w[a] with t = (r + p - a*dil)/s whenever exact.
    taps = []                                     # taps[dim][phase] -> [(a, t)]
    for Din, k in zip(dims_in, ks):
        per_phase = []
        for r in range(s):
            lst = []
            for a in range(k):
                num = r + p - a * dil
                if num % s == 0:
                    lst.append((a, num // s))
            per_phase.append(lst)
        taps.append(per_phase)

    # Light padding of the (non-dilated) input so every shifted window is valid.
    spads = []
    for d_idx, (Din, Qd) in enumerate(zip(dims_in, Q)):
        offs = [t for per in taps[d_idx] for (_, t) in per]
        if offs:
            lo = max(0, -min(offs))
            hi = max(0, (Qd - 1) + max(offs) - (Din - 1))
        else:
            lo = hi = 0
        spads.append((lo, hi))
    xp = jnp.pad(x_nl.astype(compute_dtype),
                 ((0, 0),) + tuple(spads) + ((0, 0),))

    # GEMM sizing.  g rows are grouped per stored output row -> lane-dense
    # last dims (g*Cout, g*Kmax*Cin).
    Kmax = 1
    for d in range(3):
        Kmax *= max(len(per) for per in taps[d])
    Kmax = max(Kmax, 1)
    KC = Kmax * Cin
    Mq = N * Q[0] * Q[1] * Q[2]
    g = max(1, 128 // Cout)
    lane_out = g * Cout

    GM = -(-Mq // g)
    tm = _pick_tile_m(GM, g * KC, lane_out, jnp.dtype(out_dtype).itemsize)
    GM_pad = _round_up(GM, tm)
    Mq_pad = GM_pad * g

    w_c = w.astype(compute_dtype)
    eye_g = jnp.eye(g, dtype=compute_dtype)

    patch_blocks, weight_blocks = [], []
    for rd in range(s):
        for rh in range(s):
            for rw in range(s):
                td_l, th_l, tw_l = taps[0][rd], taps[1][rh], taps[2][rw]
                slabs, wcols = [], []
                for (a, td) in td_l:
                    for (bb, th) in th_l:
                        for (c, tw) in tw_l:
                            d0 = spads[0][0] + td
                            h0 = spads[1][0] + th
                            w0 = spads[2][0] + tw
                            sl = xp[:, d0:d0 + Q[0], h0:h0 + Q[1],
                                    w0:w0 + Q[2], :]
                            slabs.append(sl.reshape(Mq, Cin))
                            wcols.append(w_c[:, :, a, bb, c])     # [Cin, Cout]
                kr = len(slabs)
                if kr:
                    pm = jnp.concatenate(slabs, axis=-1)          # [Mq, kr*Cin]
                    wm = jnp.concatenate(wcols, axis=0)           # [kr*Cin, Cout]
                    pm = jnp.pad(pm, ((0, Mq_pad - Mq), (0, KC - kr * Cin)))
                    wm = jnp.pad(wm, ((0, KC - kr * Cin), (0, 0)))
                else:   # phase with no contributing taps -> output is just bias
                    pm = jnp.zeros((Mq_pad, KC), compute_dtype)
                    wm = jnp.zeros((KC, Cout), compute_dtype)
                patch_blocks.append(pm.reshape(GM_pad, g * KC))   # grouped rows
                weight_blocks.append(jnp.kron(eye_g, wm))         # [g*KC, g*Cout]

    patches = jnp.stack(patch_blocks, axis=0)                     # [P, GM_pad, g*KC]
    w_bd = jnp.stack(weight_blocks, axis=0)                       # [P, g*KC, lane_out]
    bias_g = jnp.tile(b.astype(jnp.float32), g).reshape(1, lane_out)

    out_g = _deconv_gemm(patches, w_bd, bias_g, apply_relu, tm,
                         out_dtype)                               # [P, GM_pad, lane_out]

    # Undo the row grouping, drop padding rows, interleave the s^3 phases.
    out = out_g.reshape(s, s, s, GM_pad * g, Cout)[:, :, :, :Mq, :]
    out = out.reshape(s, s, s, N, Q[0], Q[1], Q[2], Cout)
    out = jnp.transpose(out, (3, 4, 0, 5, 1, 6, 2, 7))
    out = out.reshape(N, Q[0] * s, Q[1] * s, Q[2] * s, Cout)
    return out[:, :dims_out[0], :dims_out[1], :dims_out[2], :]


# ----------------------------------------------------------------------------
# Decoder forward (channels-last between layers; NCDHW at the boundary).
# ----------------------------------------------------------------------------
def _decoder_forward(layer_params, weights, x):
    x = jnp.transpose(x, (0, 2, 3, 4, 1))          # NCDHW -> NDHWC
    i, n = 0, len(layer_params)
    while i < n:
        lp = layer_params[i]
        if lp[0] == 'deconv':
            _, cin, cout, k, s, dil, p, op = lp
            w, bvec = weights[i]
            fuse_relu = (i + 1 < n and layer_params[i + 1][0] == 'relu')
            step = 2 if fuse_relu else 1
            is_last = (i + step) >= n
            x = conv_transpose3d_phase(
                x, w, bvec, s, dil, p, op, apply_relu=fuse_relu,
                out_dtype=jnp.float32 if is_last else jnp.bfloat16)
            i += step
        else:                                       # standalone relu
            x = jnp.maximum(x, 0.0)
            i += 1
    x = x.astype(jnp.float32)
    return jnp.transpose(x, (0, 4, 1, 2, 3))        # NDHWC -> NCDHW


class Decoder:
    def __init__(self, params, key):
        if params['model_type'] != 'deconv':
            raise Exception('Invalid model_type found.')
        self.layer_params = [tuple(lp) for lp in params['layer_params']]
        self.weights = []
        for lp in self.layer_params:
            if lp[0] == 'deconv':
                _, cin, cout, k, s, dil, p, op = lp
                key, k1, k2 = jax.random.split(key, 3)
                bound = 1.0 / np.sqrt(cin * k ** 3)
                w = jax.random.uniform(k1, (cin, cout, k, k, k), jnp.float32,
                                       -bound, bound)
                bvec = jax.random.uniform(k2, (cout,), jnp.float32, -bound, bound)
                self.weights.append((w, bvec))
            elif lp[0] == 'relu':
                self.weights.append(None)
            else:
                raise Exception('Invalid layer_type found.')
        self._fwd = jax.jit(functools.partial(_decoder_forward, self.layer_params))

    def __call__(self, x):
        return self._fwd(self.weights, x)


# ----------------------------------------------------------------------------
# Pure-JAX reference (independent path through lax.conv_general_dilated)
# ----------------------------------------------------------------------------
def conv_transpose3d_ref(x, w, b, s, dil, p, op):
    Cin, Cout, kD, kH, kW = w.shape
    w_oi = jnp.transpose(jnp.flip(w, axis=(2, 3, 4)), (1, 0, 2, 3, 4))
    pads = [(dil * (k - 1) - p, dil * (k - 1) - p + op) for k in (kD, kH, kW)]
    y = jax.lax.conv_general_dilated(
        x, w_oi, window_strides=(1, 1, 1), padding=pads,
        lhs_dilation=(s, s, s), rhs_dilation=(dil, dil, dil),
        dimension_numbers=('NCDHW', 'OIDHW', 'NCDHW'),
        precision=jax.lax.Precision.HIGHEST)
    return y + b.reshape(1, Cout, 1, 1, 1)


if __name__ == "__main__":
    params = {
        'model_type': 'deconv',
        'layer_params': [
            # (type, in_ch, out_ch, kernel, stride, dilation, padding, output_padding)
            ('deconv', 4, 8, 3, 2, 1, 1, 1),
            ('relu',),
            ('deconv', 8, 4, 3, 2, 1, 1, 1),
            ('relu',),
        ],
    }

    key = jax.random.PRNGKey(0)
    key, xkey = jax.random.split(key)
    x = jax.random.normal(xkey, (2, 4, 4, 8, 8), jnp.float32)   # [N, C, D, H, W]

    dec = Decoder(params, key)
    y = jax.block_until_ready(dec(x))

    # reference check (f32, HIGHEST precision)
    ref = x
    for idx, lp in enumerate(params['layer_params']):
        if lp[0] == 'deconv':
            w, bvec = dec.weights[idx]
            ref = conv_transpose3d_ref(ref, w, bvec, lp[4], lp[5], lp[6], lp[7])
        else:
            ref = jnp.maximum(ref, 0.0)
    np.testing.assert_allclose(np.asarray(y), np.asarray(ref), rtol=2e-2, atol=2e-2)
    assert y.shape == (2, 4, 16, 32, 32), y.shape

    print("KERNEL_OK")
</pallas_src>

<mosaic_0001>
module attributes {stable_mosaic.version = 11 : i64} {
  func.func @_deconv_gemm_kernel(%arg0: i32, %arg1: i32, %arg2: memref<1x32x512xbf16, #tpu.memory_space<vmem>>, %arg3: memref<1x512x128xbf16, #tpu.memory_space<vmem>>, %arg4: memref<1x128xf32, #tpu.memory_space<vmem>>, %arg5: memref<1x32x128xbf16, #tpu.memory_space<vmem>>) attributes {dimension_semantics = [#tpu.dimension_semantics<parallel>, #tpu.dimension_semantics<parallel>], iteration_bounds = array<i64: 8, 1>, scalar_prefetch = 0 : i64, scratch_operands = 0 : i64, tpu.core_type = #tpu.core_type<tc>, window_params = [{transform_indices = @transform_0, window_bounds = array<i64: 1, 32, 512>}, {transform_indices = @transform_1, window_bounds = array<i64: 1, 512, 128>}, {pipeline_mode = #tpu.pipeline_mode<synchronous>, transform_indices = @transform_2, window_bounds = array<i64: 1, 128>}, {transform_indices = @transform_3, window_bounds = array<i64: 1, 32, 128>}]} {
    %c0 = arith.constant 0 : index
    %c0_0 = arith.constant 0 : index
    %c0_1 = arith.constant 0 : index
    %0 = vector.load %arg2[%c0, %c0_0, %c0_1] : memref<1x32x512xbf16, #tpu.memory_space<vmem>>, vector<1x32x512xbf16>
    %1 = vector.shape_cast %0 : vector<1x32x512xbf16> to vector<32x512xbf16>
    %c0_2 = arith.constant 0 : index
    %c0_3 = arith.constant 0 : index
    %c0_4 = arith.constant 0 : index
    %2 = vector.load %arg3[%c0_2, %c0_3, %c0_4] : memref<1x512x128xbf16, #tpu.memory_space<vmem>>, vector<1x512x128xbf16>
    %3 = vector.shape_cast %2 : vector<1x512x128xbf16> to vector<512x128xbf16>
    %cst = arith.constant dense<0.000000e+00> : vector<32x128xf32>
    %4 = tpu.matmul %1, %3, %cst {dimension_numbers = #tpu.dot_dimension_numbers<[1], [0], [0], [1], [0, 0, 1, 1], [], []>} : vector<32x512xbf16>, vector<512x128xbf16>, vector<32x128xf32> -> vector<32x128xf32>
    %c0_5 = arith.constant 0 : index
    %c0_6 = arith.constant 0 : index
    %5 = vector.load %arg4[%c0_5, %c0_6] : memref<1x128xf32, #tpu.memory_space<vmem>>, vector<1x128xf32>
    %6 = vector.broadcast %5 : vector<1x128xf32> to vector<32x128xf32>
    %7 = arith.addf %4, %6 : vector<32x128xf32>
    %cst_7 = arith.constant 0.000000e+00 : f32
    %8 = vector.broadcast %cst_7 : f32 to vector<32x128xf32>
    %9 = arith.maximumf %7, %8 : vector<32x128xf32>
    %10 = arith.truncf %9 : vector<32x128xf32> to vector<32x128xbf16>
    %c0_8 = arith.constant 0 : index
    %c0_9 = arith.constant 0 : index
    %c0_10 = arith.constant 0 : index
    %11 = vector.load %arg5[%c0_8, %c0_9, %c0_10] : memref<1x32x128xbf16, #tpu.memory_space<vmem>>, vector<1x32x128xbf16>
    %12 = vector.shape_cast %11 : vector<1x32x128xbf16> to vector<32x128xbf16>
    %13 = vector.shape_cast %10 : vector<32x128xbf16> to vector<1x32x128xbf16>
    tpu.vector_store %arg5[%c0_8, %c0_9, %c0_10], %13 {strides = array<i32>} : memref<1x32x128xbf16, #tpu.memory_space<vmem>>, vector<1x32x128xbf16>,
    return
  }
  func.func @transform_0(%arg0: i32, %arg1: i32) -> (i32, i32, i32) {
    %c0_i32 = arith.constant 0 : i32
    %c0_i32_0 = arith.constant 0 : i32
    return %arg0, %arg1, %c0_i32 : i32, i32, i32
  }
  func.func @transform_1(%arg0: i32, %arg1: i32) -> (i32, i32, i32) {
    %c0_i32 = arith.constant 0 : i32
    %c0_i32_0 = arith.constant 0 : i32
    %c0_i32_1 = arith.constant 0 : i32
    return %arg0, %c0_i32, %c0_i32_0 : i32, i32, i32
  }
  func.func @transform_2(%arg0: i32, %arg1: i32) -> (i32, i32) {
    %c0_i32 = arith.constant 0 : i32
    %c0_i32_0 = arith.constant 0 : i32
    %c0_i32_1 = arith.constant 0 : i32
    return %c0_i32, %c0_i32_0 : i32, i32
  }
  func.func @transform_3(%arg0: i32, %arg1: i32) -> (i32, i32, i32) {
    %c0_i32 = arith.constant 0 : i32
    %c0_i32_0 = arith.constant 0 : i32
    return %arg0, %arg1, %c0_i32 : i32, i32, i32
  }
}

module attributes {stable_mosaic.version = 11 : i64} {
  func.func @_deconv_gemm_kernel(%arg0: i32, %arg1: i32, %arg2: memref<1x128x2048xbf16, #tpu.memory_space<vmem>>, %arg3: memref<1x2048x128xbf16, #tpu.memory_space<vmem>>, %arg4: memref<1x128xf32, #tpu.memory_space<vmem>>, %arg5: memref<1x128x128xf32, #tpu.memory_space<vmem>>) attributes {dimension_semantics = [#tpu.dimension_semantics<parallel>, #tpu.dimension_semantics<parallel>], iteration_bounds = array<i64: 8, 1>, scalar_prefetch = 0 : i64, scratch_operands = 0 : i64, tpu.core_type = #tpu.core_type<tc>, window_params = [{transform_indices = @transform_0, window_bounds = array<i64: 1, 128, 2048>}, {transform_indices = @transform_1, window_bounds = array<i64: 1, 2048, 128>}, {pipeline_mode = #tpu.pipeline_mode<synchronous>, transform_indices = @transform_2, window_bounds = array<i64: 1, 128>}, {transform_indices = @transform_3, window_bounds = array<i64: 1, 128, 128>}]} {
    %c0 = arith.constant 0 : index
    %c0_0 = arith.constant 0 : index
    %c0_1 = arith.constant 0 : index
    %0 = vector.load %arg2[%c0, %c0_0, %c0_1] : memref<1x128x2048xbf16, #tpu.memory_space<vmem>>, vector<1x128x2048xbf16>
    %1 = vector.shape_cast %0 : vector<1x128x2048xbf16> to vector<128x2048xbf16>
    %c0_2 = arith.constant 0 : index
    %c0_3 = arith.constant 0 : index
    %c0_4 = arith.constant 0 : index
    %2 = vector.load %arg3[%c0_2, %c0_3, %c0_4] : memref<1x2048x128xbf16, #tpu.memory_space<vmem>>, vector<1x2048x128xbf16>
    %3 = vector.shape_cast %2 : vector<1x2048x128xbf16> to vector<2048x128xbf16>
    %cst = arith.constant dense<0.000000e+00> : vector<128x128xf32>
    %4 = tpu.matmul %1, %3, %cst {dimension_numbers = #tpu.dot_dimension_numbers<[1], [0], [0], [1], [0, 0, 1, 1], [], []>} : vector<128x2048xbf16>, vector<2048x128xbf16>, vector<128x128xf32> -> vector<128x128xf32>
    %c0_5 = arith.constant 0 : index
    %c0_6 = arith.constant 0 : index
    %5 = vector.load %arg4[%c0_5, %c0_6] : memref<1x128xf32, #tpu.memory_space<vmem>>, vector<1x128xf32>
    %6 = vector.broadcast %5 : vector<1x128xf32> to vector<128x128xf32>
    %7 = arith.addf %4, %6 : vector<128x128xf32>
    %cst_7 = arith.constant 0.000000e+00 : f32
    %8 = vector.broadcast %cst_7 : f32 to vector<128x128xf32>
    %9 = arith.maximumf %7, %8 : vector<128x128xf32>
    %c0_8 = arith.constant 0 : index
    %c0_9 = arith.constant 0 : index
    %c0_10 = arith.constant 0 : index
    %10 = vector.load %arg5[%c0_8, %c0_9, %c0_10] : memref<1x128x128xf32, #tpu.memory_space<vmem>>, vector<1x128x128xf32>
    %11 = vector.shape_cast %10 : vector<1x128x128xf32> to vector<128x128xf32>
    %12 = vector.shape_cast %9 : vector<128x128xf32> to vector<1x128x128xf32>
    tpu.vector_store %arg5[%c0_8, %c0_9, %c0_10], %12 {strides = array<i32>} : memref<1x128x128xf32, #tpu.memory_space<vmem>>, vector<1x128x128xf32>,
    return
  }
  func.func @transform_0(%arg0: i32, %arg1: i32) -> (i32, i32, i32) {
    %c0_i32 = arith.constant 0 : i32
    %c0_i32_0 = arith.constant 0 : i32
    return %arg0, %arg1, %c0_i32 : i32, i32, i32
  }
  func.func @transform_1(%arg0: i32, %arg1: i32) -> (i32, i32, i32) {
    %c0_i32 = arith.constant 0 : i32
    %c0_i32_0 = arith.constant 0 : i32
    %c0_i32_1 = arith.constant 0 : i32
    return %arg0, %c0_i32, %c0_i32_0 : i32, i32, i32
  }
  func.func @transform_2(%arg0: i32, %arg1: i32) -> (i32, i32) {
    %c0_i32 = arith.constant 0 : i32
    %c0_i32_0 = arith.constant 0 : i32
    %c0_i32_1 = arith.constant 0 : i32
    return %c0_i32, %c0_i32_0 : i32, i32
  }
  func.func @transform_3(%arg0: i32, %arg1: i32) -> (i32, i32, i32) {
    %c0_i32 = arith.constant 0 : i32
    %c0_i32_0 = arith.constant 0 : i32
    return %arg0, %arg1, %c0_i32 : i32, i32, i32
  }
}

</mosaic_0001>

<llo_original>
// kernel: tile.14
$region0: #{tile.14}
  %s0 = inlined_call_operand.vmem [shape: f32[16,8], index: 0, kind: input, shape index: {}]
  %s1 = inlined_call_operand.vmem [shape: f32[1,128], index: 1, kind: output, shape index: {}]
  $region1: #{tile.14} parent=0
    #allocation0 [shape = 'u8[4096]{0}', space=vmem, size = 0x1000, scoped, tag = 'scoped mem for output reshape']
    %v2 = vld [vmem:[%s0] sm:$0x1]
    %vm3 = vcmask 64512
    %4 = vst.msk [vmem:[#allocation0] sm:$0x1] %vm3, %v2
    %s5 = scalar_lea.vmem %s0, 15
    %v6 = vld [vmem:[%s5] sm:$0x1]
    %7 = vrot.lane.b32.xlu0 %v6, 120
    %v8 = vpop.permute.xlu0 %7
    %vm9 = vcmask 1048512
    %10 = vst.msk [vmem:[#allocation0] sm:$0x1] %vm9, %v8
    %s11 = scalar_lea.vmem %s0, 14
    %v12 = vld [vmem:[%s11] sm:$0x1]
    %13 = vrot.lane.b32.xlu0 %v12, 112
    %v14 = vpop.permute.xlu0 %13
    %vm15 = vcmask 982912
    %16 = vst.msk [vmem:[#allocation0] sm:$0x1] %vm15, %v14
    %s17 = scalar_lea.vmem %s0, 13
    %v18 = vld [vmem:[%s17] sm:$0x1]
    %19 = vrot.lane.b32.xlu0 %v18, 104
    %v20 = vpop.permute.xlu0 %19
    %vm21 = vcmask 917312
    %22 = vst.msk [vmem:[#allocation0] sm:$0x1] %vm21, %v20
    %s23 = scalar_lea.vmem %s0, 12
    %v24 = vld [vmem:[%s23] sm:$0x1]
    %25 = vrot.lane.b32.xlu0 %v24, 96
    %v26 = vpop.permute.xlu0 %25
    %vm27 = vcmask 851712
    %28 = vst.msk [vmem:[#allocation0] sm:$0x1] %vm27, %v26
    %s29 = scalar_lea.vmem %s0, 11
    %v30 = vld [vmem:[%s29] sm:$0x1]
    %31 = vrot.lane.b32.xlu0 %v30, 88
    %v32 = vpop.permute.xlu0 %31
    %vm33 = vcmask 786112
    %34 = vst.msk [vmem:[#allocation0] sm:$0x1] %vm33, %v32
    %s35 = scalar_lea.vmem %s0, 10
    %v36 = vld [vmem:[%s35] sm:$0x1]
    %37 = vrot.lane.b32.xlu0 %v36, 80
    %v38 = vpop.permute.xlu0 %37
    %vm39 = vcmask 720512
    %40 = vst.msk [vmem:[#allocation0] sm:$0x1] %vm39, %v38
    %s41 = scalar_lea.vmem %s0, 9
    %v42 = vld [vmem:[%s41] sm:$0x1]
    %43 = vrot.lane.b32.xlu0 %v42, 72
    %v44 = vpop.permute.xlu0 %43
    %vm45 = vcmask 654912
    %46 = vst.msk [vmem:[#allocation0] sm:$0x1] %vm45, %v44
    %s47 = scalar_lea.vmem %s0, 8
    %v48 = vld [vmem:[%s47] sm:$0x1]
    %49 = vrot.lane.b32.xlu0 %v48, 64
    %v50 = vpop.permute.xlu0 %49
    %vm51 = vcmask 589312
    %52 = vst.msk [vmem:[#allocation0] sm:$0x1] %vm51, %v50
    %s53 = scalar_lea.vmem %s0, 7
    %v54 = vld [vmem:[%s53] sm:$0x1]
    %55 = vrot.lane.b32.xlu0 %v54, 56
    %v56 = vpop.permute.xlu0 %55
    %vm57 = vcmask 523712
    %58 = vst.msk [vmem:[#allocation0] sm:$0x1] %vm57, %v56
    %s59 = scalar_lea.vmem %s0, 6
    %v60 = vld [vmem:[%s59] sm:$0x1]
    %61 = vrot.lane.b32.xlu0 %v60, 48
    %v62 = vpop.permute.xlu0 %61
    %vm63 = vcmask 458112
    %64 = vst.msk [vmem:[#allocation0] sm:$0x1] %vm63, %v62
    %s65 = scalar_lea.vmem %s0, 5
    %v66 = vld [vmem:[%s65] sm:$0x1]
    %67 = vrot.lane.b32.xlu0 %v66, 40
    %v68 = vpop.permute.xlu0 %67
    %vm69 = vcmask 392512
    %70 = vst.msk [vmem:[#allocation0] sm:$0x1] %vm69, %v68
    %s71 = scalar_lea.vmem %s0, 4
    %v72 = vld [vmem:[%s71] sm:$0x1]
    %73 = vrot.lane.b32.xlu0 %v72, 32
    %v74 = vpop.permute.xlu0 %73
    %vm75 = vcmask 326912
    %76 = vst.msk [vmem:[#allocation0] sm:$0x1] %vm75, %v74
    %s77 = scalar_lea.vmem %s0, 3
    %v78 = vld [vmem:[%s77] sm:$0x1]
    %79 = vrot.lane.b32.xlu0 %v78, 24
    %v80 = vpop.permute.xlu0 %79
    %vm81 = vcmask 261312
    %82 = vst.msk [vmem:[#allocation0] sm:$0x1] %vm81, %v80
    %s83 = scalar_lea.vmem %s0, 2
    %v84 = vld [vmem:[%s83] sm:$0x1]
    %85 = vrot.lane.b32.xlu0 %v84, 16
    %v86 = vpop.permute.xlu0 %85
    %vm87 = vcmask 195712
    %88 = vst.msk [vmem:[#allocation0] sm:$0x1] %vm87, %v86
    %s89 = scalar_lea.vmem %s0, 1
    %v90 = vld [vmem:[%s89] sm:$0x1]
    %91 = vrot.lane.b32.xlu0 %v90, 8
    %v92 = vpop.permute.xlu0 %91
    %vm93 = vcmask 130112
    %94 = vst.msk [vmem:[#allocation0] sm:$0x1] %vm93, %v92
    %s96 = ssub.s32 2, 1
    %v97 = vld [vmem:[#allocation0] sm:%s96]
    %s99 = ssub.s32 2, 1
    %100 = vst [vmem:[%s1] sm:%s99] %v97

// kernel: tile.13
$region0: #{tile.13}
  #allocation2 [shape = 's32[1]{0}', space=sflag, size = 0x4, scoped, tag = 'scoped memory for tile.13']
  %s0 = inlined_call_operand.hbm [shape: f32[8], index: 0, kind: input, shape index: {}]
  %s1 = inlined_call_operand.vmem [shape: f32[16,8], index: 1, kind: output, shape index: {}]
  $region1: #{tile.13} parent=0
    #allocation0 [shape = 'u8[512]{0}', space=vmem, size = 0x400, scoped, tag = 'operand span for operand 0']
    #allocation1 [shape = 's32[1]{0}', space=sflag, size = 0x4, scoped, tag = 'scoped memory for tile.13']
    %2 = vsyncpa [#allocation1], 0
    // Predicated region
    $region2: #{tile.13} parent=1 // pred_check
      _
    $region3: #{tile.13} parent=1 // pred_check_branch
      %4 = sbr.rel (0) target = $region5
    $region4: #{tile.13} parent=1 // pred_region
      %6 = vsyncadd [#allocation1], 0
      %s8 = sshll.u32 %s0, 4
      %s9 = int_to_ptr.hbm [resolvable:$true] %s8
      %s10 = sshll.u32 [#allocation0], 4
      %s11 = int_to_ptr.vmem [resolvable:$true] %s10
      %13 = dma.hbm_to_vmem [thread:$0]  %s9, 16, %s11, [#allocation1]
    $region5: #{tile.13} parent=1 // pred_fallthru
      _
    // Predicated region
    $region6: #{tile.13} parent=1 // pred_check
      _
    $region7: #{tile.13} parent=1 // pred_check_branch
      %15 = sbr.rel (0) target = $region9
    $region8: #{tile.13} parent=1 // pred_region
      %17 = dma.done [#allocation1], 16
    $region9: #{tile.13} parent=1 // pred_fallthru
      _
    %v18 = vld [vmem:[#allocation0] ss:$0 sm:$0xff]
    %19 = vst [vmem:[%s1] sm:$0xff] %v18
    %s20 = scalar_lea.vmem %s1, 8
    %21 = vst [vmem:[%s20] sm:$0xff] %v18
    %22 = vsyncpa [#allocation1], 1

// kernel: tile.18
$region0: #{tile.18}
  #allocation2 [shape = 's32[1]{0}', space=sflag, size = 0x4, scoped, tag = 'scoped memory for tile.18']
  %s0 = inlined_call_operand.hbm [shape: f32[4], index: 0, kind: input, shape index: {}]
  %s1 = inlined_call_operand.vmem [shape: f32[32,4], index: 1, kind: output, shape index: {}]
  $region1: #{tile.18} parent=0
    #allocation0 [shape = 'u8[512]{0}', space=vmem, size = 0x400, scoped, tag = 'operand span for operand 0']
    #allocation1 [shape = 's32[1]{0}', space=sflag, size = 0x4, scoped, tag = 'scoped memory for tile.18']
    %2 = vsyncpa [#allocation1], 0
    // Predicated region
    $region2: #{tile.18} parent=1 // pred_check
      _
    $region3: #{tile.18} parent=1 // pred_check_branch
      %4 = sbr.rel (0) target = $region5
    $region4: #{tile.18} parent=1 // pred_region
      %6 = vsyncadd [#allocation1], 0
      %s8 = sshll.u32 %s0, 4
      %s9 = int_to_ptr.hbm [resolvable:$true] %s8
      %s10 = sshll.u32 [#allocation0], 4
      %s11 = int_to_ptr.vmem [resolvable:$true] %s10
      %13 = dma.hbm_to_vmem [thread:$0]  %s9, 16, %s11, [#allocation1]
    $region5: #{tile.18} parent=1 // pred_fallthru
      _
    // Predicated region
    $region6: #{tile.18} parent=1 // pred_check
      _
    $region7: #{tile.18} parent=1 // pred_check_branch
      %15 = sbr.rel (0) target = $region9
    $region8: #{tile.18} parent=1 // pred_region
      %17 = dma.done [#allocation1], 16
    $region9: #{tile.18} parent=1 // pred_fallthru
      _
    %v18 = vld [vmem:[#allocation0] ss:$0 sm:$0xff]
    %19 = vst [vmem:[%s1] sm:$0xff] %v18
    %s20 = scalar_lea.vmem %s1, 8
    %21 = vst [vmem:[%s20] sm:$0xff] %v18
    %s22 = scalar_lea.vmem %s1, 16
    %23 = vst [vmem:[%s22] sm:$0xff] %v18
    %s24 = scalar_lea.vmem %s1, 24
    %25 = vst [vmem:[%s24] sm:$0xff] %v18
    %26 = vsyncpa [#allocation1], 1

// kernel: tile.19
$region0: #{tile.19}
  %s0 = inlined_call_operand.vmem [shape: f32[32,4], index: 0, kind: input, shape index: {}]
  %s1 = inlined_call_operand.vmem [shape: f32[1,128], index: 1, kind: output, shape index: {}]
  $region1: #{tile.19} parent=0
    #allocation0 [shape = 'u8[4096]{0}', space=vmem, size = 0x1000, scoped, tag = 'scoped mem for output reshape']
    %v2 = vld [vmem:[%s0] sm:$0x1]
    %vm3 = vcmask 31744
    %4 = vst.msk [vmem:[#allocation0] sm:$0x1] %vm3, %v2
    %s5 = scalar_lea.vmem %s0, 31
    %v6 = vld [vmem:[%s5] sm:$0x1]
    %7 = vrot.lane.b32.xlu0 %v6, 124
    %v8 = vpop.permute.xlu0 %7
    %vm9 = vcmask 1048544
    %10 = vst.msk [vmem:[#allocation0] sm:$0x1] %vm9, %v8
    %s11 = scalar_lea.vmem %s0, 30
    %v12 = vld [vmem:[%s11] sm:$0x1]
    %13 = vrot.lane.b32.xlu0 %v12, 120
    %v14 = vpop.permute.xlu0 %13
    %vm15 = vcmask 1015744
    %16 = vst.msk [vmem:[#allocation0] sm:$0x1] %vm15, %v14
    %s17 = scalar_lea.vmem %s0, 29
    %v18 = vld [vmem:[%s17] sm:$0x1]
    %19 = vrot.lane.b32.xlu0 %v18, 116
    %v20 = vpop.permute.xlu0 %19
    %vm21 = vcmask 982944
    %22 = vst.msk [vmem:[#allocation0] sm:$0x1] %vm21, %v20
    %s23 = scalar_lea.vmem %s0, 28
    %v24 = vld [vmem:[%s23] sm:$0x1]
    %25 = vrot.lane.b32.xlu0 %v24, 112
    %v26 = vpop.permute.xlu0 %25
    %vm27 = vcmask 950144
    %28 = vst.msk [vmem:[#allocation0] sm:$0x1] %vm27, %v26
    %s29 = scalar_lea.vmem %s0, 27
    %v30 = vld [vmem:[%s29] sm:$0x1]
    %31 = vrot.lane.b32.xlu0 %v30, 108
    %v32 = vpop.permute.xlu0 %31
    %vm33 = vcmask 917344
    %34 = vst.msk [vmem:[#allocation0] sm:$0x1] %vm33, %v32
    %s35 = scalar_lea.vmem %s0, 26
    %v36 = vld [vmem:[%s35] sm:$0x1]
    %37 = vrot.lane.b32.xlu0 %v36, 104
    %v38 = vpop.permute.xlu0 %37
    %vm39 = vcmask 884544
    %40 = vst.msk [vmem:[#allocation0] sm:$0x1] %vm39, %v38
    %s41 = scalar_lea.vmem %s0, 25
    %v42 = vld [vmem:[%s41] sm:$0x1]
    %43 = vrot.lane.b32.xlu0 %v42, 100
    %v44 = vpop.permute.xlu0 %43
    %vm45 = vcmask 851744
    %46 = vst.msk [vmem:[#allocation0] sm:$0x1] %vm45, %v44
    %s47 = scalar_lea.vmem %s0, 24
    %v48 = vld [vmem:[%s47] sm:$0x1]
    %49 = vrot.lane.b32.xlu0 %v48, 96
    %v50 = vpop.permute.xlu0 %49
    %vm51 = vcmask 818944
    %52 = vst.msk [vmem:[#allocation0] sm:$0x1] %vm51, %v50
    %s53 = scalar_lea.vmem %s0, 23
    %v54 = vld [vmem:[%s53] sm:$0x1]
    %55 = vrot.lane.b32.xlu0 %v54, 92
    %v56 = vpop.permute.xlu0 %55
    %vm57 = vcmask 786144
    %58 = vst.msk [vmem:[#allocation0] sm:$0x1] %vm57, %v56
    %s59 = scalar_lea.vmem %s0, 22
    %v60 = vld [vmem:[%s59] sm:$0x1]
    %61 = vrot.lane.b32.xlu0 %v60, 88
    %v62 = vpop.permute.xlu0 %61
    %vm63 = vcmask 753344
    %64 = vst.msk [vmem:[#allocation0] sm:$0x1] %vm63, %v62
    %s65 = scalar_lea.vmem %s0, 21
    %v66 = vld [vmem:[%s65] sm:$0x1]
    %67 = vrot.lane.b32.xlu0 %v66, 84
    %v68 = vpop.permute.xlu0 %67
    %vm69 = vcmask 720544
    %70 = vst.msk [vmem:[#allocation0] sm:$0x1] %vm69, %v68
    %s71 = scalar_lea.vmem %s0, 20
    %v72 = vld [vmem:[%s71] sm:$0x1]
    %73 = vrot.lane.b32.xlu0 %v72, 80
    %v74 = vpop.permute.xlu0 %73
    %vm75 = vcmask 687744
    %76 = vst.msk [vmem:[#allocation0] sm:$0x1] %vm75, %v74
    %s77 = scalar_lea.vmem %s0, 19
    %v78 = vld [vmem:[%s77] sm:$0x1]
    %79 = vrot.lane.b32.xlu0 %v78, 76
    %v80 = vpop.permute.xlu0 %79
    %vm81 = vcmask 654944
    %82 = vst.msk [vmem:[#allocation0] sm:$0x1] %vm81, %v80
    %s83 = scalar_lea.vmem %s0, 18
    %v84 = vld [vmem:[%s83] sm:$0x1]
    %85 = vrot.lane.b32.xlu0 %v84, 72
    %v86 = vpop.permute.xlu0 %85
    %vm87 = vcmask 622144
    %88 = vst.msk [vmem:[#allocation0] sm:$0x1] %vm87, %v86
    %s89 = scalar_lea.vmem %s0, 17
    %v90 = vld [vmem:[%s89] sm:$0x1]
    %91 = vrot.lane.b32.xlu0 %v90, 68
    %v92 = vpop.permute.xlu0 %91
    %vm93 = vcmask 589344
    %94 = vst.msk [vmem:[#allocation0] sm:$0x1] %vm93, %v92
    %s95 = scalar_lea.vmem %s0, 16
    %v96 = vld [vmem:[%s95] sm:$0x1]
    %97 = vrot.lane.b32.xlu0 %v96, 64
    %v98 = vpop.permute.xlu0 %97
    %vm99 = vcmask 556544
    %100 = vst.msk [vmem:[#allocation0] sm:$0x1] %vm99, %v98
    %s101 = scalar_lea.vmem %s0, 15
    %v102 = vld [vmem:[%s101] sm:$0x1]
    %103 = vrot.lane.b32.xlu0 %v102, 60
    %v104 = vpop.permute.xlu0 %103
    %vm105 = vcmask 523744
    %106 = vst.msk [vmem:[#allocation0] sm:$0x1] %vm105, %v104
    %s107 = scalar_lea.vmem %s0, 14
    %v108 = vld [vmem:[%s107] sm:$0x1]
    %109 = vrot.lane.b32.xlu0 %v108, 56
    %v110 = vpop.permute.xlu0 %109
    %vm111 = vcmask 490944
    %112 = vst.msk [vmem:[#allocation0] sm:$0x1] %vm111, %v110
    %s113 = scalar_lea.vmem %s0, 13
    %v114 = vld [vmem:[%s113] sm:$0x1]
    %115 = vrot.lane.b32.xlu0 %v114, 52
    %v116 = vpop.permute.xlu0 %115
    %vm117 = vcmask 458144
    %118 = vst.msk [vmem:[#allocation0] sm:$0x1] %vm117, %v116
    %s119 = scalar_lea.vmem %s0, 12
    %v120 = vld [vmem:[%s119] sm:$0x1]
    %121 = vrot.lane.b32.xlu0 %v120, 48
    %v122 = vpop.permute.xlu0 %121
    %vm123 = vcmask 425344
    %124 = vst.msk [vmem:[#allocation0] sm:$0x1] %vm123, %v122
    %s125 = scalar_lea.vmem %s0, 11
    %v126 = vld [vmem:[%s125] sm:$0x1]
    %127 = vrot.lane.b32.xlu0 %v126, 44
    %v128 = vpop.permute.xlu0 %127
    %vm129 = vcmask 392544
    %130 = vst.msk [vmem:[#allocation0] sm:$0x1] %vm129, %v128
    %s131 = scalar_lea.vmem %s0, 10
    %v132 = vld [vmem:[%s131] sm:$0x1]
    %133 = vrot.lane.b32.xlu0 %v132, 40
    %v134 = vpop.permute.xlu0 %133
    %vm135 = vcmask 359744
    %136 = vst.msk [vmem:[#allocation0] sm:$0x1] %vm135, %v134
    %s137 = scalar_lea.vmem %s0, 9
    %v138 = vld [vmem:[%s137] sm:$0x1]
    %139 = vrot.lane.b32.xlu0 %v138, 36
    %v140 = vpop.permute.xlu0 %139
    %vm141 = vcmask 326944
    %142 = vst.msk [vmem:[#allocation0] sm:$0x1] %vm141, %v140
    %s143 = scalar_lea.vmem %s0, 8
    %v144 = vld [vmem:[%s143] sm:$0x1]
    %145 = vrot.lane.b32.xlu0 %v144, 32
    %v146 = vpop.permute.xlu0 %145
    %vm147 = vcmask 294144
    %148 = vst.msk [vmem:[#allocation0] sm:$0x1] %vm147, %v146
    %s149 = scalar_lea.vmem %s0, 7
    %v150 = vld [vmem:[%s149] sm:$0x1]
    %151 = vrot.lane.b32.xlu0 %v150, 28
    %v152 = vpop.permute.xlu0 %151
    %vm153 = vcmask 261344
    %154 = vst.msk [vmem:[#allocation0] sm:$0x1] %vm153, %v152
    %s155 = scalar_lea.vmem %s0, 6
    %v156 = vld [vmem:[%s155] sm:$0x1]
    %157 = vrot.lane.b32.xlu0 %v156, 24
    %v158 = vpop.permute.xlu0 %157
    %vm159 = vcmask 228544
    %160 = vst.msk [vmem:[#allocation0] sm:$0x1] %vm159, %v158
    %s161 = scalar_lea.vmem %s0, 5
    %v162 = vld [vmem:[%s161] sm:$0x1]
    %163 = vrot.lane.b32.xlu0 %v162, 20
    %v164 = vpop.permute.xlu0 %163
    %vm165 = vcmask 195744
    %166 = vst.msk [vmem:[#allocation0] sm:$0x1] %vm165, %v164
    %s167 = scalar_lea.vmem %s0, 4
    %v168 = vld [vmem:[%s167] sm:$0x1]
    %169 = vrot.lane.b32.xlu0 %v168, 16
    %v170 = vpop.permute.xlu0 %169
    %vm171 = vcmask 162944
    %172 = vst.msk [vmem:[#allocation0] sm:$0x1] %vm171, %v170
    %s173 = scalar_lea.vmem %s0, 3
    %v174 = vld [vmem:[%s173] sm:$0x1]
    %175 = vrot.lane.b32.xlu0 %v174, 12
    %v176 = vpop.permute.xlu0 %175
    %vm177 = vcmask 130144
    %178 = vst.msk [vmem:[#allocation0] sm:$0x1] %vm177, %v176
    %s179 = scalar_lea.vmem %s0, 2
    %v180 = vld [vmem:[%s179] sm:$0x1]
    %181 = vrot.lane.b32.xlu0 %v180, 8
    %v182 = vpop.permute.xlu0 %181
    %vm183 = vcmask 97344
    %184 = vst.msk [vmem:[#allocation0] sm:$0x1] %vm183, %v182
    %s185 = scalar_lea.vmem %s0, 1
    %v186 = vld [vmem:[%s185] sm:$0x1]
    %187 = vrot.lane.b32.xlu0 %v186, 4
    %v188 = vpop.permute.xlu0 %187
    %vm189 = vcmask 64544
    %190 = vst.msk [vmem:[#allocation0] sm:$0x1] %vm189, %v188
    %s192 = ssub.s32 2, 1
    %v193 = vld [vmem:[#allocation0] sm:%s192]
    %s195 = ssub.s32 2, 1
    %196 = vst [vmem:[%s1] sm:%s195] %v193

// kernel: _decoder_forward.2
$region0: #{_decoder_forward.2}
  #allocation0 [shape = 'u32[]', space=smem, size = 0x4, offset = 0x4, fixed_abs, tag = 'smem constant byte address 0x4 - core index']
  #allocation1 [shape = 'u32[72,128]{1,0:T(1,128)}', space=vmem, size = 0x9000, scoped, tag = 'internal scratch']
  %s0 = inlined_call_operand.vmem [shape: bf16[8,32,512], index: 0, kind: input, shape index: {}]
  %s1 = inlined_call_operand.vmem [shape: bf16[8,512,128], index: 1, kind: input, shape index: {}]
  %s2 = inlined_call_operand.vmem [shape: f32[1,128], index: 2, kind: input, shape index: {}]
  %s3 = inlined_call_operand.vmem [shape: bf16[8,32,128], index: 3, kind: output, shape index: {}]
  %s4 = sld [smem:[#allocation0]]
  $region45: #{_decoder_forward.2} parent=0
    _
  %s6 = ssub.s32 1, %s4
  %s7 = scalar_select 0, %s6, %s4
  loop: start=0, step=1, limit=10
  $region2: #{_decoder_forward.2} parent=0 // loop_pre_header
    _
  $region3: #{_decoder_forward.2} parent=0 // loop_header
    %s9 = sphi 0, %s13
    %p10 = scmp.ge.s32.totalorder %s9, 10
    %s16 = sphi 0, %s28
    %s17 = sphi 0, %s24
    %s18 = sphi 0, %s16
    %s19 = sphi 0, %s17
    %s20 = sphi 0, %s18
    %s21 = sphi 0, %s19
    %s33 = sphi 0, %s35
    %s36 = sphi 0, %s33
    %s37 = sphi 0, %s36
    %s53 = sphi 0, %s37
    %s59 = sphi 0, %s61
    %s62 = sphi 0, %s59
    %s63 = sphi 0, %s62
    %s79 = sphi 0, %s63
    %s83 = sphi 0, %s83
    %s85 = sphi 0, %s83
    %s86 = sphi 0, %s85
    %s100 = sphi 0, %s86
    %s108 = sphi 0, %s110
    %s111 = sphi 0, %s108
    %s112 = sphi 0, %s111
    %s128 = sphi 0, %s112
  $region4: #{_decoder_forward.2} parent=0 // loop_header_branch
    %12 = sbr.rel (%p10) target = $region8
  $region5: #{_decoder_forward.2} parent=0 // loop_body
    %s14 = ssub.s32 %s9, 1
    %s15 = ssub.s32 %s9, 2
    %s22 = sadd.s32 1, %s17
    %p23 = scmp.ge.s32.totalorder %s22, 1
    %s24 = scalar_select %p23, 0, %s22
    %s25 = sadd.s32 1, %s16
    %s26 = scalar_select %p23, %s25, %s16
    %p27 = scmp.ge.s32.totalorder %s26, 8
    %s28 = scalar_select %p27, 0, %s26
    %s29 = ssub.s32 %s16, %s28
    %s30 = ssub.s32 %s17, %s24
    %s31 = sor.u32 %s29, %s30
    %p32 = scmp.eq.s32.totalorder %s31, 0
    %s34 = sadd.s32 %s33, 1
    %s35 = scalar_select %p32, %s33, %s34
    %p38 = pneg %p32
    %p39 = scmp.eq.s32.totalorder %s9, 7
    %p40 = por %p38, %p39
    %p41 = scmp.ne.s32.totalorder %s33, %s36
    %p42 = scmp.eq.s32.totalorder %s9, 0
    %p43 = por %p41, %p42
    %p44 = scmp.ne.s32.totalorder %s33, %s36
    %p45 = scmp.eq.s32.totalorder %s14, 7
    %p46 = por %p44, %p45
    %p47 = scmp.ne.s32.totalorder %s36, %s37
    %p48 = scmp.eq.s32.totalorder %s14, 0
    %p49 = por %p47, %p48
    %p50 = scmp.ne.s32.totalorder %s36, %s37
    %p51 = scmp.eq.s32.totalorder %s15, 7
    %p52 = por %p50, %p51
    %p54 = scmp.ne.s32.totalorder %s37, %s53
    %p55 = scmp.eq.s32.totalorder %s15, 0
    %p56 = por %p54, %p55
    %s57 = ssub.s32 %s16, %s28
    %p58 = scmp.eq.s32.totalorder %s57, 0
    %s60 = sadd.s32 %s59, 1
    %s61 = scalar_select %p58, %s59, %s60
    %p64 = pneg %p58
    %p65 = scmp.eq.s32.totalorder %s9, 7
    %p66 = por %p64, %p65
    %p67 = scmp.ne.s32.totalorder %s59, %s62
    %p68 = scmp.eq.s32.totalorder %s9, 0
    %p69 = por %p67, %p68
    %p70 = scmp.ne.s32.totalorder %s59, %s62
    %p71 = scmp.eq.s32.totalorder %s14, 7
    %p72 = por %p70, %p71
    %p73 = scmp.ne.s32.totalorder %s62, %s63
    %p74 = scmp.eq.s32.totalorder %s14, 0
    %p75 = por %p73, %p74
    %p76 = scmp.ne.s32.totalorder %s62, %s63
    %p77 = scmp.eq.s32.totalorder %s15, 7
    %p78 = por %p76, %p77
    %p80 = scmp.ne.s32.totalorder %s63, %s79
    %p81 = scmp.eq.s32.totalorder %s15, 0
    %p82 = por %p80, %p81
    %s84 = sadd.s32 %s83, 1
    %p87 = scmp.eq.s32.totalorder %s9, 7
    %p88 = scmp.ne.s32.totalorder %s83, %s85
    %p89 = scmp.eq.s32.totalorder %s9, 0
    %p90 = por %p88, %p89
    %p91 = scmp.ne.s32.totalorder %s83, %s85
    %p92 = scmp.eq.s32.totalorder %s14, 7
    %p93 = por %p91, %p92
    %p94 = scmp.ne.s32.totalorder %s85, %s86
    %p95 = scmp.eq.s32.totalorder %s14, 0
    %p96 = por %p94, %p95
    %p97 = scmp.ne.s32.totalorder %s85, %s86
    %p98 = scmp.eq.s32.totalorder %s15, 7
    %p99 = por %p97, %p98
    %p101 = scmp.ne.s32.totalorder %s86, %s100
    %p102 = scmp.eq.s32.totalorder %s15, 0
    %p103 = por %p101, %p102
    %s104 = ssub.s32 %s16, %s28
    %s105 = ssub.s32 %s17, %s24
    %s106 = sor.u32 %s104, %s105
    %p107 = scmp.eq.s32.totalorder %s106, 0
    %s109 = sadd.s32 %s108, 1
    %s110 = scalar_select %p107, %s108, %s109
    %p113 = pneg %p107
    %p114 = scmp.eq.s32.totalorder %s9, 7
    %p115 = por %p113, %p114
    %p116 = scmp.ne.s32.totalorder %s108, %s111
    %p117 = scmp.eq.s32.totalorder %s9, 0
    %p118 = por %p116, %p117
    %p119 = scmp.ne.s32.totalorder %s108, %s111
    %p120 = scmp.eq.s32.totalorder %s14, 7
    %p121 = por %p119, %p120
    %p122 = scmp.ne.s32.totalorder %s111, %s112
    %p123 = scmp.eq.s32.totalorder %s14, 0
    %p124 = por %p122, %p123
    %p125 = scmp.ne.s32.totalorder %s111, %s112
    %p126 = scmp.eq.s32.totalorder %s15, 7
    %p127 = por %p125, %p126
    %p129 = scmp.ne.s32.totalorder %s112, %s128
    %p130 = scmp.eq.s32.totalorder %s15, 0
    %p131 = por %p129, %p130
    %p132 = scmp.le.s32.totalorder 1, %s9
    %p133 = scmp.lt.s32.totalorder %s9, 9
    %p134 = pnand %p132, %p133
    %p135 = pneg %p134
    // Predicated region
    $region9: #{_decoder_forward.2} parent=5 // pred_check
      _
    $region10: #{_decoder_forward.2} parent=5 // pred_check_branch
      %137 = sbr.rel (%p134) target = $region12
    $region11: #{_decoder_forward.2} parent=5 // pred_region
      %s138 = ssub.s32 %s9, 1
      // Predicated region
      $region13: #{_decoder_forward.2} parent=11 // pred_check
        %p139 = pneg %p96
      $region14: #{_decoder_forward.2} parent=11 // pred_check_branch
        %141 = sbr.rel (%p139) target = $region16
      $region15: #{_decoder_forward.2} parent=11 // pred_region
        _
      $region16: #{_decoder_forward.2} parent=11 // pred_fallthru
        _
    $region12: #{_decoder_forward.2} parent=5 // pred_fallthru
      _
    %p142 = scmp.lt.s32.totalorder %s9, 8
    // Predicated region
    $region17: #{_decoder_forward.2} parent=5 // pred_check
      %p143 = pneg %p142
    $region18: #{_decoder_forward.2} parent=5 // pred_check_branch
      %145 = sbr.rel (%p143) target = $region20
    $region19: #{_decoder_forward.2} parent=5 // pred_region
      // Predicated region
      $region21: #{_decoder_forward.2} parent=19 // pred_check
        %p146 = pneg %p43
      $region22: #{_decoder_forward.2} parent=19 // pred_check_branch
        %148 = sbr.rel (%p146) target = $region24
      $region23: #{_decoder_forward.2} parent=19 // pred_region
        %s149 = smul.u32 4, %s17
        %p150 = scmp.lt.s32.totalorder %s16, 7
        %s151 = scalar_select %p150, %s16, 7
        %p152 = scmp.lt.s32.totalorder %s149, 3
        %s153 = scalar_select %p152, %s149, 3
        %s154 = smul.addr %s153, 4
        %s155 = smul.addr %s151, 16
        %s156 = sadd.s32 %s154, %s155
        %s157 = smul.addr %s156, 4
        %s158 = scalar_lea.vmem %s0, %s157
        %s159 = smul.u32 4, %s17
      $region24: #{_decoder_forward.2} parent=19 // pred_fallthru
        _
      // Predicated region
      $region25: #{_decoder_forward.2} parent=19 // pred_check
        %p160 = pneg %p69
      $region26: #{_decoder_forward.2} parent=19 // pred_check_branch
        %162 = sbr.rel (%p160) target = $region28
      $region27: #{_decoder_forward.2} parent=19 // pred_region
        %p163 = scmp.lt.s32.totalorder %s16, 7
        %s164 = scalar_select %p163, %s16, 7
        %s165 = smul.addr %s164, 64
        %s166 = smul.addr %s165, 4
        %s167 = scalar_lea.vmem %s1, %s166
      $region28: #{_decoder_forward.2} parent=19 // pred_fallthru
        _
    $region20: #{_decoder_forward.2} parent=5 // pred_fallthru
      _
    %p168 = scmp.le.s32.totalorder 1, %s9
    %p169 = scmp.lt.s32.totalorder %s9, 9
    %p170 = pnand %p168, %p169
    %p171 = pneg %p170
    // Predicated region
    $region29: #{_decoder_forward.2} parent=5 // pred_check
      _
    $region30: #{_decoder_forward.2} parent=5 // pred_check_branch
      %173 = sbr.rel (%p170) target = $region32
    $region31: #{_decoder_forward.2} parent=5 // pred_region
      %s174 = ssub.s32 %s9, 1
      %s175 = smul.u32 4, %s19
      %p176 = scmp.lt.s32.totalorder %s18, 7
      %s177 = scalar_select %p176, %s18, 7
      %p178 = scmp.lt.s32.totalorder %s175, 3
      %s179 = scalar_select %p178, %s175, 3
      %s180 = smul.addr %s179, 4
      %s181 = smul.addr %s177, 16
      %s182 = sadd.s32 %s180, %s181
      %s183 = smul.addr %s182, 4
      %s184 = scalar_lea.vmem %s0, %s183
      %p185 = pneg %p49
      %p186 = pneg %p46
      %p187 = scmp.lt.s32.totalorder %s18, 7
      %s188 = scalar_select %p187, %s18, 7
      %s189 = smul.addr %s188, 64
      %s190 = smul.addr %s189, 4
      %s191 = scalar_lea.vmem %s1, %s190
      %p192 = pneg %p75
      %p193 = pneg %p72
      %p194 = pneg %p96
      %p195 = pneg %p93
      %p196 = pneg %p124
      %p197 = pneg %p121
      %s198 = smul.u32 4, %s19
      %p199 = scmp.lt.s32.totalorder %s18, 7
      %s200 = scalar_select %p199, %s18, 7
      %p201 = scmp.lt.s32.totalorder %s198, 3
      %s202 = scalar_select %p201, %s198, 3
      %s203 = smul.addr %s200, 4
      %s204 = sadd.s32 %s202, %s203
      %s205 = smul.addr %s204, 4
      %s206 = scalar_lea.vmem %s3, %s205
      %s207 = smul.u32 4, %s19
      %p208 = scmp.lt.s32.totalorder %s18, 7
      %s209 = scalar_select %p208, %s18, 7
      %p210 = scmp.lt.s32.totalorder %s207, 3
      %s211 = scalar_select %p210, %s207, 3
      %s212 = smul.addr %s211, 4
      %s213 = smul.addr %s209, 16
      %s214 = sadd.s32 %s212, %s213
      %s215 = smul.addr %s214, 4
      %s216 = scalar_lea.vmem %s0, %s215
      %s217 = smul.u32 4, %s19
      %p218 = scmp.lt.s32.totalorder %s18, 7
      %s219 = scalar_select %p218, %s18, 7
      %s220 = smul.addr %s219, 64
      %s221 = smul.addr %s220, 4
      %s222 = scalar_lea.vmem %s1, %s221
      %s223 = smul.u32 4, %s19
      %p224 = scmp.lt.s32.totalorder %s18, 7
      %s225 = scalar_select %p224, %s18, 7
      %p226 = scmp.lt.s32.totalorder %s223, 3
      %s227 = scalar_select %p226, %s223, 3
      %s228 = smul.addr %s225, 4
      %s229 = sadd.s32 %s227, %s228
      %s230 = smul.addr %s229, 4
      %s231 = scalar_lea.vmem %s3, %s230
      %s232 = smul.u32 4, %s19
      %v233 = vld [vmem:[%s216] sm:$0xff]
      %v234 = vld [vmem:[%s216 + $0x8] sm:$0xff]
      %v235 = vld [vmem:[%s216 + $0x10] sm:$0xff]
      %v236 = vld [vmem:[%s216 + $0x18] sm:$0xff]
      %v237 = vld [vmem:[%s216 + $0x20] sm:$0xff]
      %v238 = vld [vmem:[%s216 + $0x28] sm:$0xff]
      %v239 = vld [vmem:[%s216 + $0x30] sm:$0xff]
      %v240 = vld [vmem:[%s216 + $0x38] sm:$0xff]
      %v241 = vld [vmem:[%s222] sm:$0xf]
      %v242 = vld [vmem:[%s222 + $0x4] sm:$0xf]
      %v243 = vld [vmem:[%s222 + $0x8] sm:$0xf]
      %v244 = vld [vmem:[%s222 + $0xc] sm:$0xf]
      %v245 = vld [vmem:[%s222 + $0x10] sm:$0xf]
      %v246 = vld [vmem:[%s222 + $0x14] sm:$0xf]
      %v247 = vld [vmem:[%s222 + $0x18] sm:$0xf]
      %v248 = vld [vmem:[%s222 + $0x1c] sm:$0xf]
      %v249 = vld [vmem:[%s222 + $0x20] sm:$0xf]
      %v250 = vld [vmem:[%s222 + $0x24] sm:$0xf]
      %v251 = vld [vmem:[%s222 + $0x28] sm:$0xf]
      %v252 = vld [vmem:[%s222 + $0x2c] sm:$0xf]
      %v253 = vld [vmem:[%s222 + $0x30] sm:$0xf]
      %v254 = vld [vmem:[%s222 + $0x34] sm:$0xf]
      %v255 = vld [vmem:[%s222 + $0x38] sm:$0xf]
      %v256 = vld [vmem:[%s222 + $0x3c] sm:$0xf]
      %v257 = vld [vmem:[%s222 + $0x40] sm:$0xf]
      %v258 = vld [vmem:[%s222 + $0x44] sm:$0xf]
      %v259 = vld [vmem:[%s222 + $0x48] sm:$0xf]
      %v260 = vld [vmem:[%s222 + $0x4c] sm:$0xf]
      %v261 = vld [vmem:[%s222 + $0x50] sm:$0xf]
      %v262 = vld [vmem:[%s222 + $0x54] sm:$0xf]
      %v263 = vld [vmem:[%s222 + $0x58] sm:$0xf]
      %v264 = vld [vmem:[%s222 + $0x5c] sm:$0xf]
      %v265 = vld [vmem:[%s222 + $0x60] sm:$0xf]
      %v266 = vld [vmem:[%s222 + $0x64] sm:$0xf]
      %v267 = vld [vmem:[%s222 + $0x68] sm:$0xf]
      %v268 = vld [vmem:[%s222 + $0x6c] sm:$0xf]
      %v269 = vld [vmem:[%s222 + $0x70] sm:$0xf]
      %v270 = vld [vmem:[%s222 + $0x74] sm:$0xf]
      %v271 = vld [vmem:[%s222 + $0x78] sm:$0xf]
      %v272 = vld [vmem:[%s222 + $0x7c] sm:$0xf]
      %v273 = vld [vmem:[%s222 + $0x80] sm:$0xf]
      %v274 = vld [vmem:[%s222 + $0x84] sm:$0xf]
      %v275 = vld [vmem:[%s222 + $0x88] sm:$0xf]
      %v276 = vld [vmem:[%s222 + $0x8c] sm:$0xf]
      %v277 = vld [vmem:[%s222 + $0x90] sm:$0xf]
      %v278 = vld [vmem:[%s222 + $0x94] sm:$0xf]
      %v279 = vld [vmem:[%s222 + $0x98] sm:$0xf]
      %v280 = vld [vmem:[%s222 + $0x9c] sm:$0xf]
      %v281 = vld [vmem:[%s222 + $0xa0] sm:$0xf]
      %v282 = vld [vmem:[%s222 + $0xa4] sm:$0xf]
      %v283 = vld [vmem:[%s222 + $0xa8] sm:$0xf]
      %v284 = vld [vmem:[%s222 + $0xac] sm:$0xf]
      %v285 = vld [vmem:[%s222 + $0xb0] sm:$0xf]
      %v286 = vld [vmem:[%s222 + $0xb4] sm:$0xf]
      %v287 = vld [vmem:[%s222 + $0xb8] sm:$0xf]
      %v288 = vld [vmem:[%s222 + $0xbc] sm:$0xf]
      %v289 = vld [vmem:[%s222 + $0xc0] sm:$0xf]
      %v290 = vld [vmem:[%s222 + $0xc4] sm:$0xf]
      %v291 = vld [vmem:[%s222 + $0xc8] sm:$0xf]
      %v292 = vld [vmem:[%s222 + $0xcc] sm:$0xf]
      %v293 = vld [vmem:[%s222 + $0xd0] sm:$0xf]
      %v294 = vld [vmem:[%s222 + $0xd4] sm:$0xf]
      %v295 = vld [vmem:[%s222 + $0xd8] sm:$0xf]
      %v296 = vld [vmem:[%s222 + $0xdc] sm:$0xf]
      %v297 = vld [vmem:[%s222 + $0xe0] sm:$0xf]
      %v298 = vld [vmem:[%s222 + $0xe4] sm:$0xf]
      %v299 = vld [vmem:[%s222 + $0xe8] sm:$0xf]
      %v300 = vld [vmem:[%s222 + $0xec] sm:$0xf]
      %v301 = vld [vmem:[%s222 + $0xf0] sm:$0xf]
      %v302 = vld [vmem:[%s222 + $0xf4] sm:$0xf]
      %v303 = vld [vmem:[%s222 + $0xf8] sm:$0xf]
      %v304 = vld [vmem:[%s222 + $0xfc] sm:$0xf]
      %v305 = vld [vmem:[%s2] sm:$0x1]
      %v307 = vperm.slane %v305, 0
      %v317 = vunpack.c.l.b16 %v233
      %v318 = vunpack.c.h.b16 %v233
      %v319 = vunpack.c.l.b16 %v234
      %v320 = vunpack.c.h.b16 %v234
      %v321 = vunpack.c.l.b16 %v235
      %v322 = vunpack.c.h.b16 %v235
      %v323 = vunpack.c.l.b16 %v236
      %v324 = vunpack.c.h.b16 %v236
      %v325 = vunpack.c.l.b16 %v237
      %v326 = vunpack.c.h.b16 %v237
      %v327 = vunpack.c.l.b16 %v238
      %v328 = vunpack.c.h.b16 %v238
      %v329 = vunpack.c.l.b16 %v239
      %v330 = vunpack.c.h.b16 %v239
      %v331 = vunpack.c.l.b16 %v240
      %v332 = vunpack.c.h.b16 %v240
      %v333 = vpack.c.b16 %v321, %v317
      %v334 = vpack.c.b16 %v322, %v318
      %v335 = vpack.c.b16 %v323, %v319
      %v336 = vpack.c.b16 %v324, %v320
      %v337 = vpack.c.b16 %v329, %v325
      %v338 = vpack.c.b16 %v330, %v326
      %v339 = vpack.c.b16 %v331, %v327
      %v340 = vpack.c.b16 %v332, %v328
      %v413 = vunpack.c.l.b16 %v241
      %v414 = vunpack.c.l.b16 %v242
      %v415 = vunpack.c.l.b16 %v243
      %v416 = vunpack.c.l.b16 %v244
      %v417 = vunpack.c.l.b16 %v245
      %v418 = vunpack.c.l.b16 %v246
      %v419 = vunpack.c.l.b16 %v247
      %v420 = vunpack.c.l.b16 %v248
      %v421 = vunpack.c.l.b16 %v249
      %v422 = vunpack.c.l.b16 %v250
      %v423 = vunpack.c.l.b16 %v251
      %v424 = vunpack.c.l.b16 %v252
      %v425 = vunpack.c.l.b16 %v253
      %v426 = vunpack.c.l.b16 %v254
      %v427 = vunpack.c.l.b16 %v255
      %v428 = vunpack.c.l.b16 %v256
      %v429 = vunpack.c.l.b16 %v257
      %v430 = vunpack.c.l.b16 %v258
      %v431 = vunpack.c.l.b16 %v259
      %v432 = vunpack.c.l.b16 %v260
      %v433 = vunpack.c.l.b16 %v261
      %v434 = vunpack.c.l.b16 %v262
      %v435 = vunpack.c.l.b16 %v263
      %v436 = vunpack.c.l.b16 %v264
      %v437 = vunpack.c.l.b16 %v265
      %v438 = vunpack.c.l.b16 %v266
      %v439 = vunpack.c.l.b16 %v267
      %v440 = vunpack.c.l.b16 %v268
      %v441 = vunpack.c.l.b16 %v269
      %v442 = vunpack.c.l.b16 %v270
      %v443 = vunpack.c.l.b16 %v271
      %v444 = vunpack.c.l.b16 %v272
      %v445 = vunpack.c.l.b16 %v273
      %v446 = vunpack.c.l.b16 %v274
      %v447 = vunpack.c.l.b16 %v275
      %v448 = vunpack.c.l.b16 %v276
      %v449 = vunpack.c.l.b16 %v277
      %v450 = vunpack.c.l.b16 %v278
      %v451 = vunpack.c.l.b16 %v279
      %v452 = vunpack.c.l.b16 %v280
      %v453 = vunpack.c.l.b16 %v281
      %v454 = vunpack.c.l.b16 %v282
      %v455 = vunpack.c.l.b16 %v283
      %v456 = vunpack.c.l.b16 %v284
      %v457 = vunpack.c.l.b16 %v285
      %v458 = vunpack.c.l.b16 %v286
      %v459 = vunpack.c.l.b16 %v287
      %v460 = vunpack.c.l.b16 %v288
      %v461 = vunpack.c.l.b16 %v289
      %v462 = vunpack.c.l.b16 %v290
      %v463 = vunpack.c.l.b16 %v291
      %v464 = vunpack.c.l.b16 %v292
      %v465 = vunpack.c.l.b16 %v293
      %v466 = vunpack.c.l.b16 %v294
      %v467 = vunpack.c.l.b16 %v295
      %v468 = vunpack.c.l.b16 %v296
      %v469 = vunpack.c.l.b16 %v297
      %v470 = vunpack.c.l.b16 %v298
      %v471 = vunpack.c.l.b16 %v299
      %v472 = vunpack.c.l.b16 %v300
      %v473 = vunpack.c.l.b16 %v301
      %v474 = vunpack.c.l.b16 %v302
      %v475 = vunpack.c.l.b16 %v303
      %v476 = vunpack.c.l.b16 %v304
      %v477 = vpack.c.b16 %v414, %v413
      %v478 = vpack.c.b16 %v416, %v415
      %v479 = vpack.c.b16 %v418, %v417
      %v480 = vpack.c.b16 %v420, %v419
      %v481 = vpack.c.b16 %v422, %v421
      %v482 = vpack.c.b16 %v424, %v423
      %v483 = vpack.c.b16 %v426, %v425
      %v484 = vpack.c.b16 %v428, %v427
      %v485 = vpack.c.b16 %v430, %v429
      %v486 = vpack.c.b16 %v432, %v431
      %v487 = vpack.c.b16 %v434, %v433
      %v488 = vpack.c.b16 %v436, %v435
      %v489 = vpack.c.b16 %v438, %v437
      %v490 = vpack.c.b16 %v440, %v439
      %v491 = vpack.c.b16 %v442, %v441
      %v492 = vpack.c.b16 %v444, %v443
      %v493 = vpack.c.b16 %v446, %v445
      %v494 = vpack.c.b16 %v448, %v447
      %v495 = vpack.c.b16 %v450, %v449
      %v496 = vpack.c.b16 %v452, %v451
      %v497 = vpack.c.b16 %v454, %v453
      %v498 = vpack.c.b16 %v456, %v455
      %v499 = vpack.c.b16 %v458, %v457
      %v500 = vpack.c.b16 %v460, %v459
      %v501 = vpack.c.b16 %v462, %v461
      %v502 = vpack.c.b16 %v464, %v463
      %v503 = vpack.c.b16 %v466, %v465
      %v504 = vpack.c.b16 %v468, %v467
      %v505 = vpack.c.b16 %v470, %v469
      %v506 = vpack.c.b16 %v472, %v471
      %v507 = vpack.c.b16 %v474, %v473
      %v508 = vpack.c.b16 %v476, %v475
      %541 = vmatpush.bf16.msra.mxu0 %v484
      %542 = vmatpush.bf16.msra.mxu0 %v483
      %543 = vmatpush.bf16.msra.mxu0 %v482
      %544 = vmatpush.bf16.msra.mxu0 %v481
      %545 = vmatpush.bf16.msra.mxu0 %v480
      %546 = vmatpush.bf16.msra.mxu0 %v479
      %547 = vmatpush.bf16.msra.mxu0 %v478
      %548 = vmatpush.bf16.msra.mxu0 %v477
      %549 = vmatmul.bf16.gmra.mxu0 %v333
      %v550 = vpop.f32.mrf.mxu0
      %v551 = vadd.f32 %v307, %v550
      %v552 = vpop.f32.mrf.mxu0
      %v553 = vadd.f32 %v307, %v552
      %554 = vmatmul.bf16.gmra.mxu0 %v337
      %v555 = vpop.f32.mrf.mxu0
      %v556 = vadd.f32 %v307, %v555
      %v557 = vpop.f32.mrf.mxu0
      %v558 = vadd.f32 %v307, %v557
      %559 = vdwg.mxu0
      %560 = vmatpush.bf16.msra.mxu0 %v492
      %561 = vmatpush.bf16.msra.mxu0 %v491
      %562 = vmatpush.bf16.msra.mxu0 %v490
      %563 = vmatpush.bf16.msra.mxu0 %v489
      %564 = vmatpush.bf16.msra.mxu0 %v488
      %565 = vmatpush.bf16.msra.mxu0 %v487
      %566 = vmatpush.bf16.msra.mxu0 %v486
      %567 = vmatpush.bf16.msra.mxu0 %v485
      %568 = vmatmul.bf16.gmra.mxu0 %v334
      %v569 = vpop.f32.mrf.mxu0
      %v570 = vadd.f32 %v551, %v569
      %v571 = vpop.f32.mrf.mxu0
      %v572 = vadd.f32 %v553, %v571
      %573 = vmatmul.bf16.gmra.mxu0 %v338
      %v574 = vpop.f32.mrf.mxu0
      %v575 = vadd.f32 %v556, %v574
      %v576 = vpop.f32.mrf.mxu0
      %v577 = vadd.f32 %v558, %v576
      %578 = vdwg.mxu0
      %579 = vmatpush.bf16.msra.mxu0 %v500
      %580 = vmatpush.bf16.msra.mxu0 %v499
      %581 = vmatpush.bf16.msra.mxu0 %v498
      %582 = vmatpush.bf16.msra.mxu0 %v497
      %583 = vmatpush.bf16.msra.mxu0 %v496
      %584 = vmatpush.bf16.msra.mxu0 %v495
      %585 = vmatpush.bf16.msra.mxu0 %v494
      %586 = vmatpush.bf16.msra.mxu0 %v493
      %587 = vmatmul.bf16.gmra.mxu0 %v335
      %v588 = vpop.f32.mrf.mxu0
      %v589 = vadd.f32 %v570, %v588
      %v590 = vpop.f32.mrf.mxu0
      %v591 = vadd.f32 %v572, %v590
      %592 = vmatmul.bf16.gmra.mxu0 %v339
      %v593 = vpop.f32.mrf.mxu0
      %v594 = vadd.f32 %v575, %v593
      %v595 = vpop.f32.mrf.mxu0
      %v596 = vadd.f32 %v577, %v595
      %597 = vdwg.mxu0
      %598 = vmatpush.bf16.msra.mxu0 %v508
      %599 = vmatpush.bf16.msra.mxu0 %v507
      %600 = vmatpush.bf16.msra.mxu0 %v506
      %601 = vmatpush.bf16.msra.mxu0 %v505
      %602 = vmatpush.bf16.msra.mxu0 %v504
      %603 = vmatpush.bf16.msra.mxu0 %v503
      %604 = vmatpush.bf16.msra.mxu0 %v502
      %605 = vmatpush.bf16.msra.mxu0 %v501
      %606 = vmatmul.bf16.gmra.mxu0 %v336
      %v607 = vpop.f32.mrf.mxu0
      %v608 = vadd.f32 %v589, %v607
      %v609 = vpop.f32.mrf.mxu0
      %v610 = vadd.f32 %v591, %v609
      %611 = vmatmul.bf16.gmra.mxu0 %v340
      %v612 = vpop.f32.mrf.mxu0
      %v613 = vadd.f32 %v594, %v612
      %v614 = vpop.f32.mrf.mxu0
      %v615 = vadd.f32 %v596, %v614
      %616 = vdwg.mxu0
      %v617 = vmax.f32 %v608, 0.0
      %v618 = vmax.f32 %v610, 0.0
      %v619 = vmax.f32 %v613, 0.0
      %v620 = vmax.f32 %v615, 0.0
      %v621 = vpack.c.bf16 %v617, %v617
      %v622 = vpack.c.bf16 %v618, %v618
      %v623 = vpack.c.bf16 %v619, %v619
      %v624 = vpack.c.bf16 %v620, %v620
      %625 = vst [vmem:[%s231] sm:$0xf] %v621
      %626 = vst [vmem:[%s231 + $0x4] sm:$0xf] %v622
      %627 = vst [vmem:[%s231 + $0x8] sm:$0xf] %v623
      %628 = vst [vmem:[%s231 + $0xc] sm:$0xf] %v624
      %s629 = smul.u32 4, %s19
      %p630 = scmp.lt.s32.totalorder %s18, 7
      %s631 = scalar_select %p630, %s18, 7
      %p632 = scmp.lt.s32.totalorder %s629, 3
      %s633 = scalar_select %p632, %s629, 3
      %s634 = smul.addr %s631, 4
      %s635 = sadd.s32 %s633, %s634
      %s636 = smul.addr %s635, 4
      %s637 = scalar_lea.vmem %s3, %s636
      // Predicated region
      $region33: #{_decoder_forward.2} parent=31 // pred_check
        %p638 = pneg %p121
      $region34: #{_decoder_forward.2} parent=31 // pred_check_branch
        %640 = sbr.rel (%p638) target = $region36
      $region35: #{_decoder_forward.2} parent=31 // pred_region
        %s641 = smul.u32 4, %s19
      $region36: #{_decoder_forward.2} parent=31 // pred_fallthru
        _
    $region32: #{_decoder_forward.2} parent=5 // pred_fallthru
      _
    %p642 = scmp.le.s32.totalorder 2, %s9
    // Predicated region
    $region37: #{_decoder_forward.2} parent=5 // pred_check
      %p643 = pneg %p642
    $region38: #{_decoder_forward.2} parent=5 // pred_check_branch
      %645 = sbr.rel (%p643) target = $region40
    $region39: #{_decoder_forward.2} parent=5 // pred_region
      %s646 = ssub.s32 %s9, 2
      // Predicated region
      $region41: #{_decoder_forward.2} parent=39 // pred_check
        %p647 = pneg %p127
      $region42: #{_decoder_forward.2} parent=39 // pred_check_branch
        %649 = sbr.rel (%p647) target = $region44
      $region43: #{_decoder_forward.2} parent=39 // pred_region
        %s650 = smul.u32 4, %s21
        %p651 = scmp.lt.s32.totalorder %s20, 7
        %s652 = scalar_select %p651, %s20, 7
        %p653 = scmp.lt.s32.totalorder %s650, 3
        %s654 = scalar_select %p653, %s650, 3
        %s655 = smul.addr %s652, 4
        %s656 = sadd.s32 %s654, %s655
        %s657 = smul.addr %s656, 4
        %s658 = scalar_lea.vmem %s3, %s657
      $region44: #{_decoder_forward.2} parent=39 // pred_fallthru
        _
    $region40: #{_decoder_forward.2} parent=5 // pred_fallthru
      _
  $region6: #{_decoder_forward.2} parent=0 // loop_footer
    %s13 = sadd.s32 1, %s9
  $region7: #{_decoder_forward.2} parent=0 // loop_footer_branch
    %8 = sbr.rel target = $region3
  $region8: #{_decoder_forward.2} parent=0 // loop_exit
    _

// kernel: _decoder_forward.3
$region0: #{_decoder_forward.3}
  #allocation0 [shape = 'u32[]', space=smem, size = 0x4, offset = 0x4, fixed_abs, tag = 'smem constant byte address 0x4 - core index']
  #allocation1 [shape = 'u32[72,128]{1,0:T(1,128)}', space=vmem, size = 0x9000, scoped, tag = 'internal scratch']
  %s0 = inlined_call_operand.vmem [shape: bf16[8,128,2048], index: 0, kind: input, shape index: {}]
  %s1 = inlined_call_operand.vmem [shape: bf16[8,2048,128], index: 1, kind: input, shape index: {}]
  %s2 = inlined_call_operand.vmem [shape: f32[1,128], index: 2, kind: input, shape index: {}]
  %s3 = inlined_call_operand.vmem [shape: f32[8,128,128], index: 3, kind: output, shape index: {}]
  %s4 = sld [smem:[#allocation0]]
  $region45: #{_decoder_forward.3} parent=0
    _
  %s6 = ssub.s32 1, %s4
  %s7 = scalar_select 0, %s6, %s4
  loop: start=0, step=1, limit=10
  $region2: #{_decoder_forward.3} parent=0 // loop_pre_header
    _
  $region3: #{_decoder_forward.3} parent=0 // loop_header
    %s9 = sphi 0, %s13
    %p10 = scmp.ge.s32.totalorder %s9, 10
    %s16 = sphi 0, %s28
    %s17 = sphi 0, %s24
    %s18 = sphi 0, %s16
    %s19 = sphi 0, %s17
    %s20 = sphi 0, %s18
    %s21 = sphi 0, %s19
    %s33 = sphi 0, %s35
    %s36 = sphi 0, %s33
    %s37 = sphi 0, %s36
    %s53 = sphi 0, %s37
    %s59 = sphi 0, %s61
    %s62 = sphi 0, %s59
    %s63 = sphi 0, %s62
    %s79 = sphi 0, %s63
    %s83 = sphi 0, %s83
    %s85 = sphi 0, %s83
    %s86 = sphi 0, %s85
    %s100 = sphi 0, %s86
    %s108 = sphi 0, %s110
    %s111 = sphi 0, %s108
    %s112 = sphi 0, %s111
    %s128 = sphi 0, %s112
  $region4: #{_decoder_forward.3} parent=0 // loop_header_branch
    %12 = sbr.rel (%p10) target = $region8
  $region5: #{_decoder_forward.3} parent=0 // loop_body
    %s14 = ssub.s32 %s9, 1
    %s15 = ssub.s32 %s9, 2
    %s22 = sadd.s32 1, %s17
    %p23 = scmp.ge.s32.totalorder %s22, 1
    %s24 = scalar_select %p23, 0, %s22
    %s25 = sadd.s32 1, %s16
    %s26 = scalar_select %p23, %s25, %s16
    %p27 = scmp.ge.s32.totalorder %s26, 8
    %s28 = scalar_select %p27, 0, %s26
    %s29 = ssub.s32 %s16, %s28
    %s30 = ssub.s32 %s17, %s24
    %s31 = sor.u32 %s29, %s30
    %p32 = scmp.eq.s32.totalorder %s31, 0
    %s34 = sadd.s32 %s33, 1
    %s35 = scalar_select %p32, %s33, %s34
    %p38 = pneg %p32
    %p39 = scmp.eq.s32.totalorder %s9, 7
    %p40 = por %p38, %p39
    %p41 = scmp.ne.s32.totalorder %s33, %s36
    %p42 = scmp.eq.s32.totalorder %s9, 0
    %p43 = por %p41, %p42
    %p44 = scmp.ne.s32.totalorder %s33, %s36
    %p45 = scmp.eq.s32.totalorder %s14, 7
    %p46 = por %p44, %p45
    %p47 = scmp.ne.s32.totalorder %s36, %s37
    %p48 = scmp.eq.s32.totalorder %s14, 0
    %p49 = por %p47, %p48
    %p50 = scmp.ne.s32.totalorder %s36, %s37
    %p51 = scmp.eq.s32.totalorder %s15, 7
    %p52 = por %p50, %p51
    %p54 = scmp.ne.s32.totalorder %s37, %s53
    %p55 = scmp.eq.s32.totalorder %s15, 0
    %p56 = por %p54, %p55
    %s57 = ssub.s32 %s16, %s28
    %p58 = scmp.eq.s32.totalorder %s57, 0
    %s60 = sadd.s32 %s59, 1
    %s61 = scalar_select %p58, %s59, %s60
    %p64 = pneg %p58
    %p65 = scmp.eq.s32.totalorder %s9, 7
    %p66 = por %p64, %p65
    %p67 = scmp.ne.s32.totalorder %s59, %s62
    %p68 = scmp.eq.s32.totalorder %s9, 0
    %p69 = por %p67, %p68
    %p70 = scmp.ne.s32.totalorder %s59, %s62
    %p71 = scmp.eq.s32.totalorder %s14, 7
    %p72 = por %p70, %p71
    %p73 = scmp.ne.s32.totalorder %s62, %s63
    %p74 = scmp.eq.s32.totalorder %s14, 0
    %p75 = por %p73, %p74
    %p76 = scmp.ne.s32.totalorder %s62, %s63
    %p77 = scmp.eq.s32.totalorder %s15, 7
    %p78 = por %p76, %p77
    %p80 = scmp.ne.s32.totalorder %s63, %s79
    %p81 = scmp.eq.s32.totalorder %s15, 0
    %p82 = por %p80, %p81
    %s84 = sadd.s32 %s83, 1
    %p87 = scmp.eq.s32.totalorder %s9, 7
    %p88 = scmp.ne.s32.totalorder %s83, %s85
    %p89 = scmp.eq.s32.totalorder %s9, 0
    %p90 = por %p88, %p89
    %p91 = scmp.ne.s32.totalorder %s83, %s85
    %p92 = scmp.eq.s32.totalorder %s14, 7
    %p93 = por %p91, %p92
    %p94 = scmp.ne.s32.totalorder %s85, %s86
    %p95 = scmp.eq.s32.totalorder %s14, 0
    %p96 = por %p94, %p95
    %p97 = scmp.ne.s32.totalorder %s85, %s86
    %p98 = scmp.eq.s32.totalorder %s15, 7
    %p99 = por %p97, %p98
    %p101 = scmp.ne.s32.totalorder %s86, %s100
    %p102 = scmp.eq.s32.totalorder %s15, 0
    %p103 = por %p101, %p102
    %s104 = ssub.s32 %s16, %s28
    %s105 = ssub.s32 %s17, %s24
    %s106 = sor.u32 %s104, %s105
    %p107 = scmp.eq.s32.totalorder %s106, 0
    %s109 = sadd.s32 %s108, 1
    %s110 = scalar_select %p107, %s108, %s109
    %p113 = pneg %p107
    %p114 = scmp.eq.s32.totalorder %s9, 7
    %p115 = por %p113, %p114
    %p116 = scmp.ne.s32.totalorder %s108, %s111
    %p117 = scmp.eq.s32.totalorder %s9, 0
    %p118 = por %p116, %p117
    %p119 = scmp.ne.s32.totalorder %s108, %s111
    %p120 = scmp.eq.s32.totalorder %s14, 7
    %p121 = por %p119, %p120
    %p122 = scmp.ne.s32.totalorder %s111, %s112
    %p123 = scmp.eq.s32.totalorder %s14, 0
    %p124 = por %p122, %p123
    %p125 = scmp.ne.s32.totalorder %s111, %s112
    %p126 = scmp.eq.s32.totalorder %s15, 7
    %p127 = por %p125, %p126
    %p129 = scmp.ne.s32.totalorder %s112, %s128
    %p130 = scmp.eq.s32.totalorder %s15, 0
    %p131 = por %p129, %p130
    %p132 = scmp.le.s32.totalorder 1, %s9
    %p133 = scmp.lt.s32.totalorder %s9, 9
    %p134 = pnand %p132, %p133
    %p135 = pneg %p134
    // Predicated region
    $region9: #{_decoder_forward.3} parent=5 // pred_check
      _
    $region10: #{_decoder_forward.3} parent=5 // pred_check_branch
      %137 = sbr.rel (%p134) target = $region12
    $region11: #{_decoder_forward.3} parent=5 // pred_region
      %s138 = ssub.s32 %s9, 1
      // Predicated region
      $region13: #{_decoder_forward.3} parent=11 // pred_check
        %p139 = pneg %p96
      $region14: #{_decoder_forward.3} parent=11 // pred_check_branch
        %141 = sbr.rel (%p139) target = $region16
      $region15: #{_decoder_forward.3} parent=11 // pred_region
        _
      $region16: #{_decoder_forward.3} parent=11 // pred_fallthru
        _
    $region12: #{_decoder_forward.3} parent=5 // pred_fallthru
      _
    %p142 = scmp.lt.s32.totalorder %s9, 8
    // Predicated region
    $region17: #{_decoder_forward.3} parent=5 // pred_check
      %p143 = pneg %p142
    $region18: #{_decoder_forward.3} parent=5 // pred_check_branch
      %145 = sbr.rel (%p143) target = $region20
    $region19: #{_decoder_forward.3} parent=5 // pred_region
      // Predicated region
      $region21: #{_decoder_forward.3} parent=19 // pred_check
        %p146 = pneg %p43
      $region22: #{_decoder_forward.3} parent=19 // pred_check_branch
        %148 = sbr.rel (%p146) target = $region24
      $region23: #{_decoder_forward.3} parent=19 // pred_region
        %s149 = smul.u32 16, %s17
        %p150 = scmp.lt.s32.totalorder %s16, 7
        %s151 = scalar_select %p150, %s16, 7
        %p152 = scmp.lt.s32.totalorder %s149, 15
        %s153 = scalar_select %p152, %s149, 15
        %s154 = smul.addr %s153, 16
        %s155 = smul.addr %s151, 256
        %s156 = sadd.s32 %s154, %s155
        %s157 = smul.addr %s156, 4
        %s158 = scalar_lea.vmem %s0, %s157
        %s159 = smul.u32 16, %s17
      $region24: #{_decoder_forward.3} parent=19 // pred_fallthru
        _
      // Predicated region
      $region25: #{_decoder_forward.3} parent=19 // pred_check
        %p160 = pneg %p69
      $region26: #{_decoder_forward.3} parent=19 // pred_check_branch
        %162 = sbr.rel (%p160) target = $region28
      $region27: #{_decoder_forward.3} parent=19 // pred_region
        %p163 = scmp.lt.s32.totalorder %s16, 7
        %s164 = scalar_select %p163, %s16, 7
        %s165 = smul.addr %s164, 256
        %s166 = smul.addr %s165, 4
        %s167 = scalar_lea.vmem %s1, %s166
      $region28: #{_decoder_forward.3} parent=19 // pred_fallthru
        _
    $region20: #{_decoder_forward.3} parent=5 // pred_fallthru
      _
    %p168 = scmp.le.s32.totalorder 1, %s9
    %p169 = scmp.lt.s32.totalorder %s9, 9
    %p170 = pnand %p168, %p169
    %p171 = pneg %p170
    // Predicated region
    $region29: #{_decoder_forward.3} parent=5 // pred_check
      _
    $region30: #{_decoder_forward.3} parent=5 // pred_check_branch
      %173 = sbr.rel (%p170) target = $region32
    $region31: #{_decoder_forward.3} parent=5 // pred_region
      %s174 = ssub.s32 %s9, 1
      %s175 = smul.u32 16, %s19
      %p176 = scmp.lt.s32.totalorder %s18, 7
      %s177 = scalar_select %p176, %s18, 7
      %p178 = scmp.lt.s32.totalorder %s175, 15
      %s179 = scalar_select %p178, %s175, 15
      %s180 = smul.addr %s179, 16
      %s181 = smul.addr %s177, 256
      %s182 = sadd.s32 %s180, %s181
      %s183 = smul.addr %s182, 4
      %s184 = scalar_lea.vmem %s0, %s183
      %p185 = pneg %p49
      %p186 = pneg %p46
      %p187 = scmp.lt.s32.totalorder %s18, 7
      %s188 = scalar_select %p187, %s18, 7
      %s189 = smul.addr %s188, 256
      %s190 = smul.addr %s189, 4
      %s191 = scalar_lea.vmem %s1, %s190
      %p192 = pneg %p75
      %p193 = pneg %p72
      %p194 = pneg %p96
      %p195 = pneg %p93
      %p196 = pneg %p124
      %p197 = pneg %p121
      %s198 = smul.u32 16, %s19
      %p199 = scmp.lt.s32.totalorder %s18, 7
      %s200 = scalar_select %p199, %s18, 7
      %p201 = scmp.lt.s32.totalorder %s198, 15
      %s202 = scalar_select %p201, %s198, 15
      %s203 = smul.addr %s200, 16
      %s204 = sadd.s32 %s202, %s203
      %s205 = smul.addr %s204, 8
      %s206 = scalar_lea.vmem %s3, %s205
      %s207 = smul.u32 16, %s19
      %p208 = scmp.lt.s32.totalorder %s18, 7
      %s209 = scalar_select %p208, %s18, 7
      %p210 = scmp.lt.s32.totalorder %s207, 15
      %s211 = scalar_select %p210, %s207, 15
      %s212 = smul.addr %s211, 16
      %s213 = smul.addr %s209, 256
      %s214 = sadd.s32 %s212, %s213
      %s215 = smul.addr %s214, 4
      %s216 = scalar_lea.vmem %s0, %s215
      %s217 = smul.u32 16, %s19
      %p218 = scmp.lt.s32.totalorder %s18, 7
      %s219 = scalar_select %p218, %s18, 7
      %s220 = smul.addr %s219, 256
      %s221 = smul.addr %s220, 4
      %s222 = scalar_lea.vmem %s1, %s221
      %s223 = smul.u32 16, %s19
      %p224 = scmp.lt.s32.totalorder %s18, 7
      %s225 = scalar_select %p224, %s18, 7
      %p226 = scmp.lt.s32.totalorder %s223, 15
      %s227 = scalar_select %p226, %s223, 15
      %s228 = smul.addr %s225, 16
      %s229 = sadd.s32 %s227, %s228
      %s230 = smul.addr %s229, 8
      %s231 = scalar_lea.vmem %s3, %s230
      %s232 = smul.u32 16, %s19
      %v233 = vld [vmem:[%s216] sm:$0xff]
      %v234 = vld [vmem:[%s216 + $0x8] sm:$0xff]
      %v235 = vld [vmem:[%s216 + $0x10] sm:$0xff]
      %v236 = vld [vmem:[%s216 + $0x18] sm:$0xff]
      %v237 = vld [vmem:[%s216 + $0x20] sm:$0xff]
      %v238 = vld [vmem:[%s216 + $0x28] sm:$0xff]
      %v239 = vld [vmem:[%s216 + $0x30] sm:$0xff]
      %v240 = vld [vmem:[%s216 + $0x38] sm:$0xff]
      %v241 = vld [vmem:[%s216 + $0x40] sm:$0xff]
      %v242 = vld [vmem:[%s216 + $0x48] sm:$0xff]
      %v243 = vld [vmem:[%s216 + $0x50] sm:$0xff]
      %v244 = vld [vmem:[%s216 + $0x58] sm:$0xff]
      %v245 = vld [vmem:[%s216 + $0x60] sm:$0xff]
      %v246 = vld [vmem:[%s216 + $0x68] sm:$0xff]
      %v247 = vld [vmem:[%s216 + $0x70] sm:$0xff]
      %v248 = vld [vmem:[%s216 + $0x78] sm:$0xff]
      %v249 = vld [vmem:[%s216 + $0x80] sm:$0xff]
      %v250 = vld [vmem:[%s216 + $0x88] sm:$0xff]
      %v251 = vld [vmem:[%s216 + $0x90] sm:$0xff]
      %v252 = vld [vmem:[%s216 + $0x98] sm:$0xff]
      %v253 = vld [vmem:[%s216 + $0xa0] sm:$0xff]
      %v254 = vld [vmem:[%s216 + $0xa8] sm:$0xff]
      %v255 = vld [vmem:[%s216 + $0xb0] sm:$0xff]
      %v256 = vld [vmem:[%s216 + $0xb8] sm:$0xff]
      %v257 = vld [vmem:[%s216 + $0xc0] sm:$0xff]
      %v258 = vld [vmem:[%s216 + $0xc8] sm:$0xff]
      %v259 = vld [vmem:[%s216 + $0xd0] sm:$0xff]
      %v260 = vld [vmem:[%s216 + $0xd8] sm:$0xff]
      %v261 = vld [vmem:[%s216 + $0xe0] sm:$0xff]
      %v262 = vld [vmem:[%s216 + $0xe8] sm:$0xff]
      %v263 = vld [vmem:[%s216 + $0xf0] sm:$0xff]
      %v264 = vld [vmem:[%s216 + $0xf8] sm:$0xff]
      %v265 = vld [vmem:[%s216 + $0x100] sm:$0xff]
      %v266 = vld [vmem:[%s216 + $0x108] sm:$0xff]
      %v267 = vld [vmem:[%s216 + $0x110] sm:$0xff]
      %v268 = vld [vmem:[%s216 + $0x118] sm:$0xff]
      %v269 = vld [vmem:[%s216 + $0x120] sm:$0xff]
      %v270 = vld [vmem:[%s216 + $0x128] sm:$0xff]
      %v271 = vld [vmem:[%s216 + $0x130] sm:$0xff]
      %v272 = vld [vmem:[%s216 + $0x138] sm:$0xff]
      %v273 = vld [vmem:[%s216 + $0x140] sm:$0xff]
      %v274 = vld [vmem:[%s216 + $0x148] sm:$0xff]
      %v275 = vld [vmem:[%s216 + $0x150] sm:$0xff]
      %v276 = vld [vmem:[%s216 + $0x158] sm:$0xff]
      %v277 = vld [vmem:[%s216 + $0x160] sm:$0xff]
      %v278 = vld [vmem:[%s216 + $0x168] sm:$0xff]
      %v279 = vld [vmem:[%s216 + $0x170] sm:$0xff]
      %v280 = vld [vmem:[%s216 + $0x178] sm:$0xff]
      %v281 = vld [vmem:[%s216 + $0x180] sm:$0xff]
      %v282 = vld [vmem:[%s216 + $0x188] sm:$0xff]
      %v283 = vld [vmem:[%s216 + $0x190] sm:$0xff]
      %v284 = vld [vmem:[%s216 + $0x198] sm:$0xff]
      %v285 = vld [vmem:[%s216 + $0x1a0] sm:$0xff]
      %v286 = vld [vmem:[%s216 + $0x1a8] sm:$0xff]
      %v287 = vld [vmem:[%s216 + $0x1b0] sm:$0xff]
      %v288 = vld [vmem:[%s216 + $0x1b8] sm:$0xff]
      %v289 = vld [vmem:[%s216 + $0x1c0] sm:$0xff]
      %v290 = vld [vmem:[%s216 + $0x1c8] sm:$0xff]
      %v291 = vld [vmem:[%s216 + $0x1d0] sm:$0xff]
      %v292 = vld [vmem:[%s216 + $0x1d8] sm:$0xff]
      %v293 = vld [vmem:[%s216 + $0x1e0] sm:$0xff]
      %v294 = vld [vmem:[%s216 + $0x1e8] sm:$0xff]
      %v295 = vld [vmem:[%s216 + $0x1f0] sm:$0xff]
      %v296 = vld [vmem:[%s216 + $0x1f8] sm:$0xff]
      %v297 = vld [vmem:[%s216 + $0x200] sm:$0xff]
      %v298 = vld [vmem:[%s216 + $0x208] sm:$0xff]
      %v299 = vld [vmem:[%s216 + $0x210] sm:$0xff]
      %v300 = vld [vmem:[%s216 + $0x218] sm:$0xff]
      %v301 = vld [vmem:[%s216 + $0x220] sm:$0xff]
      %v302 = vld [vmem:[%s216 + $0x228] sm:$0xff]
      %v303 = vld [vmem:[%s216 + $0x230] sm:$0xff]
      %v304 = vld [vmem:[%s216 + $0x238] sm:$0xff]
      %v305 = vld [vmem:[%s216 + $0x240] sm:$0xff]
      %v306 = vld [vmem:[%s216 + $0x248] sm:$0xff]
      %v307 = vld [vmem:[%s216 + $0x250] sm:$0xff]
      %v308 = vld [vmem:[%s216 + $0x258] sm:$0xff]
      %v309 = vld [vmem:[%s216 + $0x260] sm:$0xff]
      %v310 = vld [vmem:[%s216 + $0x268] sm:$0xff]
      %v311 = vld [vmem:[%s216 + $0x270] sm:$0xff]
      %v312 = vld [vmem:[%s216 + $0x278] sm:$0xff]
      %v313 = vld [vmem:[%s216 + $0x280] sm:$0xff]
      %v314 = vld [vmem:[%s216 + $0x288] sm:$0xff]
      %v315 = vld [vmem:[%s216 + $0x290] sm:$0xff]
      %v316 = vld [vmem:[%s216 + $0x298] sm:$0xff]
      %v317 = vld [vmem:[%s216 + $0x2a0] sm:$0xff]
      %v318 = vld [vmem:[%s216 + $0x2a8] sm:$0xff]
      %v319 = vld [vmem:[%s216 + $0x2b0] sm:$0xff]
      %v320 = vld [vmem:[%s216 + $0x2b8] sm:$0xff]
      %v321 = vld [vmem:[%s216 + $0x2c0] sm:$0xff]
      %v322 = vld [vmem:[%s216 + $0x2c8] sm:$0xff]
      %v323 = vld [vmem:[%s216 + $0x2d0] sm:$0xff]
      %v324 = vld [vmem:[%s216 + $0x2d8] sm:$0xff]
      %v325 = vld [vmem:[%s216 + $0x2e0] sm:$0xff]
      %v326 = vld [vmem:[%s216 + $0x2e8] sm:$0xff]
      %v327 = vld [vmem:[%s216 + $0x2f0] sm:$0xff]
      %v328 = vld [vmem:[%s216 + $0x2f8] sm:$0xff]
      %v329 = vld [vmem:[%s216 + $0x300] sm:$0xff]
      %v330 = vld [vmem:[%s216 + $0x308] sm:$0xff]
      %v331 = vld [vmem:[%s216 + $0x310] sm:$0xff]
      %v332 = vld [vmem:[%s216 + $0x318] sm:$0xff]
      %v333 = vld [vmem:[%s216 + $0x320] sm:$0xff]
      %v334 = vld [vmem:[%s216 + $0x328] sm:$0xff]
      %v335 = vld [vmem:[%s216 + $0x330] sm:$0xff]
      %v336 = vld [vmem:[%s216 + $0x338] sm:$0xff]
      %v337 = vld [vmem:[%s216 + $0x340] sm:$0xff]
      %v338 = vld [vmem:[%s216 + $0x348] sm:$0xff]
      %v339 = vld [vmem:[%s216 + $0x350] sm:$0xff]
      %v340 = vld [vmem:[%s216 + $0x358] sm:$0xff]
      %v341 = vld [vmem:[%s216 + $0x360] sm:$0xff]
      %v342 = vld [vmem:[%s216 + $0x368] sm:$0xff]
      %v343 = vld [vmem:[%s216 + $0x370] sm:$0xff]
      %v344 = vld [vmem:[%s216 + $0x378] sm:$0xff]
      %v345 = vld [vmem:[%s216 + $0x380] sm:$0xff]
      %v346 = vld [vmem:[%s216 + $0x388] sm:$0xff]
      %v347 = vld [vmem:[%s216 + $0x390] sm:$0xff]
      %v348 = vld [vmem:[%s216 + $0x398] sm:$0xff]
      %v349 = vld [vmem:[%s216 + $0x3a0] sm:$0xff]
      %v350 = vld [vmem:[%s216 + $0x3a8] sm:$0xff]
      %v351 = vld [vmem:[%s216 + $0x3b0] sm:$0xff]
      %v352 = vld [vmem:[%s216 + $0x3b8] sm:$0xff]
      %v353 = vld [vmem:[%s216 + $0x3c0] sm:$0xff]
      %v354 = vld [vmem:[%s216 + $0x3c8] sm:$0xff]
      %v355 = vld [vmem:[%s216 + $0x3d0] sm:$0xff]
      %v356 = vld [vmem:[%s216 + $0x3d8] sm:$0xff]
      %v357 = vld [vmem:[%s216 + $0x3e0] sm:$0xff]
      %v358 = vld [vmem:[%s216 + $0x3e8] sm:$0xff]
      %v359 = vld [vmem:[%s216 + $0x3f0] sm:$0xff]
      %v360 = vld [vmem:[%s216 + $0x3f8] sm:$0xff]
      %v361 = vld [vmem:[%s222] sm:$0xf]
      %v362 = vld [vmem:[%s222 + $0x4] sm:$0xf]
      %v363 = vld [vmem:[%s222 + $0x8] sm:$0xf]
      %v364 = vld [vmem:[%s222 + $0xc] sm:$0xf]
      %v365 = vld [vmem:[%s222 + $0x10] sm:$0xf]
      %v366 = vld [vmem:[%s222 + $0x14] sm:$0xf]
      %v367 = vld [vmem:[%s222 + $0x18] sm:$0xf]
      %v368 = vld [vmem:[%s222 + $0x1c] sm:$0xf]
      %v369 = vld [vmem:[%s222 + $0x20] sm:$0xf]
      %v370 = vld [vmem:[%s222 + $0x24] sm:$0xf]
      %v371 = vld [vmem:[%s222 + $0x28] sm:$0xf]
      %v372 = vld [vmem:[%s222 + $0x2c] sm:$0xf]
      %v373 = vld [vmem:[%s222 + $0x30] sm:$0xf]
      %v374 = vld [vmem:[%s222 + $0x34] sm:$0xf]
      %v375 = vld [vmem:[%s222 + $0x38] sm:$0xf]
      %v376 = vld [vmem:[%s222 + $0x3c] sm:$0xf]
      %v377 = vld [vmem:[%s222 + $0x40] sm:$0xf]
      %v378 = vld [vmem:[%s222 + $0x44] sm:$0xf]
      %v379 = vld [vmem:[%s222 + $0x48] sm:$0xf]
      %v380 = vld [vmem:[%s222 + $0x4c] sm:$0xf]
      %v381 = vld [vmem:[%s222 + $0x50] sm:$0xf]
      %v382 = vld [vmem:[%s222 + $0x54] sm:$0xf]
      %v383 = vld [vmem:[%s222 + $0x58] sm:$0xf]
      %v384 = vld [vmem:[%s222 + $0x5c] sm:$0xf]
      %v385 = vld [vmem:[%s222 + $0x60] sm:$0xf]
      %v386 = vld [vmem:[%s222 + $0x64] sm:$0xf]
      %v387 = vld [vmem:[%s222 + $0x68] sm:$0xf]
      %v388 = vld [vmem:[%s222 + $0x6c] sm:$0xf]
      %v389 = vld [vmem:[%s222 + $0x70] sm:$0xf]
      %v390 = vld [vmem:[%s222 + $0x74] sm:$0xf]
      %v391 = vld [vmem:[%s222 + $0x78] sm:$0xf]
      %v392 = vld [vmem:[%s222 + $0x7c] sm:$0xf]
      %v393 = vld [vmem:[%s222 + $0x80] sm:$0xf]
      %v394 = vld [vmem:[%s222 + $0x84] sm:$0xf]
      %v395 = vld [vmem:[%s222 + $0x88] sm:$0xf]
      %v396 = vld [vmem:[%s222 + $0x8c] sm:$0xf]
      %v397 = vld [vmem:[%s222 + $0x90] sm:$0xf]
      %v398 = vld [vmem:[%s222 + $0x94] sm:$0xf]
      %v399 = vld [vmem:[%s222 + $0x98] sm:$0xf]
      %v400 = vld [vmem:[%s222 + $0x9c] sm:$0xf]
      %v401 = vld [vmem:[%s222 + $0xa0] sm:$0xf]
      %v402 = vld [vmem:[%s222 + $0xa4] sm:$0xf]
      %v403 = vld [vmem:[%s222 + $0xa8] sm:$0xf]
      %v404 = vld [vmem:[%s222 + $0xac] sm:$0xf]
      %v405 = vld [vmem:[%s222 + $0xb0] sm:$0xf]
      %v406 = vld [vmem:[%s222 + $0xb4] sm:$0xf]
      %v407 = vld [vmem:[%s222 + $0xb8] sm:$0xf]
      %v408 = vld [vmem:[%s222 + $0xbc] sm:$0xf]
      %v409 = vld [vmem:[%s222 + $0xc0] sm:$0xf]
      %v410 = vld [vmem:[%s222 + $0xc4] sm:$0xf]
      %v411 = vld [vmem:[%s222 + $0xc8] sm:$0xf]
      %v412 = vld [vmem:[%s222 + $0xcc] sm:$0xf]
      %v413 = vld [vmem:[%s222 + $0xd0] sm:$0xf]
      %v414 = vld [vmem:[%s222 + $0xd4] sm:$0xf]
      %v415 = vld [vmem:[%s222 + $0xd8] sm:$0xf]
      %v416 = vld [vmem:[%s222 + $0xdc] sm:$0xf]
      %v417 = vld [vmem:[%s222 + $0xe0] sm:$0xf]
      %v418 = vld [vmem:[%s222 + $0xe4] sm:$0xf]
      %v419 = vld [vmem:[%s222 + $0xe8] sm:$0xf]
      %v420 = vld [vmem:[%s222 + $0xec] sm:$0xf]
      %v421 = vld [vmem:[%s222 + $0xf0] sm:$0xf]
      %v422 = vld [vmem:[%s222 + $0xf4] sm:$0xf]
      %v423 = vld [vmem:[%s222 + $0xf8] sm:$0xf]
      %v424 = vld [vmem:[%s222 + $0xfc] sm:$0xf]
      %v425 = vld [vmem:[%s222 + $0x100] sm:$0xf]
      %v426 = vld [vmem:[%s222 + $0x104] sm:$0xf]
      %v427 = vld [vmem:[%s222 + $0x108] sm:$0xf]
      %v428 = vld [vmem:[%s222 + $0x10c] sm:$0xf]
      %v429 = vld [vmem:[%s222 + $0x110] sm:$0xf]
      %v430 = vld [vmem:[%s222 + $0x114] sm:$0xf]
      %v431 = vld [vmem:[%s222 + $0x118] sm:$0xf]
      %v432 = vld [vmem:[%s222 + $0x11c] sm:$0xf]
      %v433 = vld [vmem:[%s222 + $0x120] sm:$0xf]
      %v434 = vld [vmem:[%s222 + $0x124] sm:$0xf]
      %v435 = vld [vmem:[%s222 + $0x128] sm:$0xf]
      %v436 = vld [vmem:[%s222 + $0x12c] sm:$0xf]
      %v437 = vld [vmem:[%s222 + $0x130] sm:$0xf]
      %v438 = vld [vmem:[%s222 + $0x134] sm:$0xf]
      %v439 = vld [vmem:[%s222 + $0x138] sm:$0xf]
      %v440 = vld [vmem:[%s222 + $0x13c] sm:$0xf]
      %v441 = vld [vmem:[%s222 + $0x140] sm:$0xf]
      %v442 = vld [vmem:[%s222 + $0x144] sm:$0xf]
      %v443 = vld [vmem:[%s222 + $0x148] sm:$0xf]
      %v444 = vld [vmem:[%s222 + $0x14c] sm:$0xf]
      %v445 = vld [vmem:[%s222 + $0x150] sm:$0xf]
      %v446 = vld [vmem:[%s222 + $0x154] sm:$0xf]
      %v447 = vld [vmem:[%s222 + $0x158] sm:$0xf]
      %v448 = vld [vmem:[%s222 + $0x15c] sm:$0xf]
      %v449 = vld [vmem:[%s222 + $0x160] sm:$0xf]
      %v450 = vld [vmem:[%s222 + $0x164] sm:$0xf]
      %v451 = vld [vmem:[%s222 + $0x168] sm:$0xf]
      %v452 = vld [vmem:[%s222 + $0x16c] sm:$0xf]
      %v453 = vld [vmem:[%s222 + $0x170] sm:$0xf]
      %v454 = vld [vmem:[%s222 + $0x174] sm:$0xf]
      %v455 = vld [vmem:[%s222 + $0x178] sm:$0xf]
      %v456 = vld [vmem:[%s222 + $0x17c] sm:$0xf]
      %v457 = vld [vmem:[%s222 + $0x180] sm:$0xf]
      %v458 = vld [vmem:[%s222 + $0x184] sm:$0xf]
      %v459 = vld [vmem:[%s222 + $0x188] sm:$0xf]
      %v460 = vld [vmem:[%s222 + $0x18c] sm:$0xf]
      %v461 = vld [vmem:[%s222 + $0x190] sm:$0xf]
      %v462 = vld [vmem:[%s222 + $0x194] sm:$0xf]
      %v463 = vld [vmem:[%s222 + $0x198] sm:$0xf]
      %v464 = vld [vmem:[%s222 + $0x19c] sm:$0xf]
      %v465 = vld [vmem:[%s222 + $0x1a0] sm:$0xf]
      %v466 = vld [vmem:[%s222 + $0x1a4] sm:$0xf]
      %v467 = vld [vmem:[%s222 + $0x1a8] sm:$0xf]
      %v468 = vld [vmem:[%s222 + $0x1ac] sm:$0xf]
      %v469 = vld [vmem:[%s222 + $0x1b0] sm:$0xf]
      %v470 = vld [vmem:[%s222 + $0x1b4] sm:$0xf]
      %v471 = vld [vmem:[%s222 + $0x1b8] sm:$0xf]
      %v472 = vld [vmem:[%s222 + $0x1bc] sm:$0xf]
      %v473 = vld [vmem:[%s222 + $0x1c0] sm:$0xf]
      %v474 = vld [vmem:[%s222 + $0x1c4] sm:$0xf]
      %v475 = vld [vmem:[%s222 + $0x1c8] sm:$0xf]
      %v476 = vld [vmem:[%s222 + $0x1cc] sm:$0xf]
      %v477 = vld [vmem:[%s222 + $0x1d0] sm:$0xf]
      %v478 = vld [vmem:[%s222 + $0x1d4] sm:$0xf]
      %v479 = vld [vmem:[%s222 + $0x1d8] sm:$0xf]
      %v480 = vld [vmem:[%s222 + $0x1dc] sm:$0xf]
      %v481 = vld [vmem:[%s222 + $0x1e0] sm:$0xf]
      %v482 = vld [vmem:[%s222 + $0x1e4] sm:$0xf]
      %v483 = vld [vmem:[%s222 + $0x1e8] sm:$0xf]
      %v484 = vld [vmem:[%s222 + $0x1ec] sm:$0xf]
      %v485 = vld [vmem:[%s222 + $0x1f0] sm:$0xf]
      %v486 = vld [vmem:[%s222 + $0x1f4] sm:$0xf]
      %v487 = vld [vmem:[%s222 + $0x1f8] sm:$0xf]
      %v488 = vld [vmem:[%s222 + $0x1fc] sm:$0xf]
      %v489 = vld [vmem:[%s222 + $0x200] sm:$0xf]
      %v490 = vld [vmem:[%s222 + $0x204] sm:$0xf]
      %v491 = vld [vmem:[%s222 + $0x208] sm:$0xf]
      %v492 = vld [vmem:[%s222 + $0x20c] sm:$0xf]
      %v493 = vld [vmem:[%s222 + $0x210] sm:$0xf]
      %v494 = vld [vmem:[%s222 + $0x214] sm:$0xf]
      %v495 = vld [vmem:[%s222 + $0x218] sm:$0xf]
      %v496 = vld [vmem:[%s222 + $0x21c] sm:$0xf]
      %v497 = vld [vmem:[%s222 + $0x220] sm:$0xf]
      %v498 = vld [vmem:[%s222 + $0x224] sm:$0xf]
      %v499 = vld [vmem:[%s222 + $0x228] sm:$0xf]
      %v500 = vld [vmem:[%s222 + $0x22c] sm:$0xf]
      %v501 = vld [vmem:[%s222 + $0x230] sm:$0xf]
      %v502 = vld [vmem:[%s222 + $0x234] sm:$0xf]
      %v503 = vld [vmem:[%s222 + $0x238] sm:$0xf]
      %v504 = vld [vmem:[%s222 + $0x23c] sm:$0xf]
      %v505 = vld [vmem:[%s222 + $0x240] sm:$0xf]
      %v506 = vld [vmem:[%s222 + $0x244] sm:$0xf]
      %v507 = vld [vmem:[%s222 + $0x248] sm:$0xf]
      %v508 = vld [vmem:[%s222 + $0x24c] sm:$0xf]
      %v509 = vld [vmem:[%s222 + $0x250] sm:$0xf]
      %v510 = vld [vmem:[%s222 + $0x254] sm:$0xf]
      %v511 = vld [vmem:[%s222 + $0x258] sm:$0xf]
      %v512 = vld [vmem:[%s222 + $0x25c] sm:$0xf]
      %v513 = vld [vmem:[%s222 + $0x260] sm:$0xf]
      %v514 = vld [vmem:[%s222 + $0x264] sm:$0xf]
      %v515 = vld [vmem:[%s222 + $0x268] sm:$0xf]
      %v516 = vld [vmem:[%s222 + $0x26c] sm:$0xf]
      %v517 = vld [vmem:[%s222 + $0x270] sm:$0xf]
      %v518 = vld [vmem:[%s222 + $0x274] sm:$0xf]
      %v519 = vld [vmem:[%s222 + $0x278] sm:$0xf]
      %v520 = vld [vmem:[%s222 + $0x27c] sm:$0xf]
      %v521 = vld [vmem:[%s222 + $0x280] sm:$0xf]
      %v522 = vld [vmem:[%s222 + $0x284] sm:$0xf]
      %v523 = vld [vmem:[%s222 + $0x288] sm:$0xf]
      %v524 = vld [vmem:[%s222 + $0x28c] sm:$0xf]
      %v525 = vld [vmem:[%s222 + $0x290] sm:$0xf]
      %v526 = vld [vmem:[%s222 + $0x294] sm:$0xf]
      %v527 = vld [vmem:[%s222 + $0x298] sm:$0xf]
      %v528 = vld [vmem:[%s222 + $0x29c] sm:$0xf]
      %v529 = vld [vmem:[%s222 + $0x2a0] sm:$0xf]
      %v530 = vld [vmem:[%s222 + $0x2a4] sm:$0xf]
      %v531 = vld [vmem:[%s222 + $0x2a8] sm:$0xf]
      %v532 = vld [vmem:[%s222 + $0x2ac] sm:$0xf]
      %v533 = vld [vmem:[%s222 + $0x2b0] sm:$0xf]
      %v534 = vld [vmem:[%s222 + $0x2b4] sm:$0xf]
      %v535 = vld [vmem:[%s222 + $0x2b8] sm:$0xf]
      %v536 = vld [vmem:[%s222 + $0x2bc] sm:$0xf]
      %v537 = vld [vmem:[%s222 + $0x2c0] sm:$0xf]
      %v538 = vld [vmem:[%s222 + $0x2c4] sm:$0xf]
      %v539 = vld [vmem:[%s222 + $0x2c8] sm:$0xf]
      %v540 = vld [vmem:[%s222 + $0x2cc] sm:$0xf]
      %v541 = vld [vmem:[%s222 + $0x2d0] sm:$0xf]
      %v542 = vld [vmem:[%s222 + $0x2d4] sm:$0xf]
      %v543 = vld [vmem:[%s222 + $0x2d8] sm:$0xf]
      %v544 = vld [vmem:[%s222 + $0x2dc] sm:$0xf]
      %v545 = vld [vmem:[%s222 + $0x2e0] sm:$0xf]
      %v546 = vld [vmem:[%s222 + $0x2e4] sm:$0xf]
      %v547 = vld [vmem:[%s222 + $0x2e8] sm:$0xf]
      %v548 = vld [vmem:[%s222 + $0x2ec] sm:$0xf]
      %v549 = vld [vmem:[%s222 + $0x2f0] sm:$0xf]
      %v550 = vld [vmem:[%s222 + $0x2f4] sm:$0xf]
      %v551 = vld [vmem:[%s222 + $0x2f8] sm:$0xf]
      %v552 = vld [vmem:[%s222 + $0x2fc] sm:$0xf]
      %v553 = vld [vmem:[%s222 + $0x300] sm:$0xf]
      %v554 = vld [vmem:[%s222 + $0x304] sm:$0xf]
      %v555 = vld [vmem:[%s222 + $0x308] sm:$0xf]
      %v556 = vld [vmem:[%s222 + $0x30c] sm:$0xf]
      %v557 = vld [vmem:[%s222 + $0x310] sm:$0xf]
      %v558 = vld [vmem:[%s222 + $0x314] sm:$0xf]
      %v559 = vld [vmem:[%s222 + $0x318] sm:$0xf]
      %v560 = vld [vmem:[%s222 + $0x31c] sm:$0xf]
      %v561 = vld [vmem:[%s222 + $0x320] sm:$0xf]
      %v562 = vld [vmem:[%s222 + $0x324] sm:$0xf]
      %v563 = vld [vmem:[%s222 + $0x328] sm:$0xf]
      %v564 = vld [vmem:[%s222 + $0x32c] sm:$0xf]
      %v565 = vld [vmem:[%s222 + $0x330] sm:$0xf]
      %v566 = vld [vmem:[%s222 + $0x334] sm:$0xf]
      %v567 = vld [vmem:[%s222 + $0x338] sm:$0xf]
      %v568 = vld [vmem:[%s222 + $0x33c] sm:$0xf]
      %v569 = vld [vmem:[%s222 + $0x340] sm:$0xf]
      %v570 = vld [vmem:[%s222 + $0x344] sm:$0xf]
      %v571 = vld [vmem:[%s222 + $0x348] sm:$0xf]
      %v572 = vld [vmem:[%s222 + $0x34c] sm:$0xf]
      %v573 = vld [vmem:[%s222 + $0x350] sm:$0xf]
      %v574 = vld [vmem:[%s222 + $0x354] sm:$0xf]
      %v575 = vld [vmem:[%s222 + $0x358] sm:$0xf]
      %v576 = vld [vmem:[%s222 + $0x35c] sm:$0xf]
      %v577 = vld [vmem:[%s222 + $0x360] sm:$0xf]
      %v578 = vld [vmem:[%s222 + $0x364] sm:$0xf]
      %v579 = vld [vmem:[%s222 + $0x368] sm:$0xf]
      %v580 = vld [vmem:[%s222 + $0x36c] sm:$0xf]
      %v581 = vld [vmem:[%s222 + $0x370] sm:$0xf]
      %v582 = vld [vmem:[%s222 + $0x374] sm:$0xf]
      %v583 = vld [vmem:[%s222 + $0x378] sm:$0xf]
      %v584 = vld [vmem:[%s222 + $0x37c] sm:$0xf]
      %v585 = vld [vmem:[%s222 + $0x380] sm:$0xf]
      %v586 = vld [vmem:[%s222 + $0x384] sm:$0xf]
      %v587 = vld [vmem:[%s222 + $0x388] sm:$0xf]
      %v588 = vld [vmem:[%s222 + $0x38c] sm:$0xf]
      %v589 = vld [vmem:[%s222 + $0x390] sm:$0xf]
      %v590 = vld [vmem:[%s222 + $0x394] sm:$0xf]
      %v591 = vld [vmem:[%s222 + $0x398] sm:$0xf]
      %v592 = vld [vmem:[%s222 + $0x39c] sm:$0xf]
      %v593 = vld [vmem:[%s222 + $0x3a0] sm:$0xf]
      %v594 = vld [vmem:[%s222 + $0x3a4] sm:$0xf]
      %v595 = vld [vmem:[%s222 + $0x3a8] sm:$0xf]
      %v596 = vld [vmem:[%s222 + $0x3ac] sm:$0xf]
      %v597 = vld [vmem:[%s222 + $0x3b0] sm:$0xf]
      %v598 = vld [vmem:[%s222 + $0x3b4] sm:$0xf]
      %v599 = vld [vmem:[%s222 + $0x3b8] sm:$0xf]
      %v600 = vld [vmem:[%s222 + $0x3bc] sm:$0xf]
      %v601 = vld [vmem:[%s222 + $0x3c0] sm:$0xf]
      %v602 = vld [vmem:[%s222 + $0x3c4] sm:$0xf]
      %v603 = vld [vmem:[%s222 + $0x3c8] sm:$0xf]
      %v604 = vld [vmem:[%s222 + $0x3cc] sm:$0xf]
      %v605 = vld [vmem:[%s222 + $0x3d0] sm:$0xf]
      %v606 = vld [vmem:[%s222 + $0x3d4] sm:$0xf]
      %v607 = vld [vmem:[%s222 + $0x3d8] sm:$0xf]
      %v608 = vld [vmem:[%s222 + $0x3dc] sm:$0xf]
      %v609 = vld [vmem:[%s222 + $0x3e0] sm:$0xf]
      %v610 = vld [vmem:[%s222 + $0x3e4] sm:$0xf]
      %v611 = vld [vmem:[%s222 + $0x3e8] sm:$0xf]
      %v612 = vld [vmem:[%s222 + $0x3ec] sm:$0xf]
      %v613 = vld [vmem:[%s222 + $0x3f0] sm:$0xf]
      %v614 = vld [vmem:[%s222 + $0x3f4] sm:$0xf]
      %v615 = vld [vmem:[%s222 + $0x3f8] sm:$0xf]
      %v616 = vld [vmem:[%s222 + $0x3fc] sm:$0xf]
      %v617 = vld [vmem:[%s2] sm:$0x1]
      %v619 = vperm.slane %v617, 0
      %v749 = vunpack.c.l.b16 %v233
      %v750 = vunpack.c.h.b16 %v233
      %v751 = vunpack.c.l.b16 %v234
      %v752 = vunpack.c.h.b16 %v234
      %v753 = vunpack.c.l.b16 %v235
      %v754 = vunpack.c.h.b16 %v235
      %v755 = vunpack.c.l.b16 %v236
      %v756 = vunpack.c.h.b16 %v236
      %v757 = vunpack.c.l.b16 %v237
      %v758 = vunpack.c.h.b16 %v237
      %v759 = vunpack.c.l.b16 %v238
      %v760 = vunpack.c.h.b16 %v238
      %v761 = vunpack.c.l.b16 %v239
      %v762 = vunpack.c.h.b16 %v239
      %v763 = vunpack.c.l.b16 %v240
      %v764 = vunpack.c.h.b16 %v240
      %v765 = vunpack.c.l.b16 %v241
      %v766 = vunpack.c.h.b16 %v241
      %v767 = vunpack.c.l.b16 %v242
      %v768 = vunpack.c.h.b16 %v242
      %v769 = vunpack.c.l.b16 %v243
      %v770 = vunpack.c.h.b16 %v243
      %v771 = vunpack.c.l.b16 %v244
      %v772 = vunpack.c.h.b16 %v244
      %v773 = vunpack.c.l.b16 %v245
      %v774 = vunpack.c.h.b16 %v245
      %v775 = vunpack.c.l.b16 %v246
      %v776 = vunpack.c.h.b16 %v246
      %v777 = vunpack.c.l.b16 %v247
      %v778 = vunpack.c.h.b16 %v247
      %v779 = vunpack.c.l.b16 %v248
      %v780 = vunpack.c.h.b16 %v248
      %v781 = vunpack.c.l.b16 %v249
      %v782 = vunpack.c.h.b16 %v249
      %v783 = vunpack.c.l.b16 %v250
      %v784 = vunpack.c.h.b16 %v250
      %v785 = vunpack.c.l.b16 %v251
      %v786 = vunpack.c.h.b16 %v251
      %v787 = vunpack.c.l.b16 %v252
      %v788 = vunpack.c.h.b16 %v252
      %v789 = vunpack.c.l.b16 %v253
      %v790 = vunpack.c.h.b16 %v253
      %v791 = vunpack.c.l.b16 %v254
      %v792 = vunpack.c.h.b16 %v254
      %v793 = vunpack.c.l.b16 %v255
      %v794 = vunpack.c.h.b16 %v255
      %v795 = vunpack.c.l.b16 %v256
      %v796 = vunpack.c.h.b16 %v256
      %v797 = vunpack.c.l.b16 %v257
      %v798 = vunpack.c.h.b16 %v257
      %v799 = vunpack.c.l.b16 %v258
      %v800 = vunpack.c.h.b16 %v258
      %v801 = vunpack.c.l.b16 %v259
      %v802 = vunpack.c.h.b16 %v259
      %v803 = vunpack.c.l.b16 %v260
      %v804 = vunpack.c.h.b16 %v260
      %v805 = vunpack.c.l.b16 %v261
      %v806 = vunpack.c.h.b16 %v261
      %v807 = vunpack.c.l.b16 %v262
      %v808 = vunpack.c.h.b16 %v262
      %v809 = vunpack.c.l.b16 %v263
      %v810 = vunpack.c.h.b16 %v263
      %v811 = vunpack.c.l.b16 %v264
      %v812 = vunpack.c.h.b16 %v264
      %v813 = vunpack.c.l.b16 %v265
      %v814 = vunpack.c.h.b16 %v265
      %v815 = vunpack.c.l.b16 %v266
      %v816 = vunpack.c.h.b16 %v266
      %v817 = vunpack.c.l.b16 %v267
      %v818 = vunpack.c.h.b16 %v267
      %v819 = vunpack.c.l.b16 %v268
      %v820 = vunpack.c.h.b16 %v268
      %v821 = vunpack.c.l.b16 %v269
      %v822 = vunpack.c.h.b16 %v269
      %v823 = vunpack.c.l.b16 %v270
      %v824 = vunpack.c.h.b16 %v270
      %v825 = vunpack.c.l.b16 %v271
      %v826 = vunpack.c.h.b16 %v271
      %v827 = vunpack.c.l.b16 %v272
      %v828 = vunpack.c.h.b16 %v272
      %v829 = vunpack.c.l.b16 %v273
      %v830 = vunpack.c.h.b16 %v273
      %v831 = vunpack.c.l.b16 %v274
      %v832 = vunpack.c.h.b16 %v274
      %v833 = vunpack.c.l.b16 %v275
      %v834 = vunpack.c.h.b16 %v275
      %v835 = vunpack.c.l.b16 %v276
      %v836 = vunpack.c.h.b16 %v276
      %v837 = vunpack.c.l.b16 %v277
      %v838 = vunpack.c.h.b16 %v277
      %v839 = vunpack.c.l.b16 %v278
      %v840 = vunpack.c.h.b16 %v278
      %v841 = vunpack.c.l.b16 %v279
      %v842 = vunpack.c.h.b16 %v279
      %v843 = vunpack.c.l.b16 %v280
      %v844 = vunpack.c.h.b16 %v280
      %v845 = vunpack.c.l.b16 %v281
      %v846 = vunpack.c.h.b16 %v281
      %v847 = vunpack.c.l.b16 %v282
      %v848 = vunpack.c.h.b16 %v282
      %v849 = vunpack.c.l.b16 %v283
      %v850 = vunpack.c.h.b16 %v283
      %v851 = vunpack.c.l.b16 %v284
      %v852 = vunpack.c.h.b16 %v284
      %v853 = vunpack.c.l.b16 %v285
      %v854 = vunpack.c.h.b16 %v285
      %v855 = vunpack.c.l.b16 %v286
      %v856 = vunpack.c.h.b16 %v286
      %v857 = vunpack.c.l.b16 %v287
      %v858 = vunpack.c.h.b16 %v287
      %v859 = vunpack.c.l.b16 %v288
      %v860 = vunpack.c.h.b16 %v288
      %v861 = vunpack.c.l.b16 %v289
      %v862 = vunpack.c.h.b16 %v289
      %v863 = vunpack.c.l.b16 %v290
      %v864 = vunpack.c.h.b16 %v290
      %v865 = vunpack.c.l.b16 %v291
      %v866 = vunpack.c.h.b16 %v291
      %v867 = vunpack.c.l.b16 %v292
      %v868 = vunpack.c.h.b16 %v292
      %v869 = vunpack.c.l.b16 %v293
      %v870 = vunpack.c.h.b16 %v293
      %v871 = vunpack.c.l.b16 %v294
      %v872 = vunpack.c.h.b16 %v294
      %v873 = vunpack.c.l.b16 %v295
      %v874 = vunpack.c.h.b16 %v295
      %v875 = vunpack.c.l.b16 %v296
      %v876 = vunpack.c.h.b16 %v296
      %v877 = vunpack.c.l.b16 %v297
      %v878 = vunpack.c.h.b16 %v297
      %v879 = vunpack.c.l.b16 %v298
      %v880 = vunpack.c.h.b16 %v298
      %v881 = vunpack.c.l.b16 %v299
      %v882 = vunpack.c.h.b16 %v299
      %v883 = vunpack.c.l.b16 %v300
      %v884 = vunpack.c.h.b16 %v300
      %v885 = vunpack.c.l.b16 %v301
      %v886 = vunpack.c.h.b16 %v301
      %v887 = vunpack.c.l.b16 %v302
      %v888 = vunpack.c.h.b16 %v302
      %v889 = vunpack.c.l.b16 %v303
      %v890 = vunpack.c.h.b16 %v303
      %v891 = vunpack.c.l.b16 %v304
      %v892 = vunpack.c.h.b16 %v304
      %v893 = vunpack.c.l.b16 %v305
      %v894 = vunpack.c.h.b16 %v305
      %v895 = vunpack.c.l.b16 %v306
      %v896 = vunpack.c.h.b16 %v306
      %v897 = vunpack.c.l.b16 %v307
      %v898 = vunpack.c.h.b16 %v307
      %v899 = vunpack.c.l.b16 %v308
      %v900 = vunpack.c.h.b16 %v308
      %v901 = vunpack.c.l.b16 %v309
      %v902 = vunpack.c.h.b16 %v309
      %v903 = vunpack.c.l.b16 %v310
      %v904 = vunpack.c.h.b16 %v310
      %v905 = vunpack.c.l.b16 %v311
      %v906 = vunpack.c.h.b16 %v311
      %v907 = vunpack.c.l.b16 %v312
      %v908 = vunpack.c.h.b16 %v312
      %v909 = vunpack.c.l.b16 %v313
      %v910 = vunpack.c.h.b16 %v313
      %v911 = vunpack.c.l.b16 %v314
      %v912 = vunpack.c.h.b16 %v314
      %v913 = vunpack.c.l.b16 %v315
      %v914 = vunpack.c.h.b16 %v315
      %v915 = vunpack.c.l.b16 %v316
      %v916 = vunpack.c.h.b16 %v316
      %v917 = vunpack.c.l.b16 %v317
      %v918 = vunpack.c.h.b16 %v317
      %v919 = vunpack.c.l.b16 %v318
      %v920 = vunpack.c.h.b16 %v318
      %v921 = vunpack.c.l.b16 %v319
      %v922 = vunpack.c.h.b16 %v319
      %v923 = vunpack.c.l.b16 %v320
      %v924 = vunpack.c.h.b16 %v320
      %v925 = vunpack.c.l.b16 %v321
      %v926 = vunpack.c.h.b16 %v321
      %v927 = vunpack.c.l.b16 %v322
      %v928 = vunpack.c.h.b16 %v322
      %v929 = vunpack.c.l.b16 %v323
      %v930 = vunpack.c.h.b16 %v323
      %v931 = vunpack.c.l.b16 %v324
      %v932 = vunpack.c.h.b16 %v324
      %v933 = vunpack.c.l.b16 %v325
      %v934 = vunpack.c.h.b16 %v325
      %v935 = vunpack.c.l.b16 %v326
      %v936 = vunpack.c.h.b16 %v326
      %v937 = vunpack.c.l.b16 %v327
      %v938 = vunpack.c.h.b16 %v327
      %v939 = vunpack.c.l.b16 %v328
      %v940 = vunpack.c.h.b16 %v328
      %v941 = vunpack.c.l.b16 %v329
      %v942 = vunpack.c.h.b16 %v329
      %v943 = vunpack.c.l.b16 %v330
      %v944 = vunpack.c.h.b16 %v330
      %v945 = vunpack.c.l.b16 %v331
      %v946 = vunpack.c.h.b16 %v331
      %v947 = vunpack.c.l.b16 %v332
      %v948 = vunpack.c.h.b16 %v332
      %v949 = vunpack.c.l.b16 %v333
      %v950 = vunpack.c.h.b16 %v333
      %v951 = vunpack.c.l.b16 %v334
      %v952 = vunpack.c.h.b16 %v334
      %v953 = vunpack.c.l.b16 %v335
      %v954 = vunpack.c.h.b16 %v335
      %v955 = vunpack.c.l.b16 %v336
      %v956 = vunpack.c.h.b16 %v336
      %v957 = vunpack.c.l.b16 %v337
      %v958 = vunpack.c.h.b16 %v337
      %v959 = vunpack.c.l.b16 %v338
      %v960 = vunpack.c.h.b16 %v338
      %v961 = vunpack.c.l.b16 %v339
      %v962 = vunpack.c.h.b16 %v339
      %v963 = vunpack.c.l.b16 %v340
      %v964 = vunpack.c.h.b16 %v340
      %v965 = vunpack.c.l.b16 %v341
      %v966 = vunpack.c.h.b16 %v341
      %v967 = vunpack.c.l.b16 %v342
      %v968 = vunpack.c.h.b16 %v342
      %v969 = vunpack.c.l.b16 %v343
      %v970 = vunpack.c.h.b16 %v343
      %v971 = vunpack.c.l.b16 %v344
      %v972 = vunpack.c.h.b16 %v344
      %v973 = vunpack.c.l.b16 %v345
      %v974 = vunpack.c.h.b16 %v345
      %v975 = vunpack.c.l.b16 %v346
      %v976 = vunpack.c.h.b16 %v346
      %v977 = vunpack.c.l.b16 %v347
      %v978 = vunpack.c.h.b16 %v347
      %v979 = vunpack.c.l.b16 %v348
      %v980 = vunpack.c.h.b16 %v348
      %v981 = vunpack.c.l.b16 %v349
      %v982 = vunpack.c.h.b16 %v349
      %v983 = vunpack.c.l.b16 %v350
      %v984 = vunpack.c.h.b16 %v350
      %v985 = vunpack.c.l.b16 %v351
      %v986 = vunpack.c.h.b16 %v351
      %v987 = vunpack.c.l.b16 %v352
      %v988 = vunpack.c.h.b16 %v352
      %v989 = vunpack.c.l.b16 %v353
      %v990 = vunpack.c.h.b16 %v353
      %v991 = vunpack.c.l.b16 %v354
      %v992 = vunpack.c.h.b16 %v354
      %v993 = vunpack.c.l.b16 %v355
      %v994 = vunpack.c.h.b16 %v355
      %v995 = vunpack.c.l.b16 %v356
      %v996 = vunpack.c.h.b16 %v356
      %v997 = vunpack.c.l.b16 %v357
      %v998 = vunpack.c.h.b16 %v357
      %v999 = vunpack.c.l.b16 %v358
      %v1000 = vunpack.c.h.b16 %v358
      %v1001 = vunpack.c.l.b16 %v359
      %v1002 = vunpack.c.h.b16 %v359
      %v1003 = vunpack.c.l.b16 %v360
      %v1004 = vunpack.c.h.b16 %v360
      %v1005 = vpack.c.b16 %v765, %v749
      %v1006 = vpack.c.b16 %v766, %v750
      %v1007 = vpack.c.b16 %v767, %v751
      %v1008 = vpack.c.b16 %v768, %v752
      %v1009 = vpack.c.b16 %v769, %v753
      %v1010 = vpack.c.b16 %v770, %v754
      %v1011 = vpack.c.b16 %v771, %v755
      %v1012 = vpack.c.b16 %v772, %v756
      %v1013 = vpack.c.b16 %v773, %v757
      %v1014 = vpack.c.b16 %v774, %v758
      %v1015 = vpack.c.b16 %v775, %v759
      %v1016 = vpack.c.b16 %v776, %v760
      %v1017 = vpack.c.b16 %v777, %v761
      %v1018 = vpack.c.b16 %v778, %v762
      %v1019 = vpack.c.b16 %v779, %v763
      %v1020 = vpack.c.b16 %v780, %v764
      %v1021 = vpack.c.b16 %v797, %v781
      %v1022 = vpack.c.b16 %v798, %v782
      %v1023 = vpack.c.b16 %v799, %v783
      %v1024 = vpack.c.b16 %v800, %v784
      %v1025 = vpack.c.b16 %v801, %v785
      %v1026 = vpack.c.b16 %v802, %v786
      %v1027 = vpack.c.b16 %v803, %v787
      %v1028 = vpack.c.b16 %v804, %v788
      %v1029 = vpack.c.b16 %v805, %v789
      %v1030 = vpack.c.b16 %v806, %v790
      %v1031 = vpack.c.b16 %v807, %v791
      %v1032 = vpack.c.b16 %v808, %v792
      %v1033 = vpack.c.b16 %v809, %v793
      %v1034 = vpack.c.b16 %v810, %v794
      %v1035 = vpack.c.b16 %v811, %v795
      %v1036 = vpack.c.b16 %v812, %v796
      %v1037 = vpack.c.b16 %v829, %v813
      %v1038 = vpack.c.b16 %v830, %v814
      %v1039 = vpack.c.b16 %v831, %v815
      %v1040 = vpack.c.b16 %v832, %v816
      %v1041 = vpack.c.b16 %v833, %v817
      %v1042 = vpack.c.b16 %v834, %v818
      %v1043 = vpack.c.b16 %v835, %v819
      %v1044 = vpack.c.b16 %v836, %v820
      %v1045 = vpack.c.b16 %v837, %v821
      %v1046 = vpack.c.b16 %v838, %v822
      %v1047 = vpack.c.b16 %v839, %v823
      %v1048 = vpack.c.b16 %v840, %v824
      %v1049 = vpack.c.b16 %v841, %v825
      %v1050 = vpack.c.b16 %v842, %v826
      %v1051 = vpack.c.b16 %v843, %v827
      %v1052 = vpack.c.b16 %v844, %v828
      %v1053 = vpack.c.b16 %v861, %v845
      %v1054 = vpack.c.b16 %v862, %v846
      %v1055 = vpack.c.b16 %v863, %v847
      %v1056 = vpack.c.b16 %v864, %v848
      %v1057 = vpack.c.b16 %v865, %v849
      %v1058 = vpack.c.b16 %v866, %v850
      %v1059 = vpack.c.b16 %v867, %v851
      %v1060 = vpack.c.b16 %v868, %v852
      %v1061 = vpack.c.b16 %v869, %v853
      %v1062 = vpack.c.b16 %v870, %v854
      %v1063 = vpack.c.b16 %v871, %v855
      %v1064 = vpack.c.b16 %v872, %v856
      %v1065 = vpack.c.b16 %v873, %v857
      %v1066 = vpack.c.b16 %v874, %v858
      %v1067 = vpack.c.b16 %v875, %v859
      %v1068 = vpack.c.b16 %v876, %v860
      %v1069 = vpack.c.b16 %v893, %v877
      %v1070 = vpack.c.b16 %v894, %v878
      %v1071 = vpack.c.b16 %v895, %v879
      %v1072 = vpack.c.b16 %v896, %v880
      %v1073 = vpack.c.b16 %v897, %v881
      %v1074 = vpack.c.b16 %v898, %v882
      %v1075 = vpack.c.b16 %v899, %v883
      %v1076 = vpack.c.b16 %v900, %v884
      %v1077 = vpack.c.b16 %v901, %v885
      %v1078 = vpack.c.b16 %v902, %v886
      %v1079 = vpack.c.b16 %v903, %v887
      %v1080 = vpack.c.b16 %v904, %v888
      %v1081 = vpack.c.b16 %v905, %v889
      %v1082 = vpack.c.b16 %v906, %v890
      %v1083 = vpack.c.b16 %v907, %v891
      %v1084 = vpack.c.b16 %v908, %v892
      %v1085 = vpack.c.b16 %v925, %v909
      %v1086 = vpack.c.b16 %v926, %v910
      %v1087 = vpack.c.b16 %v927, %v911
      %v1088 = vpack.c.b16 %v928, %v912
      %v1089 = vpack.c.b16 %v929, %v913
      %v1090 = vpack.c.b16 %v930, %v914
      %v1091 = vpack.c.b16 %v931, %v915
      %v1092 = vpack.c.b16 %v932, %v916
      %v1093 = vpack.c.b16 %v933, %v917
      %v1094 = vpack.c.b16 %v934, %v918
      %v1095 = vpack.c.b16 %v935, %v919
      %v1096 = vpack.c.b16 %v936, %v920
      %v1097 = vpack.c.b16 %v937, %v921
      %v1098 = vpack.c.b16 %v938, %v922
      %v1099 = vpack.c.b16 %v939, %v923
      %v1100 = vpack.c.b16 %v940, %v924
      %v1101 = vpack.c.b16 %v957, %v941
      %v1102 = vpack.c.b16 %v958, %v942
      %v1103 = vpack.c.b16 %v959, %v943
      %v1104 = vpack.c.b16 %v960, %v944
      %v1105 = vpack.c.b16 %v961, %v945
      %v1106 = vpack.c.b16 %v962, %v946
      %v1107 = vpack.c.b16 %v963, %v947
      %v1108 = vpack.c.b16 %v964, %v948
      %v1109 = vpack.c.b16 %v965, %v949
      %v1110 = vpack.c.b16 %v966, %v950
      %v1111 = vpack.c.b16 %v967, %v951
      %v1112 = vpack.c.b16 %v968, %v952
      %v1113 = vpack.c.b16 %v969, %v953
      %v1114 = vpack.c.b16 %v970, %v954
      %v1115 = vpack.c.b16 %v971, %v955
      %v1116 = vpack.c.b16 %v972, %v956
      %v1117 = vpack.c.b16 %v989, %v973
      %v1118 = vpack.c.b16 %v990, %v974
      %v1119 = vpack.c.b16 %v991, %v975
      %v1120 = vpack.c.b16 %v992, %v976
      %v1121 = vpack.c.b16 %v993, %v977
      %v1122 = vpack.c.b16 %v994, %v978
      %v1123 = vpack.c.b16 %v995, %v979
      %v1124 = vpack.c.b16 %v996, %v980
      %v1125 = vpack.c.b16 %v997, %v981
      %v1126 = vpack.c.b16 %v998, %v982
      %v1127 = vpack.c.b16 %v999, %v983
      %v1128 = vpack.c.b16 %v1000, %v984
      %v1129 = vpack.c.b16 %v1001, %v985
      %v1130 = vpack.c.b16 %v1002, %v986
      %v1131 = vpack.c.b16 %v1003, %v987
      %v1132 = vpack.c.b16 %v1004, %v988
      %v1517 = vunpack.c.l.b16 %v361
      %v1518 = vunpack.c.l.b16 %v362
      %v1519 = vunpack.c.l.b16 %v363
      %v1520 = vunpack.c.l.b16 %v364
      %v1521 = vunpack.c.l.b16 %v365
      %v1522 = vunpack.c.l.b16 %v366
      %v1523 = vunpack.c.l.b16 %v367
      %v1524 = vunpack.c.l.b16 %v368
      %v1525 = vunpack.c.l.b16 %v369
      %v1526 = vunpack.c.l.b16 %v370
      %v1527 = vunpack.c.l.b16 %v371
      %v1528 = vunpack.c.l.b16 %v372
      %v1529 = vunpack.c.l.b16 %v373
      %v1530 = vunpack.c.l.b16 %v374
      %v1531 = vunpack.c.l.b16 %v375
      %v1532 = vunpack.c.l.b16 %v376
      %v1533 = vunpack.c.l.b16 %v377
      %v1534 = vunpack.c.l.b16 %v378
      %v1535 = vunpack.c.l.b16 %v379
      %v1536 = vunpack.c.l.b16 %v380
      %v1537 = vunpack.c.l.b16 %v381
      %v1538 = vunpack.c.l.b16 %v382
      %v1539 = vunpack.c.l.b16 %v383
      %v1540 = vunpack.c.l.b16 %v384
      %v1541 = vunpack.c.l.b16 %v385
      %v1542 = vunpack.c.l.b16 %v386
      %v1543 = vunpack.c.l.b16 %v387
      %v1544 = vunpack.c.l.b16 %v388
      %v1545 = vunpack.c.l.b16 %v389
      %v1546 = vunpack.c.l.b16 %v390
      %v1547 = vunpack.c.l.b16 %v391
      %v1548 = vunpack.c.l.b16 %v392
      %v1549 = vunpack.c.l.b16 %v393
      %v1550 = vunpack.c.l.b16 %v394
      %v1551 = vunpack.c.l.b16 %v395
      %v1552 = vunpack.c.l.b16 %v396
      %v1553 = vunpack.c.l.b16 %v397
      %v1554 = vunpack.c.l.b16 %v398
      %v1555 = vunpack.c.l.b16 %v399
      %v1556 = vunpack.c.l.b16 %v400
      %v1557 = vunpack.c.l.b16 %v401
      %v1558 = vunpack.c.l.b16 %v402
      %v1559 = vunpack.c.l.b16 %v403
      %v1560 = vunpack.c.l.b16 %v404
      %v1561 = vunpack.c.l.b16 %v405
      %v1562 = vunpack.c.l.b16 %v406
      %v1563 = vunpack.c.l.b16 %v407
      %v1564 = vunpack.c.l.b16 %v408
      %v1565 = vunpack.c.l.b16 %v409
      %v1566 = vunpack.c.l.b16 %v410
      %v1567 = vunpack.c.l.b16 %v411
      %v1568 = vunpack.c.l.b16 %v412
      %v1569 = vunpack.c.l.b16 %v413
      %v1570 = vunpack.c.l.b16 %v414
      %v1571 = vunpack.c.l.b16 %v415
      %v1572 = vunpack.c.l.b16 %v416
      %v1573 = vunpack.c.l.b16 %v417
      %v1574 = vunpack.c.l.b16 %v418
      %v1575 = vunpack.c.l.b16 %v419
      %v1576 = vunpack.c.l.b16 %v420
      %v1577 = vunpack.c.l.b16 %v421
      %v1578 = vunpack.c.l.b16 %v422
      %v1579 = vunpack.c.l.b16 %v423
      %v1580 = vunpack.c.l.b16 %v424
      %v1581 = vunpack.c.l.b16 %v425
      %v1582 = vunpack.c.l.b16 %v426
      %v1583 = vunpack.c.l.b16 %v427
      %v1584 = vunpack.c.l.b16 %v428
      %v1585 = vunpack.c.l.b16 %v429
      %v1586 = vunpack.c.l.b16 %v430
      %v1587 = vunpack.c.l.b16 %v431
      %v1588 = vunpack.c.l.b16 %v432
      %v1589 = vunpack.c.l.b16 %v433
      %v1590 = vunpack.c.l.b16 %v434
      %v1591 = vunpack.c.l.b16 %v435
      %v1592 = vunpack.c.l.b16 %v436
      %v1593 = vunpack.c.l.b16 %v437
      %v1594 = vunpack.c.l.b16 %v438
      %v1595 = vunpack.c.l.b16 %v439
      %v1596 = vunpack.c.l.b16 %v440
      %v1597 = vunpack.c.l.b16 %v441
      %v1598 = vunpack.c.l.b16 %v442
      %v1599 = vunpack.c.l.b16 %v443
      %v1600 = vunpack.c.l.b16 %v444
      %v1601 = vunpack.c.l.b16 %v445
      %v1602 = vunpack.c.l.b16 %v446
      %v1603 = vunpack.c.l.b16 %v447
      %v1604 = vunpack.c.l.b16 %v448
      %v1605 = vunpack.c.l.b16 %v449
      %v1606 = vunpack.c.l.b16 %v450
      %v1607 = vunpack.c.l.b16 %v451
      %v1608 = vunpack.c.l.b16 %v452
      %v1609 = vunpack.c.l.b16 %v453
      %v1610 = vunpack.c.l.b16 %v454
      %v1611 = vunpack.c.l.b16 %v455
      %v1612 = vunpack.c.l.b16 %v456
      %v1613 = vunpack.c.l.b16 %v457
      %v1614 = vunpack.c.l.b16 %v458
      %v1615 = vunpack.c.l.b16 %v459
      %v1616 = vunpack.c.l.b16 %v460
      %v1617 = vunpack.c.l.b16 %v461
      %v1618 = vunpack.c.l.b16 %v462
      %v1619 = vunpack.c.l.b16 %v463
      %v1620 = vunpack.c.l.b16 %v464
      %v1621 = vunpack.c.l.b16 %v465
      %v1622 = vunpack.c.l.b16 %v466
      %v1623 = vunpack.c.l.b16 %v467
      %v1624 = vunpack.c.l.b16 %v468
      %v1625 = vunpack.c.l.b16 %v469
      %v1626 = vunpack.c.l.b16 %v470
      %v1627 = vunpack.c.l.b16 %v471
      %v1628 = vunpack.c.l.b16 %v472
      %v1629 = vunpack.c.l.b16 %v473
      %v1630 = vunpack.c.l.b16 %v474
      %v1631 = vunpack.c.l.b16 %v475
      %v1632 = vunpack.c.l.b16 %v476
      %v1633 = vunpack.c.l.b16 %v477
      %v1634 = vunpack.c.l.b16 %v478
      %v1635 = vunpack.c.l.b16 %v479
      %v1636 = vunpack.c.l.b16 %v480
      %v1637 = vunpack.c.l.b16 %v481
      %v1638 = vunpack.c.l.b16 %v482
      %v1639 = vunpack.c.l.b16 %v483
      %v1640 = vunpack.c.l.b16 %v484
      %v1641 = vunpack.c.l.b16 %v485
      %v1642 = vunpack.c.l.b16 %v486
      %v1643 = vunpack.c.l.b16 %v487
      %v1644 = vunpack.c.l.b16 %v488
      %v1645 = vunpack.c.l.b16 %v489
      %v1646 = vunpack.c.l.b16 %v490
      %v1647 = vunpack.c.l.b16 %v491
      %v1648 = vunpack.c.l.b16 %v492
      %v1649 = vunpack.c.l.b16 %v493
      %v1650 = vunpack.c.l.b16 %v494
      %v1651 = vunpack.c.l.b16 %v495
      %v1652 = vunpack.c.l.b16 %v496
      %v1653 = vunpack.c.l.b16 %v497
      %v1654 = vunpack.c.l.b16 %v498
      %v1655 = vunpack.c.l.b16 %v499
      %v1656 = vunpack.c.l.b16 %v500
      %v1657 = vunpack.c.l.b16 %v501
      %v1658 = vunpack.c.l.b16 %v502
      %v1659 = vunpack.c.l.b16 %v503
      %v1660 = vunpack.c.l.b16 %v504
      %v1661 = vunpack.c.l.b16 %v505
      %v1662 = vunpack.c.l.b16 %v506
      %v1663 = vunpack.c.l.b16 %v507
      %v1664 = vunpack.c.l.b16 %v508
      %v1665 = vunpack.c.l.b16 %v509
      %v1666 = vunpack.c.l.b16 %v510
      %v1667 = vunpack.c.l.b16 %v511
      %v1668 = vunpack.c.l.b16 %v512
      %v1669 = vunpack.c.l.b16 %v513
      %v1670 = vunpack.c.l.b16 %v514
      %v1671 = vunpack.c.l.b16 %v515
      %v1672 = vunpack.c.l.b16 %v516
      %v1673 = vunpack.c.l.b16 %v517
      %v1674 = vunpack.c.l.b16 %v518
      %v1675 = vunpack.c.l.b16 %v519
      %v1676 = vunpack.c.l.b16 %v520
      %v1677 = vunpack.c.l.b16 %v521
      %v1678 = vunpack.c.l.b16 %v522
      %v1679 = vunpack.c.l.b16 %v523
      %v1680 = vunpack.c.l.b16 %v524
      %v1681 = vunpack.c.l.b16 %v525
      %v1682 = vunpack.c.l.b16 %v526
      %v1683 = vunpack.c.l.b16 %v527
      %v1684 = vunpack.c.l.b16 %v528
      %v1685 = vunpack.c.l.b16 %v529
      %v1686 = vunpack.c.l.b16 %v530
      %v1687 = vunpack.c.l.b16 %v531
      %v1688 = vunpack.c.l.b16 %v532
      %v1689 = vunpack.c.l.b16 %v533
      %v1690 = vunpack.c.l.b16 %v534
      %v1691 = vunpack.c.l.b16 %v535
      %v1692 = vunpack.c.l.b16 %v536
      %v1693 = vunpack.c.l.b16 %v537
      %v1694 = vunpack.c.l.b16 %v538
      %v1695 = vunpack.c.l.b16 %v539
      %v1696 = vunpack.c.l.b16 %v540
      %v1697 = vunpack.c.l.b16 %v541
      %v1698 = vunpack.c.l.b16 %v542
      %v1699 = vunpack.c.l.b16 %v543
      %v1700 = vunpack.c.l.b16 %v544
      %v1701 = vunpack.c.l.b16 %v545
      %v1702 = vunpack.c.l.b16 %v546
      %v1703 = vunpack.c.l.b16 %v547
      %v1704 = vunpack.c.l.b16 %v548
      %v1705 = vunpack.c.l.b16 %v549
      %v1706 = vunpack.c.l.b16 %v550
      %v1707 = vunpack.c.l.b16 %v551
      %v1708 = vunpack.c.l.b16 %v552
      %v1709 = vunpack.c.l.b16 %v553
      %v1710 = vunpack.c.l.b16 %v554
      %v1711 = vunpack.c.l.b16 %v555
      %v1712 = vunpack.c.l.b16 %v556
      %v1713 = vunpack.c.l.b16 %v557
      %v1714 = vunpack.c.l.b16 %v558
      %v1715 = vunpack.c.l.b16 %v559
      %v1716 = vunpack.c.l.b16 %v560
      %v1717 = vunpack.c.l.b16 %v561
      %v1718 = vunpack.c.l.b16 %v562
      %v1719 = vunpack.c.l.b16 %v563
      %v1720 = vunpack.c.l.b16 %v564
      %v1721 = vunpack.c.l.b16 %v565
      %v1722 = vunpack.c.l.b16 %v566
      %v1723 = vunpack.c.l.b16 %v567
      %v1724 = vunpack.c.l.b16 %v568
      %v1725 = vunpack.c.l.b16 %v569
      %v1726 = vunpack.c.l.b16 %v570
      %v1727 = vunpack.c.l.b16 %v571
      %v1728 = vunpack.c.l.b16 %v572
      %v1729 = vunpack.c.l.b16 %v573
      %v1730 = vunpack.c.l.b16 %v574
      %v1731 = vunpack.c.l.b16 %v575
      %v1732 = vunpack.c.l.b16 %v576
      %v1733 = vunpack.c.l.b16 %v577
      %v1734 = vunpack.c.l.b16 %v578
      %v1735 = vunpack.c.l.b16 %v579
      %v1736 = vunpack.c.l.b16 %v580
      %v1737 = vunpack.c.l.b16 %v581
      %v1738 = vunpack.c.l.b16 %v582
      %v1739 = vunpack.c.l.b16 %v583
      %v1740 = vunpack.c.l.b16 %v584
      %v1741 = vunpack.c.l.b16 %v585
      %v1742 = vunpack.c.l.b16 %v586
      %v1743 = vunpack.c.l.b16 %v587
      %v1744 = vunpack.c.l.b16 %v588
      %v1745 = vunpack.c.l.b16 %v589
      %v1746 = vunpack.c.l.b16 %v590
      %v1747 = vunpack.c.l.b16 %v591
      %v1748 = vunpack.c.l.b16 %v592
      %v1749 = vunpack.c.l.b16 %v593
      %v1750 = vunpack.c.l.b16 %v594
      %v1751 = vunpack.c.l.b16 %v595
      %v1752 = vunpack.c.l.b16 %v596
      %v1753 = vunpack.c.l.b16 %v597
      %v1754 = vunpack.c.l.b16 %v598
      %v1755 = vunpack.c.l.b16 %v599
      %v1756 = vunpack.c.l.b16 %v600
      %v1757 = vunpack.c.l.b16 %v601
      %v1758 = vunpack.c.l.b16 %v602
      %v1759 = vunpack.c.l.b16 %v603
      %v1760 = vunpack.c.l.b16 %v604
      %v1761 = vunpack.c.l.b16 %v605
      %v1762 = vunpack.c.l.b16 %v606
      %v1763 = vunpack.c.l.b16 %v607
      %v1764 = vunpack.c.l.b16 %v608
      %v1765 = vunpack.c.l.b16 %v609
      %v1766 = vunpack.c.l.b16 %v610
      %v1767 = vunpack.c.l.b16 %v611
      %v1768 = vunpack.c.l.b16 %v612
      %v1769 = vunpack.c.l.b16 %v613
      %v1770 = vunpack.c.l.b16 %v614
      %v1771 = vunpack.c.l.b16 %v615
      %v1772 = vunpack.c.l.b16 %v616
      %v1773 = vpack.c.b16 %v1518, %v1517
      %v1774 = vpack.c.b16 %v1520, %v1519
      %v1775 = vpack.c.b16 %v1522, %v1521
      %v1776 = vpack.c.b16 %v1524, %v1523
      %v1777 = vpack.c.b16 %v1526, %v1525
      %v1778 = vpack.c.b16 %v1528, %v1527
      %v1779 = vpack.c.b16 %v1530, %v1529
      %v1780 = vpack.c.b16 %v1532, %v1531
      %v1781 = vpack.c.b16 %v1534, %v1533
      %v1782 = vpack.c.b16 %v1536, %v1535
      %v1783 = vpack.c.b16 %v1538, %v1537
      %v1784 = vpack.c.b16 %v1540, %v1539
      %v1785 = vpack.c.b16 %v1542, %v1541
      %v1786 = vpack.c.b16 %v1544, %v1543
      %v1787 = vpack.c.b16 %v1546, %v1545
      %v1788 = vpack.c.b16 %v1548, %v1547
      %v1789 = vpack.c.b16 %v1550, %v1549
      %v1790 = vpack.c.b16 %v1552, %v1551
      %v1791 = vpack.c.b16 %v1554, %v1553
      %v1792 = vpack.c.b16 %v1556, %v1555
      %v1793 = vpack.c.b16 %v1558, %v1557
      %v1794 = vpack.c.b16 %v1560, %v1559
      %v1795 = vpack.c.b16 %v1562, %v1561
      %v1796 = vpack.c.b16 %v1564, %v1563
      %v1797 = vpack.c.b16 %v1566, %v1565
      %v1798 = vpack.c.b16 %v1568, %v1567
      %v1799 = vpack.c.b16 %v1570, %v1569
      %v1800 = vpack.c.b16 %v1572, %v1571
      %v1801 = vpack.c.b16 %v1574, %v1573
      %v1802 = vpack.c.b16 %v1576, %v1575
      %v1803 = vpack.c.b16 %v1578, %v1577
      %v1804 = vpack.c.b16 %v1580, %v1579
      %v1805 = vpack.c.b16 %v1582, %v1581
      %v1806 = vpack.c.b16 %v1584, %v1583
      %v1807 = vpack.c.b16 %v1586, %v1585
      %v1808 = vpack.c.b16 %v1588, %v1587
      %v1809 = vpack.c.b16 %v1590, %v1589
      %v1810 = vpack.c.b16 %v1592, %v1591
      %v1811 = vpack.c.b16 %v1594, %v1593
      %v1812 = vpack.c.b16 %v1596, %v1595
      %v1813 = vpack.c.b16 %v1598, %v1597
      %v1814 = vpack.c.b16 %v1600, %v1599
      %v1815 = vpack.c.b16 %v1602, %v1601
      %v1816 = vpack.c.b16 %v1604, %v1603
      %v1817 = vpack.c.b16 %v1606, %v1605
      %v1818 = vpack.c.b16 %v1608, %v1607
      %v1819 = vpack.c.b16 %v1610, %v1609
      %v1820 = vpack.c.b16 %v1612, %v1611
      %v1821 = vpack.c.b16 %v1614, %v1613
      %v1822 = vpack.c.b16 %v1616, %v1615
      %v1823 = vpack.c.b16 %v1618, %v1617
      %v1824 = vpack.c.b16 %v1620, %v1619
      %v1825 = vpack.c.b16 %v1622, %v1621
      %v1826 = vpack.c.b16 %v1624, %v1623
      %v1827 = vpack.c.b16 %v1626, %v1625
      %v1828 = vpack.c.b16 %v1628, %v1627
      %v1829 = vpack.c.b16 %v1630, %v1629
      %v1830 = vpack.c.b16 %v1632, %v1631
      %v1831 = vpack.c.b16 %v1634, %v1633
      %v1832 = vpack.c.b16 %v1636, %v1635
      %v1833 = vpack.c.b16 %v1638, %v1637
      %v1834 = vpack.c.b16 %v1640, %v1639
      %v1835 = vpack.c.b16 %v1642, %v1641
      %v1836 = vpack.c.b16 %v1644, %v1643
      %v1837 = vpack.c.b16 %v1646, %v1645
      %v1838 = vpack.c.b16 %v1648, %v1647
      %v1839 = vpack.c.b16 %v1650, %v1649
      %v1840 = vpack.c.b16 %v1652, %v1651
      %v1841 = vpack.c.b16 %v1654, %v1653
      %v1842 = vpack.c.b16 %v1656, %v1655
      %v1843 = vpack.c.b16 %v1658, %v1657
      %v1844 = vpack.c.b16 %v1660, %v1659
      %v1845 = vpack.c.b16 %v1662, %v1661
      %v1846 = vpack.c.b16 %v1664, %v1663
      %v1847 = vpack.c.b16 %v1666, %v1665
      %v1848 = vpack.c.b16 %v1668, %v1667
      %v1849 = vpack.c.b16 %v1670, %v1669
      %v1850 = vpack.c.b16 %v1672, %v1671
      %v1851 = vpack.c.b16 %v1674, %v1673
      %v1852 = vpack.c.b16 %v1676, %v1675
      %v1853 = vpack.c.b16 %v1678, %v1677
      %v1854 = vpack.c.b16 %v1680, %v1679
      %v1855 = vpack.c.b16 %v1682, %v1681
      %v1856 = vpack.c.b16 %v1684, %v1683
      %v1857 = vpack.c.b16 %v1686, %v1685
      %v1858 = vpack.c.b16 %v1688, %v1687
      %v1859 = vpack.c.b16 %v1690, %v1689
      %v1860 = vpack.c.b16 %v1692, %v1691
      %v1861 = vpack.c.b16 %v1694, %v1693
      %v1862 = vpack.c.b16 %v1696, %v1695
      %v1863 = vpack.c.b16 %v1698, %v1697
      %v1864 = vpack.c.b16 %v1700, %v1699
      %v1865 = vpack.c.b16 %v1702, %v1701
      %v1866 = vpack.c.b16 %v1704, %v1703
      %v1867 = vpack.c.b16 %v1706, %v1705
      %v1868 = vpack.c.b16 %v1708, %v1707
      %v1869 = vpack.c.b16 %v1710, %v1709
      %v1870 = vpack.c.b16 %v1712, %v1711
      %v1871 = vpack.c.b16 %v1714, %v1713
      %v1872 = vpack.c.b16 %v1716, %v1715
      %v1873 = vpack.c.b16 %v1718, %v1717
      %v1874 = vpack.c.b16 %v1720, %v1719
      %v1875 = vpack.c.b16 %v1722, %v1721
      %v1876 = vpack.c.b16 %v1724, %v1723
      %v1877 = vpack.c.b16 %v1726, %v1725
      %v1878 = vpack.c.b16 %v1728, %v1727
      %v1879 = vpack.c.b16 %v1730, %v1729
      %v1880 = vpack.c.b16 %v1732, %v1731
      %v1881 = vpack.c.b16 %v1734, %v1733
      %v1882 = vpack.c.b16 %v1736, %v1735
      %v1883 = vpack.c.b16 %v1738, %v1737
      %v1884 = vpack.c.b16 %v1740, %v1739
      %v1885 = vpack.c.b16 %v1742, %v1741
      %v1886 = vpack.c.b16 %v1744, %v1743
      %v1887 = vpack.c.b16 %v1746, %v1745
      %v1888 = vpack.c.b16 %v1748, %v1747
      %v1889 = vpack.c.b16 %v1750, %v1749
      %v1890 = vpack.c.b16 %v1752, %v1751
      %v1891 = vpack.c.b16 %v1754, %v1753
      %v1892 = vpack.c.b16 %v1756, %v1755
      %v1893 = vpack.c.b16 %v1758, %v1757
      %v1894 = vpack.c.b16 %v1760, %v1759
      %v1895 = vpack.c.b16 %v1762, %v1761
      %v1896 = vpack.c.b16 %v1764, %v1763
      %v1897 = vpack.c.b16 %v1766, %v1765
      %v1898 = vpack.c.b16 %v1768, %v1767
      %v1899 = vpack.c.b16 %v1770, %v1769
      %v1900 = vpack.c.b16 %v1772, %v1771
      %2029 = vmatpush.bf16.msra.mxu0 %v1780
      %2030 = vmatpush.bf16.msra.mxu0 %v1779
      %2031 = vmatpush.bf16.msra.mxu0 %v1778
      %2032 = vmatpush.bf16.msra.mxu0 %v1777
      %2033 = vmatpush.bf16.msra.mxu0 %v1776
      %2034 = vmatpush.bf16.msra.mxu0 %v1775
      %2035 = vmatpush.bf16.msra.mxu0 %v1774
      %2036 = vmatpush.bf16.msra.mxu0 %v1773
      %2037 = vmatmul.bf16.gmra.mxu0 %v1005
      %v2038 = vpop.f32.mrf.mxu0
      %v2039 = vadd.f32 %v619, %v2038
      %v2040 = vpop.f32.mrf.mxu0
      %v2041 = vadd.f32 %v619, %v2040
      %2042 = vmatmul.bf16.gmra.mxu0 %v1021
      %v2043 = vpop.f32.mrf.mxu0
      %v2044 = vadd.f32 %v619, %v2043
      %v2045 = vpop.f32.mrf.mxu0
      %v2046 = vadd.f32 %v619, %v2045
      %2047 = vmatmul.bf16.gmra.mxu0 %v1037
      %v2048 = vpop.f32.mrf.mxu0
      %v2049 = vadd.f32 %v619, %v2048
      %v2050 = vpop.f32.mrf.mxu0
      %v2051 = vadd.f32 %v619, %v2050
      %2052 = vmatmul.bf16.gmra.mxu0 %v1053
      %v2053 = vpop.f32.mrf.mxu0
      %v2054 = vadd.f32 %v619, %v2053
      %v2055 = vpop.f32.mrf.mxu0
      %v2056 = vadd.f32 %v619, %v2055
      %2057 = vmatmul.bf16.gmra.mxu0 %v1069
      %v2058 = vpop.f32.mrf.mxu0
      %v2059 = vadd.f32 %v619, %v2058
      %v2060 = vpop.f32.mrf.mxu0
      %v2061 = vadd.f32 %v619, %v2060
      %2062 = vmatmul.bf16.gmra.mxu0 %v1085
      %v2063 = vpop.f32.mrf.mxu0
      %v2064 = vadd.f32 %v619, %v2063
      %v2065 = vpop.f32.mrf.mxu0
      %v2066 = vadd.f32 %v619, %v2065
      %2067 = vmatmul.bf16.gmra.mxu0 %v1101
      %v2068 = vpop.f32.mrf.mxu0
      %v2069 = vadd.f32 %v619, %v2068
      %v2070 = vpop.f32.mrf.mxu0
      %v2071 = vadd.f32 %v619, %v2070
      %2072 = vmatmul.bf16.gmra.mxu0 %v1117
      %v2073 = vpop.f32.mrf.mxu0
      %v2074 = vadd.f32 %v619, %v2073
      %v2075 = vpop.f32.mrf.mxu0
      %v2076 = vadd.f32 %v619, %v2075
      %2077 = vdwg.mxu0
      %2078 = vmatpush.bf16.msra.mxu0 %v1788
      %2079 = vmatpush.bf16.msra.mxu0 %v1787
      %2080 = vmatpush.bf16.msra.mxu0 %v1786
      %2081 = vmatpush.bf16.msra.mxu0 %v1785
      %2082 = vmatpush.bf16.msra.mxu0 %v1784
      %2083 = vmatpush.bf16.msra.mxu0 %v1783
      %2084 = vmatpush.bf16.msra.mxu0 %v1782
      %2085 = vmatpush.bf16.msra.mxu0 %v1781
      %2086 = vmatmul.bf16.gmra.mxu0 %v1006
      %v2087 = vpop.f32.mrf.mxu0
      %v2088 = vadd.f32 %v2039, %v2087
      %v2089 = vpop.f32.mrf.mxu0
      %v2090 = vadd.f32 %v2041, %v2089
      %2091 = vmatmul.bf16.gmra.mxu0 %v1022
      %v2092 = vpop.f32.mrf.mxu0
      %v2093 = vadd.f32 %v2044, %v2092
      %v2094 = vpop.f32.mrf.mxu0
      %v2095 = vadd.f32 %v2046, %v2094
      %2096 = vmatmul.bf16.gmra.mxu0 %v1038
      %v2097 = vpop.f32.mrf.mxu0
      %v2098 = vadd.f32 %v2049, %v2097
      %v2099 = vpop.f32.mrf.mxu0
      %v2100 = vadd.f32 %v2051, %v2099
      %2101 = vmatmul.bf16.gmra.mxu0 %v1054
      %v2102 = vpop.f32.mrf.mxu0
      %v2103 = vadd.f32 %v2054, %v2102
      %v2104 = vpop.f32.mrf.mxu0
      %v2105 = vadd.f32 %v2056, %v2104
      %2106 = vmatmul.bf16.gmra.mxu0 %v1070
      %v2107 = vpop.f32.mrf.mxu0
      %v2108 = vadd.f32 %v2059, %v2107
      %v2109 = vpop.f32.mrf.mxu0
      %v2110 = vadd.f32 %v2061, %v2109
      %2111 = vmatmul.bf16.gmra.mxu0 %v1086
      %v2112 = vpop.f32.mrf.mxu0
      %v2113 = vadd.f32 %v2064, %v2112
      %v2114 = vpop.f32.mrf.mxu0
      %v2115 = vadd.f32 %v2066, %v2114
      %2116 = vmatmul.bf16.gmra.mxu0 %v1102
      %v2117 = vpop.f32.mrf.mxu0
      %v2118 = vadd.f32 %v2069, %v2117
      %v2119 = vpop.f32.mrf.mxu0
      %v2120 = vadd.f32 %v2071, %v2119
      %2121 = vmatmul.bf16.gmra.mxu0 %v1118
      %v2122 = vpop.f32.mrf.mxu0
      %v2123 = vadd.f32 %v2074, %v2122
      %v2124 = vpop.f32.mrf.mxu0
      %v2125 = vadd.f32 %v2076, %v2124
      %2126 = vdwg.mxu0
      %2127 = vmatpush.bf16.msra.mxu0 %v1796
      %2128 = vmatpush.bf16.msra.mxu0 %v1795
      %2129 = vmatpush.bf16.msra.mxu0 %v1794
      %2130 = vmatpush.bf16.msra.mxu0 %v1793
      %2131 = vmatpush.bf16.msra.mxu0 %v1792
      %2132 = vmatpush.bf16.msra.mxu0 %v1791
      %2133 = vmatpush.bf16.msra.mxu0 %v1790
      %2134 = vmatpush.bf16.msra.mxu0 %v1789
      %2135 = vmatmul.bf16.gmra.mxu0 %v1007
      %v2136 = vpop.f32.mrf.mxu0
      %v2137 = vadd.f32 %v2088, %v2136
      %v2138 = vpop.f32.mrf.mxu0
      %v2139 = vadd.f32 %v2090, %v2138
      %2140 = vmatmul.bf16.gmra.mxu0 %v1023
      %v2141 = vpop.f32.mrf.mxu0
      %v2142 = vadd.f32 %v2093, %v2141
      %v2143 = vpop.f32.mrf.mxu0
      %v2144 = vadd.f32 %v2095, %v2143
      %2145 = vmatmul.bf16.gmra.mxu0 %v1039
      %v2146 = vpop.f32.mrf.mxu0
      %v2147 = vadd.f32 %v2098, %v2146
      %v2148 = vpop.f32.mrf.mxu0
      %v2149 = vadd.f32 %v2100, %v2148
      %2150 = vmatmul.bf16.gmra.mxu0 %v1055
      %v2151 = vpop.f32.mrf.mxu0
      %v2152 = vadd.f32 %v2103, %v2151
      %v2153 = vpop.f32.mrf.mxu0
      %v2154 = vadd.f32 %v2105, %v2153
      %2155 = vmatmul.bf16.gmra.mxu0 %v1071
      %v2156 = vpop.f32.mrf.mxu0
      %v2157 = vadd.f32 %v2108, %v2156
      %v2158 = vpop.f32.mrf.mxu0
      %v2159 = vadd.f32 %v2110, %v2158
      %2160 = vmatmul.bf16.gmra.mxu0 %v1087
      %v2161 = vpop.f32.mrf.mxu0
      %v2162 = vadd.f32 %v2113, %v2161
      %v2163 = vpop.f32.mrf.mxu0
      %v2164 = vadd.f32 %v2115, %v2163
      %2165 = vmatmul.bf16.gmra.mxu0 %v1103
      %v2166 = vpop.f32.mrf.mxu0
      %v2167 = vadd.f32 %v2118, %v2166
      %v2168 = vpop.f32.mrf.mxu0
      %v2169 = vadd.f32 %v2120, %v2168
      %2170 = vmatmul.bf16.gmra.mxu0 %v1119
      %v2171 = vpop.f32.mrf.mxu0
      %v2172 = vadd.f32 %v2123, %v2171
      %v2173 = vpop.f32.mrf.mxu0
      %v2174 = vadd.f32 %v2125, %v2173
      %2175 = vdwg.mxu0
      %2176 = vmatpush.bf16.msra.mxu0 %v1804
      %2177 = vmatpush.bf16.msra.mxu0 %v1803
      %2178 = vmatpush.bf16.msra.mxu0 %v1802
      %2179 = vmatpush.bf16.msra.mxu0 %v1801
      %2180 = vmatpush.bf16.msra.mxu0 %v1800
      %2181 = vmatpush.bf16.msra.mxu0 %v1799
      %2182 = vmatpush.bf16.msra.mxu0 %v1798
      %2183 = vmatpush.bf16.msra.mxu0 %v1797
      %2184 = vmatmul.bf16.gmra.mxu0 %v1008
      %v2185 = vpop.f32.mrf.mxu0
      %v2186 = vadd.f32 %v2137, %v2185
      %v2187 = vpop.f32.mrf.mxu0
      %v2188 = vadd.f32 %v2139, %v2187
      %2189 = vmatmul.bf16.gmra.mxu0 %v1024
      %v2190 = vpop.f32.mrf.mxu0
      %v2191 = vadd.f32 %v2142, %v2190
      %v2192 = vpop.f32.mrf.mxu0
      %v2193 = vadd.f32 %v2144, %v2192
      %2194 = vmatmul.bf16.gmra.mxu0 %v1040
      %v2195 = vpop.f32.mrf.mxu0
      %v2196 = vadd.f32 %v2147, %v2195
      %v2197 = vpop.f32.mrf.mxu0
      %v2198 = vadd.f32 %v2149, %v2197
      %2199 = vmatmul.bf16.gmra.mxu0 %v1056
      %v2200 = vpop.f32.mrf.mxu0
      %v2201 = vadd.f32 %v2152, %v2200
      %v2202 = vpop.f32.mrf.mxu0
      %v2203 = vadd.f32 %v2154, %v2202
      %2204 = vmatmul.bf16.gmra.mxu0 %v1072
      %v2205 = vpop.f32.mrf.mxu0
      %v2206 = vadd.f32 %v2157, %v2205
      %v2207 = vpop.f32.mrf.mxu0
      %v2208 = vadd.f32 %v2159, %v2207
      %2209 = vmatmul.bf16.gmra.mxu0 %v1088
      %v2210 = vpop.f32.mrf.mxu0
      %v2211 = vadd.f32 %v2162, %v2210
      %v2212 = vpop.f32.mrf.mxu0
      %v2213 = vadd.f32 %v2164, %v2212
      %2214 = vmatmul.bf16.gmra.mxu0 %v1104
      %v2215 = vpop.f32.mrf.mxu0
      %v2216 = vadd.f32 %v2167, %v2215
      %v2217 = vpop.f32.mrf.mxu0
      %v2218 = vadd.f32 %v2169, %v2217
      %2219 = vmatmul.bf16.gmra.mxu0 %v1120
      %v2220 = vpop.f32.mrf.mxu0
      %v2221 = vadd.f32 %v2172, %v2220
      %v2222 = vpop.f32.mrf.mxu0
      %v2223 = vadd.f32 %v2174, %v2222
      %2224 = vdwg.mxu0
      %2225 = vmatpush.bf16.msra.mxu0 %v1812
      %2226 = vmatpush.bf16.msra.mxu0 %v1811
      %2227 = vmatpush.bf16.msra.mxu0 %v1810
      %2228 = vmatpush.bf16.msra.mxu0 %v1809
      %2229 = vmatpush.bf16.msra.mxu0 %v1808
      %2230 = vmatpush.bf16.msra.mxu0 %v1807
      %2231 = vmatpush.bf16.msra.mxu0 %v1806
      %2232 = vmatpush.bf16.msra.mxu0 %v1805
      %2233 = vmatmul.bf16.gmra.mxu0 %v1009
      %v2234 = vpop.f32.mrf.mxu0
      %v2235 = vadd.f32 %v2186, %v2234
      %v2236 = vpop.f32.mrf.mxu0
      %v2237 = vadd.f32 %v2188, %v2236
      %2238 = vmatmul.bf16.gmra.mxu0 %v1025
      %v2239 = vpop.f32.mrf.mxu0
      %v2240 = vadd.f32 %v2191, %v2239
      %v2241 = vpop.f32.mrf.mxu0
      %v2242 = vadd.f32 %v2193, %v2241
      %2243 = vmatmul.bf16.gmra.mxu0 %v1041
      %v2244 = vpop.f32.mrf.mxu0
      %v2245 = vadd.f32 %v2196, %v2244
      %v2246 = vpop.f32.mrf.mxu0
      %v2247 = vadd.f32 %v2198, %v2246
      %2248 = vmatmul.bf16.gmra.mxu0 %v1057
      %v2249 = vpop.f32.mrf.mxu0
      %v2250 = vadd.f32 %v2201, %v2249
      %v2251 = vpop.f32.mrf.mxu0
      %v2252 = vadd.f32 %v2203, %v2251
      %2253 = vmatmul.bf16.gmra.mxu0 %v1073
      %v2254 = vpop.f32.mrf.mxu0
      %v2255 = vadd.f32 %v2206, %v2254
      %v2256 = vpop.f32.mrf.mxu0
      %v2257 = vadd.f32 %v2208, %v2256
      %2258 = vmatmul.bf16.gmra.mxu0 %v1089
      %v2259 = vpop.f32.mrf.mxu0
      %v2260 = vadd.f32 %v2211, %v2259
      %v2261 = vpop.f32.mrf.mxu0
      %v2262 = vadd.f32 %v2213, %v2261
      %2263 = vmatmul.bf16.gmra.mxu0 %v1105
      %v2264 = vpop.f32.mrf.mxu0
      %v2265 = vadd.f32 %v2216, %v2264
      %v2266 = vpop.f32.mrf.mxu0
      %v2267 = vadd.f32 %v2218, %v2266
      %2268 = vmatmul.bf16.gmra.mxu0 %v1121
      %v2269 = vpop.f32.mrf.mxu0
      %v2270 = vadd.f32 %v2221, %v2269
      %v2271 = vpop.f32.mrf.mxu0
      %v2272 = vadd.f32 %v2223, %v2271
      %2273 = vdwg.mxu0
      %2274 = vmatpush.bf16.msra.mxu0 %v1820
      %2275 = vmatpush.bf16.msra.mxu0 %v1819
      %2276 = vmatpush.bf16.msra.mxu0 %v1818
      %2277 = vmatpush.bf16.msra.mxu0 %v1817
      %2278 = vmatpush.bf16.msra.mxu0 %v1816
      %2279 = vmatpush.bf16.msra.mxu0 %v1815
      %2280 = vmatpush.bf16.msra.mxu0 %v1814
      %2281 = vmatpush.bf16.msra.mxu0 %v1813
      %2282 = vmatmul.bf16.gmra.mxu0 %v1010
      %v2283 = vpop.f32.mrf.mxu0
      %v2284 = vadd.f32 %v2235, %v2283
      %v2285 = vpop.f32.mrf.mxu0
      %v2286 = vadd.f32 %v2237, %v2285
      %2287 = vmatmul.bf16.gmra.mxu0 %v1026
      %v2288 = vpop.f32.mrf.mxu0
      %v2289 = vadd.f32 %v2240, %v2288
      %v2290 = vpop.f32.mrf.mxu0
      %v2291 = vadd.f32 %v2242, %v2290
      %2292 = vmatmul.bf16.gmra.mxu0 %v1042
      %v2293 = vpop.f32.mrf.mxu0
      %v2294 = vadd.f32 %v2245, %v2293
      %v2295 = vpop.f32.mrf.mxu0
      %v2296 = vadd.f32 %v2247, %v2295
      %2297 = vmatmul.bf16.gmra.mxu0 %v1058
      %v2298 = vpop.f32.mrf.mxu0
      %v2299 = vadd.f32 %v2250, %v2298
      %v2300 = vpop.f32.mrf.mxu0
      %v2301 = vadd.f32 %v2252, %v2300
      %2302 = vmatmul.bf16.gmra.mxu0 %v1074
      %v2303 = vpop.f32.mrf.mxu0
      %v2304 = vadd.f32 %v2255, %v2303
      %v2305 = vpop.f32.mrf.mxu0
      %v2306 = vadd.f32 %v2257, %v2305
      %2307 = vmatmul.bf16.gmra.mxu0 %v1090
      %v2308 = vpop.f32.mrf.mxu0
      %v2309 = vadd.f32 %v2260, %v2308
      %v2310 = vpop.f32.mrf.mxu0
      %v2311 = vadd.f32 %v2262, %v2310
      %2312 = vmatmul.bf16.gmra.mxu0 %v1106
      %v2313 = vpop.f32.mrf.mxu0
      %v2314 = vadd.f32 %v2265, %v2313
      %v2315 = vpop.f32.mrf.mxu0
      %v2316 = vadd.f32 %v2267, %v2315
      %2317 = vmatmul.bf16.gmra.mxu0 %v1122
      %v2318 = vpop.f32.mrf.mxu0
      %v2319 = vadd.f32 %v2270, %v2318
      %v2320 = vpop.f32.mrf.mxu0
      %v2321 = vadd.f32 %v2272, %v2320
      %2322 = vdwg.mxu0
      %2323 = vmatpush.bf16.msra.mxu0 %v1828
      %2324 = vmatpush.bf16.msra.mxu0 %v1827
      %2325 = vmatpush.bf16.msra.mxu0 %v1826
      %2326 = vmatpush.bf16.msra.mxu0 %v1825
      %2327 = vmatpush.bf16.msra.mxu0 %v1824
      %2328 = vmatpush.bf16.msra.mxu0 %v1823
      %2329 = vmatpush.bf16.msra.mxu0 %v1822
      %2330 = vmatpush.bf16.msra.mxu0 %v1821
      %2331 = vmatmul.bf16.gmra.mxu0 %v1011
      %v2332 = vpop.f32.mrf.mxu0
      %v2333 = vadd.f32 %v2284, %v2332
      %v2334 = vpop.f32.mrf.mxu0
      %v2335 = vadd.f32 %v2286, %v2334
      %2336 = vmatmul.bf16.gmra.mxu0 %v1027
      %v2337 = vpop.f32.mrf.mxu0
      %v2338 = vadd.f32 %v2289, %v2337
      %v2339 = vpop.f32.mrf.mxu0
      %v2340 = vadd.f32 %v2291, %v2339
      %2341 = vmatmul.bf16.gmra.mxu0 %v1043
      %v2342 = vpop.f32.mrf.mxu0
      %v2343 = vadd.f32 %v2294, %v2342
      %v2344 = vpop.f32.mrf.mxu0
      %v2345 = vadd.f32 %v2296, %v2344
      %2346 = vmatmul.bf16.gmra.mxu0 %v1059
      %v2347 = vpop.f32.mrf.mxu0
      %v2348 = vadd.f32 %v2299, %v2347
      %v2349 = vpop.f32.mrf.mxu0
      %v2350 = vadd.f32 %v2301, %v2349
      %2351 = vmatmul.bf16.gmra.mxu0 %v1075
      %v2352 = vpop.f32.mrf.mxu0
      %v2353 = vadd.f32 %v2304, %v2352
      %v2354 = vpop.f32.mrf.mxu0
      %v2355 = vadd.f32 %v2306, %v2354
      %2356 = vmatmul.bf16.gmra.mxu0 %v1091
      %v2357 = vpop.f32.mrf.mxu0
      %v2358 = vadd.f32 %v2309, %v2357
      %v2359 = vpop.f32.mrf.mxu0
      %v2360 = vadd.f32 %v2311, %v2359
      %2361 = vmatmul.bf16.gmra.mxu0 %v1107
      %v2362 = vpop.f32.mrf.mxu0
      %v2363 = vadd.f32 %v2314, %v2362
      %v2364 = vpop.f32.mrf.mxu0
      %v2365 = vadd.f32 %v2316, %v2364
      %2366 = vmatmul.bf16.gmra.mxu0 %v1123
      %v2367 = vpop.f32.mrf.mxu0
      %v2368 = vadd.f32 %v2319, %v2367
      %v2369 = vpop.f32.mrf.mxu0
      %v2370 = vadd.f32 %v2321, %v2369
      %2371 = vdwg.mxu0
      %2372 = vmatpush.bf16.msra.mxu0 %v1836
      %2373 = vmatpush.bf16.msra.mxu0 %v1835
      %2374 = vmatpush.bf16.msra.mxu0 %v1834
      %2375 = vmatpush.bf16.msra.mxu0 %v1833
      %2376 = vmatpush.bf16.msra.mxu0 %v1832
      %2377 = vmatpush.bf16.msra.mxu0 %v1831
      %2378 = vmatpush.bf16.msra.mxu0 %v1830
      %2379 = vmatpush.bf16.msra.mxu0 %v1829
      %2380 = vmatmul.bf16.gmra.mxu0 %v1012
      %v2381 = vpop.f32.mrf.mxu0
      %v2382 = vadd.f32 %v2333, %v2381
      %v2383 = vpop.f32.mrf.mxu0
      %v2384 = vadd.f32 %v2335, %v2383
      %2385 = vmatmul.bf16.gmra.mxu0 %v1028
      %v2386 = vpop.f32.mrf.mxu0
      %v2387 = vadd.f32 %v2338, %v2386
      %v2388 = vpop.f32.mrf.mxu0
      %v2389 = vadd.f32 %v2340, %v2388
      %2390 = vmatmul.bf16.gmra.mxu0 %v1044
      %v2391 = vpop.f32.mrf.mxu0
      %v2392 = vadd.f32 %v2343, %v2391
      %v2393 = vpop.f32.mrf.mxu0
      %v2394 = vadd.f32 %v2345, %v2393
      %2395 = vmatmul.bf16.gmra.mxu0 %v1060
      %v2396 = vpop.f32.mrf.mxu0
      %v2397 = vadd.f32 %v2348, %v2396
      %v2398 = vpop.f32.mrf.mxu0
      %v2399 = vadd.f32 %v2350, %v2398
      %2400 = vmatmul.bf16.gmra.mxu0 %v1076
      %v2401 = vpop.f32.mrf.mxu0
      %v2402 = vadd.f32 %v2353, %v2401
      %v2403 = vpop.f32.mrf.mxu0
      %v2404 = vadd.f32 %v2355, %v2403
      %2405 = vmatmul.bf16.gmra.mxu0 %v1092
      %v2406 = vpop.f32.mrf.mxu0
      %v2407 = vadd.f32 %v2358, %v2406
      %v2408 = vpop.f32.mrf.mxu0
      %v2409 = vadd.f32 %v2360, %v2408
      %2410 = vmatmul.bf16.gmra.mxu0 %v1108
      %v2411 = vpop.f32.mrf.mxu0
      %v2412 = vadd.f32 %v2363, %v2411
      %v2413 = vpop.f32.mrf.mxu0
      %v2414 = vadd.f32 %v2365, %v2413
      %2415 = vmatmul.bf16.gmra.mxu0 %v1124
      %v2416 = vpop.f32.mrf.mxu0
      %v2417 = vadd.f32 %v2368, %v2416
      %v2418 = vpop.f32.mrf.mxu0
      %v2419 = vadd.f32 %v2370, %v2418
      %2420 = vdwg.mxu0
      %2421 = vmatpush.bf16.msra.mxu0 %v1844
      %2422 = vmatpush.bf16.msra.mxu0 %v1843
      %2423 = vmatpush.bf16.msra.mxu0 %v1842
      %2424 = vmatpush.bf16.msra.mxu0 %v1841
      %2425 = vmatpush.bf16.msra.mxu0 %v1840
      %2426 = vmatpush.bf16.msra.mxu0 %v1839
      %2427 = vmatpush.bf16.msra.mxu0 %v1838
      %2428 = vmatpush.bf16.msra.mxu0 %v1837
      %2429 = vmatmul.bf16.gmra.mxu0 %v1013
      %v2430 = vpop.f32.mrf.mxu0
      %v2431 = vadd.f32 %v2382, %v2430
      %v2432 = vpop.f32.mrf.mxu0
      %v2433 = vadd.f32 %v2384, %v2432
      %2434 = vmatmul.bf16.gmra.mxu0 %v1029
      %v2435 = vpop.f32.mrf.mxu0
      %v2436 = vadd.f32 %v2387, %v2435
      %v2437 = vpop.f32.mrf.mxu0
      %v2438 = vadd.f32 %v2389, %v2437
      %2439 = vmatmul.bf16.gmra.mxu0 %v1045
      %v2440 = vpop.f32.mrf.mxu0
      %v2441 = vadd.f32 %v2392, %v2440
      %v2442 = vpop.f32.mrf.mxu0
      %v2443 = vadd.f32 %v2394, %v2442
      %2444 = vmatmul.bf16.gmra.mxu0 %v1061
      %v2445 = vpop.f32.mrf.mxu0
      %v2446 = vadd.f32 %v2397, %v2445
      %v2447 = vpop.f32.mrf.mxu0
      %v2448 = vadd.f32 %v2399, %v2447
      %2449 = vmatmul.bf16.gmra.mxu0 %v1077
      %v2450 = vpop.f32.mrf.mxu0
      %v2451 = vadd.f32 %v2402, %v2450
      %v2452 = vpop.f32.mrf.mxu0
      %v2453 = vadd.f32 %v2404, %v2452
      %2454 = vmatmul.bf16.gmra.mxu0 %v1093
      %v2455 = vpop.f32.mrf.mxu0
      %v2456 = vadd.f32 %v2407, %v2455
      %v2457 = vpop.f32.mrf.mxu0
      %v2458 = vadd.f32 %v2409, %v2457
      %2459 = vmatmul.bf16.gmra.mxu0 %v1109
      %v2460 = vpop.f32.mrf.mxu0
      %v2461 = vadd.f32 %v2412, %v2460
      %v2462 = vpop.f32.mrf.mxu0
      %v2463 = vadd.f32 %v2414, %v2462
      %2464 = vmatmul.bf16.gmra.mxu0 %v1125
      %v2465 = vpop.f32.mrf.mxu0
      %v2466 = vadd.f32 %v2417, %v2465
      %v2467 = vpop.f32.mrf.mxu0
      %v2468 = vadd.f32 %v2419, %v2467
      %2469 = vdwg.mxu0
      %2470 = vmatpush.bf16.msra.mxu0 %v1852
      %2471 = vmatpush.bf16.msra.mxu0 %v1851
      %2472 = vmatpush.bf16.msra.mxu0 %v1850
      %2473 = vmatpush.bf16.msra.mxu0 %v1849
      %2474 = vmatpush.bf16.msra.mxu0 %v1848
      %2475 = vmatpush.bf16.msra.mxu0 %v1847
      %2476 = vmatpush.bf16.msra.mxu0 %v1846
      %2477 = vmatpush.bf16.msra.mxu0 %v1845
      %2478 = vmatmul.bf16.gmra.mxu0 %v1014
      %v2479 = vpop.f32.mrf.mxu0
      %v2480 = vadd.f32 %v2431, %v2479
      %v2481 = vpop.f32.mrf.mxu0
      %v2482 = vadd.f32 %v2433, %v2481
      %2483 = vmatmul.bf16.gmra.mxu0 %v1030
      %v2484 = vpop.f32.mrf.mxu0
      %v2485 = vadd.f32 %v2436, %v2484
      %v2486 = vpop.f32.mrf.mxu0
      %v2487 = vadd.f32 %v2438, %v2486
      %2488 = vmatmul.bf16.gmra.mxu0 %v1046
      %v2489 = vpop.f32.mrf.mxu0
      %v2490 = vadd.f32 %v2441, %v2489
      %v2491 = vpop.f32.mrf.mxu0
      %v2492 = vadd.f32 %v2443, %v2491
      %2493 = vmatmul.bf16.gmra.mxu0 %v1062
      %v2494 = vpop.f32.mrf.mxu0
      %v2495 = vadd.f32 %v2446, %v2494
      %v2496 = vpop.f32.mrf.mxu0
      %v2497 = vadd.f32 %v2448, %v2496
      %2498 = vmatmul.bf16.gmra.mxu0 %v1078
      %v2499 = vpop.f32.mrf.mxu0
      %v2500 = vadd.f32 %v2451, %v2499
      %v2501 = vpop.f32.mrf.mxu0
      %v2502 = vadd.f32 %v2453, %v2501
      %2503 = vmatmul.bf16.gmra.mxu0 %v1094
      %v2504 = vpop.f32.mrf.mxu0
      %v2505 = vadd.f32 %v2456, %v2504
      %v2506 = vpop.f32.mrf.mxu0
      %v2507 = vadd.f32 %v2458, %v2506
      %2508 = vmatmul.bf16.gmra.mxu0 %v1110
      %v2509 = vpop.f32.mrf.mxu0
      %v2510 = vadd.f32 %v2461, %v2509
      %v2511 = vpop.f32.mrf.mxu0
      %v2512 = vadd.f32 %v2463, %v2511
      %2513 = vmatmul.bf16.gmra.mxu0 %v1126
      %v2514 = vpop.f32.mrf.mxu0
      %v2515 = vadd.f32 %v2466, %v2514
      %v2516 = vpop.f32.mrf.mxu0
      %v2517 = vadd.f32 %v2468, %v2516
      %2518 = vdwg.mxu0
      %2519 = vmatpush.bf16.msra.mxu0 %v1860
      %2520 = vmatpush.bf16.msra.mxu0 %v1859
      %2521 = vmatpush.bf16.msra.mxu0 %v1858
      %2522 = vmatpush.bf16.msra.mxu0 %v1857
      %2523 = vmatpush.bf16.msra.mxu0 %v1856
      %2524 = vmatpush.bf16.msra.mxu0 %v1855
      %2525 = vmatpush.bf16.msra.mxu0 %v1854
      %2526 = vmatpush.bf16.msra.mxu0 %v1853
      %2527 = vmatmul.bf16.gmra.mxu0 %v1015
      %v2528 = vpop.f32.mrf.mxu0
      %v2529 = vadd.f32 %v2480, %v2528
      %v2530 = vpop.f32.mrf.mxu0
      %v2531 = vadd.f32 %v2482, %v2530
      %2532 = vmatmul.bf16.gmra.mxu0 %v1031
      %v2533 = vpop.f32.mrf.mxu0
      %v2534 = vadd.f32 %v2485, %v2533
      %v2535 = vpop.f32.mrf.mxu0
      %v2536 = vadd.f32 %v2487, %v2535
      %2537 = vmatmul.bf16.gmra.mxu0 %v1047
      %v2538 = vpop.f32.mrf.mxu0
      %v2539 = vadd.f32 %v2490, %v2538
      %v2540 = vpop.f32.mrf.mxu0
      %v2541 = vadd.f32 %v2492, %v2540
      %2542 = vmatmul.bf16.gmra.mxu0 %v1063
      %v2543 = vpop.f32.mrf.mxu0
      %v2544 = vadd.f32 %v2495, %v2543
      %v2545 = vpop.f32.mrf.mxu0
      %v2546 = vadd.f32 %v2497, %v2545
      %2547 = vmatmul.bf16.gmra.mxu0 %v1079
      %v2548 = vpop.f32.mrf.mxu0
      %v2549 = vadd.f32 %v2500, %v2548
      %v2550 = vpop.f32.mrf.mxu0
      %v2551 = vadd.f32 %v2502, %v2550
      %2552 = vmatmul.bf16.gmra.mxu0 %v1095
      %v2553 = vpop.f32.mrf.mxu0
      %v2554 = vadd.f32 %v2505, %v2553
      %v2555 = vpop.f32.mrf.mxu0
      %v2556 = vadd.f32 %v2507, %v2555
      %2557 = vmatmul.bf16.gmra.mxu0 %v1111
      %v2558 = vpop.f32.mrf.mxu0
      %v2559 = vadd.f32 %v2510, %v2558
      %v2560 = vpop.f32.mrf.mxu0
      %v2561 = vadd.f32 %v2512, %v2560
      %2562 = vmatmul.bf16.gmra.mxu0 %v1127
      %v2563 = vpop.f32.mrf.mxu0
      %v2564 = vadd.f32 %v2515, %v2563
      %v2565 = vpop.f32.mrf.mxu0
      %v2566 = vadd.f32 %v2517, %v2565
      %2567 = vdwg.mxu0
      %2568 = vmatpush.bf16.msra.mxu0 %v1868
      %2569 = vmatpush.bf16.msra.mxu0 %v1867
      %2570 = vmatpush.bf16.msra.mxu0 %v1866
      %2571 = vmatpush.bf16.msra.mxu0 %v1865
      %2572 = vmatpush.bf16.msra.mxu0 %v1864
      %2573 = vmatpush.bf16.msra.mxu0 %v1863
      %2574 = vmatpush.bf16.msra.mxu0 %v1862
      %2575 = vmatpush.bf16.msra.mxu0 %v1861
      %2576 = vmatmul.bf16.gmra.mxu0 %v1016
      %v2577 = vpop.f32.mrf.mxu0
      %v2578 = vadd.f32 %v2529, %v2577
      %v2579 = vpop.f32.mrf.mxu0
      %v2580 = vadd.f32 %v2531, %v2579
      %2581 = vmatmul.bf16.gmra.mxu0 %v1032
      %v2582 = vpop.f32.mrf.mxu0
      %v2583 = vadd.f32 %v2534, %v2582
      %v2584 = vpop.f32.mrf.mxu0
      %v2585 = vadd.f32 %v2536, %v2584
      %2586 = vmatmul.bf16.gmra.mxu0 %v1048
      %v2587 = vpop.f32.mrf.mxu0
      %v2588 = vadd.f32 %v2539, %v2587
      %v2589 = vpop.f32.mrf.mxu0
      %v2590 = vadd.f32 %v2541, %v2589
      %2591 = vmatmul.bf16.gmra.mxu0 %v1064
      %v2592 = vpop.f32.mrf.mxu0
      %v2593 = vadd.f32 %v2544, %v2592
      %v2594 = vpop.f32.mrf.mxu0
      %v2595 = vadd.f32 %v2546, %v2594
      %2596 = vmatmul.bf16.gmra.mxu0 %v1080
      %v2597 = vpop.f32.mrf.mxu0
      %v2598 = vadd.f32 %v2549, %v2597
      %v2599 = vpop.f32.mrf.mxu0
      %v2600 = vadd.f32 %v2551, %v2599
      %2601 = vmatmul.bf16.gmra.mxu0 %v1096
      %v2602 = vpop.f32.mrf.mxu0
      %v2603 = vadd.f32 %v2554, %v2602
      %v2604 = vpop.f32.mrf.mxu0
      %v2605 = vadd.f32 %v2556, %v2604
      %2606 = vmatmul.bf16.gmra.mxu0 %v1112
      %v2607 = vpop.f32.mrf.mxu0
      %v2608 = vadd.f32 %v2559, %v2607
      %v2609 = vpop.f32.mrf.mxu0
      %v2610 = vadd.f32 %v2561, %v2609
      %2611 = vmatmul.bf16.gmra.mxu0 %v1128
      %v2612 = vpop.f32.mrf.mxu0
      %v2613 = vadd.f32 %v2564, %v2612
      %v2614 = vpop.f32.mrf.mxu0
      %v2615 = vadd.f32 %v2566, %v2614
      %2616 = vdwg.mxu0
      %2617 = vmatpush.bf16.msra.mxu0 %v1876
      %2618 = vmatpush.bf16.msra.mxu0 %v1875
      %2619 = vmatpush.bf16.msra.mxu0 %v1874
      %2620 = vmatpush.bf16.msra.mxu0 %v1873
      %2621 = vmatpush.bf16.msra.mxu0 %v1872
      %2622 = vmatpush.bf16.msra.mxu0 %v1871
      %2623 = vmatpush.bf16.msra.mxu0 %v1870
      %2624 = vmatpush.bf16.msra.mxu0 %v1869
      %2625 = vmatmul.bf16.gmra.mxu0 %v1017
      %v2626 = vpop.f32.mrf.mxu0
      %v2627 = vadd.f32 %v2578, %v2626
      %v2628 = vpop.f32.mrf.mxu0
      %v2629 = vadd.f32 %v2580, %v2628
      %2630 = vmatmul.bf16.gmra.mxu0 %v1033
      %v2631 = vpop.f32.mrf.mxu0
      %v2632 = vadd.f32 %v2583, %v2631
      %v2633 = vpop.f32.mrf.mxu0
      %v2634 = vadd.f32 %v2585, %v2633
      %2635 = vmatmul.bf16.gmra.mxu0 %v1049
      %v2636 = vpop.f32.mrf.mxu0
      %v2637 = vadd.f32 %v2588, %v2636
      %v2638 = vpop.f32.mrf.mxu0
      %v2639 = vadd.f32 %v2590, %v2638
      %2640 = vmatmul.bf16.gmra.mxu0 %v1065
      %v2641 = vpop.f32.mrf.mxu0
      %v2642 = vadd.f32 %v2593, %v2641
      %v2643 = vpop.f32.mrf.mxu0
      %v2644 = vadd.f32 %v2595, %v2643
      %2645 = vmatmul.bf16.gmra.mxu0 %v1081
      %v2646 = vpop.f32.mrf.mxu0
      %v2647 = vadd.f32 %v2598, %v2646
      %v2648 = vpop.f32.mrf.mxu0
      %v2649 = vadd.f32 %v2600, %v2648
      %2650 = vmatmul.bf16.gmra.mxu0 %v1097
      %v2651 = vpop.f32.mrf.mxu0
      %v2652 = vadd.f32 %v2603, %v2651
      %v2653 = vpop.f32.mrf.mxu0
      %v2654 = vadd.f32 %v2605, %v2653
      %2655 = vmatmul.bf16.gmra.mxu0 %v1113
      %v2656 = vpop.f32.mrf.mxu0
      %v2657 = vadd.f32 %v2608, %v2656
      %v2658 = vpop.f32.mrf.mxu0
      %v2659 = vadd.f32 %v2610, %v2658
      %2660 = vmatmul.bf16.gmra.mxu0 %v1129
      %v2661 = vpop.f32.mrf.mxu0
      %v2662 = vadd.f32 %v2613, %v2661
      %v2663 = vpop.f32.mrf.mxu0
      %v2664 = vadd.f32 %v2615, %v2663
      %2665 = vdwg.mxu0
      %2666 = vmatpush.bf16.msra.mxu0 %v1884
      %2667 = vmatpush.bf16.msra.mxu0 %v1883
      %2668 = vmatpush.bf16.msra.mxu0 %v1882
      %2669 = vmatpush.bf16.msra.mxu0 %v1881
      %2670 = vmatpush.bf16.msra.mxu0 %v1880
      %2671 = vmatpush.bf16.msra.mxu0 %v1879
      %2672 = vmatpush.bf16.msra.mxu0 %v1878
      %2673 = vmatpush.bf16.msra.mxu0 %v1877
      %2674 = vmatmul.bf16.gmra.mxu0 %v1018
      %v2675 = vpop.f32.mrf.mxu0
      %v2676 = vadd.f32 %v2627, %v2675
      %v2677 = vpop.f32.mrf.mxu0
      %v2678 = vadd.f32 %v2629, %v2677
      %2679 = vmatmul.bf16.gmra.mxu0 %v1034
      %v2680 = vpop.f32.mrf.mxu0
      %v2681 = vadd.f32 %v2632, %v2680
      %v2682 = vpop.f32.mrf.mxu0
      %v2683 = vadd.f32 %v2634, %v2682
      %2684 = vmatmul.bf16.gmra.mxu0 %v1050
      %v2685 = vpop.f32.mrf.mxu0
      %v2686 = vadd.f32 %v2637, %v2685
      %v2687 = vpop.f32.mrf.mxu0
      %v2688 = vadd.f32 %v2639, %v2687
      %2689 = vmatmul.bf16.gmra.mxu0 %v1066
      %v2690 = vpop.f32.mrf.mxu0
      %v2691 = vadd.f32 %v2642, %v2690
      %v2692 = vpop.f32.mrf.mxu0
      %v2693 = vadd.f32 %v2644, %v2692
      %2694 = vmatmul.bf16.gmra.mxu0 %v1082
      %v2695 = vpop.f32.mrf.mxu0
      %v2696 = vadd.f32 %v2647, %v2695
      %v2697 = vpop.f32.mrf.mxu0
      %v2698 = vadd.f32 %v2649, %v2697
      %2699 = vmatmul.bf16.gmra.mxu0 %v1098
      %v2700 = vpop.f32.mrf.mxu0
      %v2701 = vadd.f32 %v2652, %v2700
      %v2702 = vpop.f32.mrf.mxu0
      %v2703 = vadd.f32 %v2654, %v2702
      %2704 = vmatmul.bf16.gmra.mxu0 %v1114
      %v2705 = vpop.f32.mrf.mxu0
      %v2706 = vadd.f32 %v2657, %v2705
      %v2707 = vpop.f32.mrf.mxu0
      %v2708 = vadd.f32 %v2659, %v2707
      %2709 = vmatmul.bf16.gmra.mxu0 %v1130
      %v2710 = vpop.f32.mrf.mxu0
      %v2711 = vadd.f32 %v2662, %v2710
      %v2712 = vpop.f32.mrf.mxu0
      %v2713 = vadd.f32 %v2664, %v2712
      %2714 = vdwg.mxu0
      %2715 = vmatpush.bf16.msra.mxu0 %v1892
      %2716 = vmatpush.bf16.msra.mxu0 %v1891
      %2717 = vmatpush.bf16.msra.mxu0 %v1890
      %2718 = vmatpush.bf16.msra.mxu0 %v1889
      %2719 = vmatpush.bf16.msra.mxu0 %v1888
      %2720 = vmatpush.bf16.msra.mxu0 %v1887
      %2721 = vmatpush.bf16.msra.mxu0 %v1886
      %2722 = vmatpush.bf16.msra.mxu0 %v1885
      %2723 = vmatmul.bf16.gmra.mxu0 %v1019
      %v2724 = vpop.f32.mrf.mxu0
      %v2725 = vadd.f32 %v2676, %v2724
      %v2726 = vpop.f32.mrf.mxu0
      %v2727 = vadd.f32 %v2678, %v2726
      %2728 = vmatmul.bf16.gmra.mxu0 %v1035
      %v2729 = vpop.f32.mrf.mxu0
      %v2730 = vadd.f32 %v2681, %v2729
      %v2731 = vpop.f32.mrf.mxu0
      %v2732 = vadd.f32 %v2683, %v2731
      %2733 = vmatmul.bf16.gmra.mxu0 %v1051
      %v2734 = vpop.f32.mrf.mxu0
      %v2735 = vadd.f32 %v2686, %v2734
      %v2736 = vpop.f32.mrf.mxu0
      %v2737 = vadd.f32 %v2688, %v2736
      %2738 = vmatmul.bf16.gmra.mxu0 %v1067
      %v2739 = vpop.f32.mrf.mxu0
      %v2740 = vadd.f32 %v2691, %v2739
      %v2741 = vpop.f32.mrf.mxu0
      %v2742 = vadd.f32 %v2693, %v2741
      %2743 = vmatmul.bf16.gmra.mxu0 %v1083
      %v2744 = vpop.f32.mrf.mxu0
      %v2745 = vadd.f32 %v2696, %v2744
      %v2746 = vpop.f32.mrf.mxu0
      %v2747 = vadd.f32 %v2698, %v2746
      %2748 = vmatmul.bf16.gmra.mxu0 %v1099
      %v2749 = vpop.f32.mrf.mxu0
      %v2750 = vadd.f32 %v2701, %v2749
      %v2751 = vpop.f32.mrf.mxu0
      %v2752 = vadd.f32 %v2703, %v2751
      %2753 = vmatmul.bf16.gmra.mxu0 %v1115
      %v2754 = vpop.f32.mrf.mxu0
      %v2755 = vadd.f32 %v2706, %v2754
      %v2756 = vpop.f32.mrf.mxu0
      %v2757 = vadd.f32 %v2708, %v2756
      %2758 = vmatmul.bf16.gmra.mxu0 %v1131
      %v2759 = vpop.f32.mrf.mxu0
      %v2760 = vadd.f32 %v2711, %v2759
      %v2761 = vpop.f32.mrf.mxu0
      %v2762 = vadd.f32 %v2713, %v2761
      %2763 = vdwg.mxu0
      %2764 = vmatpush.bf16.msra.mxu0 %v1900
      %2765 = vmatpush.bf16.msra.mxu0 %v1899
      %2766 = vmatpush.bf16.msra.mxu0 %v1898
      %2767 = vmatpush.bf16.msra.mxu0 %v1897
      %2768 = vmatpush.bf16.msra.mxu0 %v1896
      %2769 = vmatpush.bf16.msra.mxu0 %v1895
      %2770 = vmatpush.bf16.msra.mxu0 %v1894
      %2771 = vmatpush.bf16.msra.mxu0 %v1893
      %2772 = vmatmul.bf16.gmra.mxu0 %v1020
      %v2773 = vpop.f32.mrf.mxu0
      %v2774 = vadd.f32 %v2725, %v2773
      %v2775 = vpop.f32.mrf.mxu0
      %v2776 = vadd.f32 %v2727, %v2775
      %2777 = vmatmul.bf16.gmra.mxu0 %v1036
      %v2778 = vpop.f32.mrf.mxu0
      %v2779 = vadd.f32 %v2730, %v2778
      %v2780 = vpop.f32.mrf.mxu0
      %v2781 = vadd.f32 %v2732, %v2780
      %2782 = vmatmul.bf16.gmra.mxu0 %v1052
      %v2783 = vpop.f32.mrf.mxu0
      %v2784 = vadd.f32 %v2735, %v2783
      %v2785 = vpop.f32.mrf.mxu0
      %v2786 = vadd.f32 %v2737, %v2785
      %2787 = vmatmul.bf16.gmra.mxu0 %v1068
      %v2788 = vpop.f32.mrf.mxu0
      %v2789 = vadd.f32 %v2740, %v2788
      %v2790 = vpop.f32.mrf.mxu0
      %v2791 = vadd.f32 %v2742, %v2790
      %2792 = vmatmul.bf16.gmra.mxu0 %v1084
      %v2793 = vpop.f32.mrf.mxu0
      %v2794 = vadd.f32 %v2745, %v2793
      %v2795 = vpop.f32.mrf.mxu0
      %v2796 = vadd.f32 %v2747, %v2795
      %2797 = vmatmul.bf16.gmra.mxu0 %v1100
      %v2798 = vpop.f32.mrf.mxu0
      %v2799 = vadd.f32 %v2750, %v2798
      %v2800 = vpop.f32.mrf.mxu0
      %v2801 = vadd.f32 %v2752, %v2800
      %2802 = vmatmul.bf16.gmra.mxu0 %v1116
      %v2803 = vpop.f32.mrf.mxu0
      %v2804 = vadd.f32 %v2755, %v2803
      %v2805 = vpop.f32.mrf.mxu0
      %v2806 = vadd.f32 %v2757, %v2805
      %2807 = vmatmul.bf16.gmra.mxu0 %v1132
      %v2808 = vpop.f32.mrf.mxu0
      %v2809 = vadd.f32 %v2760, %v2808
      %v2810 = vpop.f32.mrf.mxu0
      %v2811 = vadd.f32 %v2762, %v2810
      %2812 = vdwg.mxu0
      %v2813 = vmax.f32 %v2774, 0.0
      %v2814 = vmax.f32 %v2776, 0.0
      %v2815 = vmax.f32 %v2779, 0.0
      %v2816 = vmax.f32 %v2781, 0.0
      %v2817 = vmax.f32 %v2784, 0.0
      %v2818 = vmax.f32 %v2786, 0.0
      %v2819 = vmax.f32 %v2789, 0.0
      %v2820 = vmax.f32 %v2791, 0.0
      %v2821 = vmax.f32 %v2794, 0.0
      %v2822 = vmax.f32 %v2796, 0.0
      %v2823 = vmax.f32 %v2799, 0.0
      %v2824 = vmax.f32 %v2801, 0.0
      %v2825 = vmax.f32 %v2804, 0.0
      %v2826 = vmax.f32 %v2806, 0.0
      %v2827 = vmax.f32 %v2809, 0.0
      %v2828 = vmax.f32 %v2811, 0.0
      %2829 = vst [vmem:[%s231] sm:$0xff] %v2813
      %2830 = vst [vmem:[%s231 + $0x8] sm:$0xff] %v2814
      %2831 = vst [vmem:[%s231 + $0x10] sm:$0xff] %v2815
      %2832 = vst [vmem:[%s231 + $0x18] sm:$0xff] %v2816
      %2833 = vst [vmem:[%s231 + $0x20] sm:$0xff] %v2817
      %2834 = vst [vmem:[%s231 + $0x28] sm:$0xff] %v2818
      %2835 = vst [vmem:[%s231 + $0x30] sm:$0xff] %v2819
      %2836 = vst [vmem:[%s231 + $0x38] sm:$0xff] %v2820
      %2837 = vst [vmem:[%s231 + $0x40] sm:$0xff] %v2821
      %2838 = vst [vmem:[%s231 + $0x48] sm:$0xff] %v2822
      %2839 = vst [vmem:[%s231 + $0x50] sm:$0xff] %v2823
      %2840 = vst [vmem:[%s231 + $0x58] sm:$0xff] %v2824
      %2841 = vst [vmem:[%s231 + $0x60] sm:$0xff] %v2825
      %2842 = vst [vmem:[%s231 + $0x68] sm:$0xff] %v2826
      %2843 = vst [vmem:[%s231 + $0x70] sm:$0xff] %v2827
      %2844 = vst [vmem:[%s231 + $0x78] sm:$0xff] %v2828
      %s2845 = smul.u32 16, %s19
      %p2846 = scmp.lt.s32.totalorder %s18, 7
      %s2847 = scalar_select %p2846, %s18, 7
      %p2848 = scmp.lt.s32.totalorder %s2845, 15
      %s2849 = scalar_select %p2848, %s2845, 15
      %s2850 = smul.addr %s2847, 16
      %s2851 = sadd.s32 %s2849, %s2850
      %s2852 = smul.addr %s2851, 8
      %s2853 = scalar_lea.vmem %s3, %s2852
      // Predicated region
      $region33: #{_decoder_forward.3} parent=31 // pred_check
        %p2854 = pneg %p121
      $region34: #{_decoder_forward.3} parent=31 // pred_check_branch
        %2856 = sbr.rel (%p2854) target = $region36
      $region35: #{_decoder_forward.3} parent=31 // pred_region
        %s2857 = smul.u32 16, %s19
      $region36: #{_decoder_forward.3} parent=31 // pred_fallthru
        _
    $region32: #{_decoder_forward.3} parent=5 // pred_fallthru
      _
    %p2858 = scmp.le.s32.totalorder 2, %s9
    // Predicated region
    $region37: #{_decoder_forward.3} parent=5 // pred_check
      %p2859 = pneg %p2858
    $region38: #{_decoder_forward.3} parent=5 // pred_check_branch
      %2861 = sbr.rel (%p2859) target = $region40
    $region39: #{_decoder_forward.3} parent=5 // pred_region
      %s2862 = ssub.s32 %s9, 2
      // Predicated region
      $region41: #{_decoder_forward.3} parent=39 // pred_check
        %p2863 = pneg %p127
      $region42: #{_decoder_forward.3} parent=39 // pred_check_branch
        %2865 = sbr.rel (%p2863) target = $region44
      $region43: #{_decoder_forward.3} parent=39 // pred_region
        %s2866 = smul.u32 16, %s21
        %p2867 = scmp.lt.s32.totalorder %s20, 7
        %s2868 = scalar_select %p2867, %s20, 7
        %p2869 = scmp.lt.s32.totalorder %s2866, 15
        %s2870 = scalar_select %p2869, %s2866, 15
        %s2871 = smul.addr %s2868, 16
        %s2872 = sadd.s32 %s2870, %s2871
        %s2873 = smul.addr %s2872, 8
        %s2874 = scalar_lea.vmem %s3, %s2873
      $region44: #{_decoder_forward.3} parent=39 // pred_fallthru
        _
    $region40: #{_decoder_forward.3} parent=5 // pred_fallthru
      _
  $region6: #{_decoder_forward.3} parent=0 // loop_footer
    %s13 = sadd.s32 1, %s9
  $region7: #{_decoder_forward.3} parent=0 // loop_footer_branch
    %8 = sbr.rel target = $region3
  $region8: #{_decoder_forward.3} parent=0 // loop_exit
    _

</llo_original>
